<compile_context>
chip_gen: v7x
topology: tpu7x:2x2x1
jax: 0.10.0
libtpu: 0.0.40
codegen_flags: <defaults>
</compile_context>

<pallas_src>
import numpy as np
import jax
import jax.numpy as jnp
from jax.experimental import pallas as pl
from jax.experimental.pallas import tpu as pltpu

EPS = 1e-5
LANE = 128
VMEM_LIMIT = 48 * 1024 * 1024          # comfortably under v7x's 64 MiB / core


# ------------------------------ helpers ------------------------------------ #

def _round_up(x, m):
    return (x + m - 1) // m * m


def _pick_tile_m(m, max_tile):
    """Largest multiple-of-8 divisor of m that is <= max_tile (else m)."""
    for t in range(min(max_tile, m), 7, -1):
        if m % t == 0 and t % 8 == 0:
            return t
    return m


def _cparams():
    return pltpu.CompilerParams(
        dimension_semantics=("parallel",),
        vmem_limit_bytes=VMEM_LIMIT,
    )


def _bn_scale_shift(partial_stats, m, gamma, beta, c_pad):
    """Fold batch stats + affine params into per-channel scale/shift (f32)."""
    s = jnp.sum(partial_stats, axis=0)                 # (2, Cp)
    mean = s[0] / m
    var = s[1] / m - mean * mean                       # biased variance
    g = jnp.pad(gamma.astype(jnp.float32), (0, c_pad - gamma.shape[0]))
    b = jnp.pad(beta.astype(jnp.float32), (0, c_pad - beta.shape[0]))
    scale = g * jax.lax.rsqrt(var + EPS)
    shift = b - mean * scale
    return scale.reshape(1, c_pad), shift.reshape(1, c_pad)


# ------------------------------ kernels ------------------------------------ #

def _matmul_stats_kernel(x_ref, w_ref, y_ref, stats_ref):
    """y = x @ w (bf16 MXU, f32 acc); per-tile partial sum / sum_sq of y."""
    y = jnp.dot(x_ref[...].astype(jnp.bfloat16), w_ref[...],
                preferred_element_type=jnp.float32)
    y_ref[...] = y
    stats_ref[:, 0:1, :] = jnp.sum(y, axis=0, keepdims=True)[None]
    stats_ref[:, 1:2, :] = jnp.sum(y * y, axis=0, keepdims=True)[None]


def _make_bn_relu_conv3x3_stats_kernel(H, W, C):
    """BN+ReLU of a haloed per-image block, then 3x3 conv as 9 matmuls."""
    def kernel(y1p_ref, scale_ref, shift_ref, w2_ref, y2_ref, stats_ref):
        y1p = y1p_ref[0]                                  # (H+2, W+2, C) f32
        a = jnp.maximum(y1p * scale_ref[...] + shift_ref[...], 0.0)
        # Zero the spatial padding ring: conv2 pads the *post*-BN activation
        # with zeros, but the BN shift would make padded positions nonzero.
        hi = jax.lax.broadcasted_iota(jnp.int32, (H + 2, W + 2, 1), 0)
        wi = jax.lax.broadcasted_iota(jnp.int32, (H + 2, W + 2, 1), 1)
        interior = (hi >= 1) & (hi <= H) & (wi >= 1) & (wi <= W)
        a = jnp.where(interior, a, 0.0)

        acc = jnp.zeros((H * W, C), jnp.float32)
        for kh in range(3):                               # unrolled 9 matmuls
            for kw in range(3):
                patch = a[kh:kh + H, kw:kw + W, :].reshape(H * W, C)
                acc = acc + jnp.dot(patch.astype(jnp.bfloat16),
                                    w2_ref[kh * 3 + kw],
                                    preferred_element_type=jnp.float32)
        y2_ref[0] = acc.reshape(H, W, C)
        stats_ref[:, 0:1, :] = jnp.sum(acc, axis=0, keepdims=True)[None]
        stats_ref[:, 1:2, :] = jnp.sum(acc * acc, axis=0, keepdims=True)[None]
    return kernel


def _bn_relu_matmul_stats_kernel(y_in_ref, scale_ref, shift_ref, w_ref,
                                 y_ref, stats_ref):
    """a = relu(bn(y_in)); y = a @ w; per-tile partial stats of y."""
    a = jnp.maximum(y_in_ref[...] * scale_ref[...] + shift_ref[...], 0.0)
    y = jnp.dot(a.astype(jnp.bfloat16), w_ref[...],
                preferred_element_type=jnp.float32)
    y_ref[...] = y
    stats_ref[:, 0:1, :] = jnp.sum(y, axis=0, keepdims=True)[None]
    stats_ref[:, 1:2, :] = jnp.sum(y * y, axis=0, keepdims=True)[None]


def _bn_add_relu_kernel(y_ref, scale_ref, shift_ref, res_ref, o_ref):
    """out = relu(bn(y) + residual), residual streamed tile-by-tile."""
    o_ref[...] = jnp.maximum(
        y_ref[...] * scale_ref[...] + shift_ref[...] + res_ref[...], 0.0)


# ------------------------------ wrapper ------------------------------------ #

def bottleneck_forward(x_nchw, params, *, max_tile_m=512):
    """Bottleneck forward (stride=1, downsample=None).  x_nchw: (N,Cin,H,W)."""
    w1, w2, w3 = params["w1"], params["w2"], params["w3"]     # OIHW, f32
    g1, b1 = params["g1"], params["b1"]
    g2, b2 = params["g2"], params["b2"]
    g3, b3 = params["g3"], params["b3"]

    N, Cin, H, W = x_nchw.shape
    P = w1.shape[0]                       # planes
    Cout = w3.shape[0]                    # planes * 4
    assert Cin == Cout, "stride=1 / downsample=None needs inplanes == planes*4"

    M = N * H * W
    Cin_p = _round_up(Cin, LANE)
    P_p = _round_up(P, LANE)
    Cout_p = _round_up(Cout, LANE)
    TM = _pick_tile_m(M, max_tile_m)      # rows per grid step (sweepable)
    nt = M // TM

    # Boundary layout work: NCHW -> NHWC, lane-pad channels.
    x_nhwc = jnp.transpose(x_nchw, (0, 2, 3, 1)).astype(jnp.float32)
    x2d = jnp.pad(x_nhwc.reshape(M, Cin), ((0, 0), (0, Cin_p - Cin)))

    # Weights as lane-dense bf16 matmul operands (zero-padded -> exact).
    w1_mat = jnp.pad(w1[:, :, 0, 0].T,
                     ((0, Cin_p - Cin), (0, P_p - P))).astype(jnp.bfloat16)
    w2_mat = jnp.pad(jnp.transpose(w2, (2, 3, 1, 0)).reshape(9, P, P),
                     ((0, 0), (0, P_p - P), (0, P_p - P))).astype(jnp.bfloat16)
    w3_mat = jnp.pad(w3[:, :, 0, 0].T,
                     ((0, P_p - P), (0, Cout_p - Cout))).astype(jnp.bfloat16)

    # ---- stage 1: conv1 (1x1) + partial BN1 stats ------------------------ #
    y1, s1 = pl.pallas_call(
        _matmul_stats_kernel,
        out_shape=(jax.ShapeDtypeStruct((M, P_p), jnp.float32),
                   jax.ShapeDtypeStruct((nt, 2, P_p), jnp.float32)),
        grid=(nt,),
        in_specs=[pl.BlockSpec((TM, Cin_p), lambda i: (i, 0)),
                  pl.BlockSpec((Cin_p, P_p), lambda i: (0, 0))],
        out_specs=(pl.BlockSpec((TM, P_p), lambda i: (i, 0)),
                   pl.BlockSpec((1, 2, P_p), lambda i: (i, 0, 0))),
        compiler_params=_cparams(),
    )(x2d, w1_mat)
    scale1, shift1 = _bn_scale_shift(s1, M, g1, b1, P_p)

    # ---- stage 2: BN1+ReLU fused with conv2 (3x3) + partial BN2 stats ---- #
    y1_pad = jnp.pad(y1.reshape(N, H, W, P_p), ((0, 0), (1, 1), (1, 1), (0, 0)))
    y2, s2 = pl.pallas_call(
        _make_bn_relu_conv3x3_stats_kernel(H, W, P_p),
        out_shape=(jax.ShapeDtypeStruct((N, H, W, P_p), jnp.float32),
                   jax.ShapeDtypeStruct((N, 2, P_p), jnp.float32)),
        grid=(N,),
        in_specs=[pl.BlockSpec((1, H + 2, W + 2, P_p), lambda n: (n, 0, 0, 0)),
                  pl.BlockSpec((1, P_p), lambda n: (0, 0)),
                  pl.BlockSpec((1, P_p), lambda n: (0, 0)),
                  pl.BlockSpec((9, P_p, P_p), lambda n: (0, 0, 0))],
        out_specs=(pl.BlockSpec((1, H, W, P_p), lambda n: (n, 0, 0, 0)),
                   pl.BlockSpec((1, 2, P_p), lambda n: (n, 0, 0))),
        compiler_params=_cparams(),
    )(y1_pad, scale1, shift1, w2_mat)
    scale2, shift2 = _bn_scale_shift(s2, M, g2, b2, P_p)

    # ---- stage 3: BN2+ReLU fused with conv3 (1x1) + partial BN3 stats ---- #
    y3, s3 = pl.pallas_call(
        _bn_relu_matmul_stats_kernel,
        out_shape=(jax.ShapeDtypeStruct((M, Cout_p), jnp.float32),
                   jax.ShapeDtypeStruct((nt, 2, Cout_p), jnp.float32)),
        grid=(nt,),
        in_specs=[pl.BlockSpec((TM, P_p), lambda i: (i, 0)),
                  pl.BlockSpec((1, P_p), lambda i: (0, 0)),
                  pl.BlockSpec((1, P_p), lambda i: (0, 0)),
                  pl.BlockSpec((P_p, Cout_p), lambda i: (0, 0))],
        out_specs=(pl.BlockSpec((TM, Cout_p), lambda i: (i, 0)),
                   pl.BlockSpec((1, 2, Cout_p), lambda i: (i, 0, 0))),
        compiler_params=_cparams(),
    )(y2.reshape(M, P_p), scale2, shift2, w3_mat)
    scale3, shift3 = _bn_scale_shift(s3, M, g3, b3, Cout_p)

    # ---- stage 4: BN3 + residual add + ReLU (residual streamed) ---------- #
    out2d = pl.pallas_call(
        _bn_add_relu_kernel,
        out_shape=jax.ShapeDtypeStruct((M, Cout_p), jnp.float32),
        grid=(nt,),
        in_specs=[pl.BlockSpec((TM, Cout_p), lambda i: (i, 0)),
                  pl.BlockSpec((1, Cout_p), lambda i: (0, 0)),
                  pl.BlockSpec((1, Cout_p), lambda i: (0, 0)),
                  pl.BlockSpec((TM, Cout_p), lambda i: (i, 0))],
        out_specs=pl.BlockSpec((TM, Cout_p), lambda i: (i, 0)),
        compiler_params=_cparams(),
    )(y3, scale3, shift3, x2d)

    out_nhwc = out2d[:, :Cout].reshape(N, H, W, Cout)
    return jnp.transpose(out_nhwc, (0, 3, 1, 2))               # back to NCHW


# --------------------------- pure-JAX reference ----------------------------- #

def bottleneck_reference(x_nchw, params):
    x = jnp.transpose(x_nchw, (0, 2, 3, 1)).astype(jnp.float32)   # NHWC
    dn = ("NHWC", "HWIO", "NHWC")

    def conv(inp, w_oihw):
        w = jnp.transpose(w_oihw, (2, 3, 1, 0))                   # HWIO
        return jax.lax.conv_general_dilated(
            inp, w, window_strides=(1, 1), padding="SAME",
            dimension_numbers=dn)

    def bn(y, g, b):
        mean = jnp.mean(y, axis=(0, 1, 2), keepdims=True)
        var = jnp.mean((y - mean) ** 2, axis=(0, 1, 2), keepdims=True)
        return (y - mean) * jax.lax.rsqrt(var + EPS) * g + b

    out = jnp.maximum(bn(conv(x, params["w1"]), params["g1"], params["b1"]), 0.)
    out = jnp.maximum(bn(conv(out, params["w2"]), params["g2"], params["b2"]), 0.)
    out = bn(conv(out, params["w3"]), params["g3"], params["b3"])
    out = jnp.maximum(out + x, 0.)
    return jnp.transpose(out, (0, 3, 1, 2))


# ---------------------------------- main ------------------------------------ #

if __name__ == "__main__":
    # Bottleneck(inplanes=16, planes=4): stride=1 & downsample=None require
    # inplanes == planes * expansion.
    N, inplanes, planes, Hs, Ws = 2, 16, 4, 16, 16
    expansion = 4

    key = jax.random.PRNGKey(0)
    k1, k2, k3, kx = jax.random.split(key, 4)

    def kaiming(k, shape):                 # kaiming_normal_(fan_in, relu)
        fan_in = shape[1] * shape[2] * shape[3]
        return jax.random.normal(k, shape, jnp.float32) * jnp.sqrt(2.0 / fan_in)

    params = {
        "w1": kaiming(k1, (planes, inplanes, 1, 1)),
        "w2": kaiming(k2, (planes, planes, 3, 3)),
        "w3": kaiming(k3, (planes * expansion, planes, 1, 1)),
        "g1": jnp.ones((planes,), jnp.float32),
        "b1": jnp.zeros((planes,), jnp.float32),
        "g2": jnp.ones((planes,), jnp.float32),
        "b2": jnp.zeros((planes,), jnp.float32),
        "g3": jnp.ones((planes * expansion,), jnp.float32),
        "b3": jnp.zeros((planes * expansion,), jnp.float32),
    }

    x = jax.random.normal(kx, (N, inplanes, Hs, Ws), jnp.float32)  # NCHW

    # max_tile_m=256 so the toy M=512 exercises the multi-tile grid path.
    fwd = jax.jit(lambda xx, pp: bottleneck_forward(xx, pp, max_tile_m=256))
    out = jax.block_until_ready(fwd(x, params))

    ref = jax.block_until_ready(bottleneck_reference(x, params))
    # bf16 MXU inputs (f32 accumulation / f32 BN stats) vs an f32 reference
    # -> tolerance sized for bf16 mantissa error through three conv layers.
    np.testing.assert_allclose(np.asarray(out), np.asarray(ref),
                               rtol=5e-2, atol=5e-2)
    print("KERNEL_OK")
</pallas_src>

<mosaic_0001>
module attributes {stable_mosaic.version = 11 : i64} {
  func.func @_matmul_stats_kernel(%arg0: i32, %arg1: memref<256x128xf32, #tpu.memory_space<vmem>>, %arg2: memref<128x128xbf16, #tpu.memory_space<vmem>>, %arg3: memref<256x128xf32, #tpu.memory_space<vmem>>, %arg4: memref<1x2x128xf32, #tpu.memory_space<vmem>>) attributes {dimension_semantics = [#tpu.dimension_semantics<parallel>], iteration_bounds = array<i64: 2>, scalar_prefetch = 0 : i64, scratch_operands = 0 : i64, tpu.core_type = #tpu.core_type<tc>, window_params = [{transform_indices = @transform_0, window_bounds = array<i64: 256, 128>}, {pipeline_mode = #tpu.pipeline_mode<synchronous>, transform_indices = @transform_1, window_bounds = array<i64: 128, 128>}, {transform_indices = @transform_2, window_bounds = array<i64: 256, 128>}, {transform_indices = @transform_3, window_bounds = array<i64: 1, 2, 128>}]} {
    %c0 = arith.constant 0 : index
    %c0_0 = arith.constant 0 : index
    %0 = vector.load %arg1[%c0, %c0_0] : memref<256x128xf32, #tpu.memory_space<vmem>>, vector<256x128xf32>
    %1 = arith.truncf %0 : vector<256x128xf32> to vector<256x128xbf16>
    %c0_1 = arith.constant 0 : index
    %c0_2 = arith.constant 0 : index
    %2 = vector.load %arg2[%c0_1, %c0_2] : memref<128x128xbf16, #tpu.memory_space<vmem>>, vector<128x128xbf16>
    %cst = arith.constant dense<0.000000e+00> : vector<256x128xf32>
    %3 = tpu.matmul %1, %2, %cst {dimension_numbers = #tpu.dot_dimension_numbers<[1], [0], [0], [1], [0, 0, 1, 1], [], []>} : vector<256x128xbf16>, vector<128x128xbf16>, vector<256x128xf32> -> vector<256x128xf32>
    %c0_3 = arith.constant 0 : index
    %c0_4 = arith.constant 0 : index
    %4 = vector.load %arg3[%c0_3, %c0_4] : memref<256x128xf32, #tpu.memory_space<vmem>>, vector<256x128xf32>
    tpu.vector_store %arg3[%c0_3, %c0_4], %3 {strides = array<i32>} : memref<256x128xf32, #tpu.memory_space<vmem>>, vector<256x128xf32>,
    %cst_5 = arith.constant dense<0.000000e+00> : vector<128xf32>
    %5 = vector.multi_reduction <add>, %3, %cst_5 [0] : vector<256x128xf32> to vector<128xf32>
    %6 = vector.shape_cast %5 : vector<128xf32> to vector<1x128xf32>
    %7 = vector.shape_cast %6 : vector<1x128xf32> to vector<1x1x128xf32>
    %c0_6 = arith.constant 0 : index
    %c0_7 = arith.constant 0 : index
    %c0_8 = arith.constant 0 : index
    %8 = vector.load %arg4[%c0_6, %c0_7, %c0_8] : memref<1x2x128xf32, #tpu.memory_space<vmem>>, vector<1x1x128xf32>
    tpu.vector_store %arg4[%c0_6, %c0_7, %c0_8], %7 {strides = array<i32>} : memref<1x2x128xf32, #tpu.memory_space<vmem>>, vector<1x1x128xf32>,
    %9 = arith.mulf %3, %3 : vector<256x128xf32>
    %cst_9 = arith.constant dense<0.000000e+00> : vector<128xf32>
    %10 = vector.multi_reduction <add>, %9, %cst_9 [0] : vector<256x128xf32> to vector<128xf32>
    %11 = vector.shape_cast %10 : vector<128xf32> to vector<1x128xf32>
    %12 = vector.shape_cast %11 : vector<1x128xf32> to vector<1x1x128xf32>
    %c0_10 = arith.constant 0 : index
    %c1 = arith.constant 1 : index
    %c0_11 = arith.constant 0 : index
    %13 = vector.load %arg4[%c0_10, %c1, %c0_11] : memref<1x2x128xf32, #tpu.memory_space<vmem>>, vector<1x1x128xf32>
    tpu.vector_store %arg4[%c0_10, %c1, %c0_11], %12 {strides = array<i32>} : memref<1x2x128xf32, #tpu.memory_space<vmem>>, vector<1x1x128xf32>,
    return
  }
  func.func @transform_0(%arg0: i32) -> (i32, i32) {
    %c0_i32 = arith.constant 0 : i32
    %c0_i32_0 = arith.constant 0 : i32
    return %arg0, %c0_i32 : i32, i32
  }
  func.func @transform_1(%arg0: i32) -> (i32, i32) {
    %c0_i32 = arith.constant 0 : i32
    %c0_i32_0 = arith.constant 0 : i32
    %c0_i32_1 = arith.constant 0 : i32
    return %c0_i32, %c0_i32_0 : i32, i32
  }
  func.func @transform_2(%arg0: i32) -> (i32, i32) {
    %c0_i32 = arith.constant 0 : i32
    %c0_i32_0 = arith.constant 0 : i32
    return %arg0, %c0_i32 : i32, i32
  }
  func.func @transform_3(%arg0: i32) -> (i32, i32, i32) {
    %c0_i32 = arith.constant 0 : i32
    %c0_i32_0 = arith.constant 0 : i32
    %c0_i32_1 = arith.constant 0 : i32
    return %arg0, %c0_i32, %c0_i32_0 : i32, i32, i32
  }
}

module attributes {stable_mosaic.version = 11 : i64} {
  func.func @kernel(%arg0: i32, %arg1: memref<1x18x18x128xf32, #tpu.memory_space<vmem>>, %arg2: memref<1x128xf32, #tpu.memory_space<vmem>>, %arg3: memref<1x128xf32, #tpu.memory_space<vmem>>, %arg4: memref<9x128x128xbf16, #tpu.memory_space<vmem>>, %arg5: memref<1x16x16x128xf32, #tpu.memory_space<vmem>>, %arg6: memref<1x2x128xf32, #tpu.memory_space<vmem>>) attributes {dimension_semantics = [#tpu.dimension_semantics<parallel>], iteration_bounds = array<i64: 2>, scalar_prefetch = 0 : i64, scratch_operands = 0 : i64, tpu.core_type = #tpu.core_type<tc>, window_params = [{transform_indices = @transform_0, window_bounds = array<i64: 1, 18, 18, 128>}, {pipeline_mode = #tpu.pipeline_mode<synchronous>, transform_indices = @transform_1, window_bounds = array<i64: 1, 128>}, {pipeline_mode = #tpu.pipeline_mode<synchronous>, transform_indices = @transform_2, window_bounds = array<i64: 1, 128>}, {pipeline_mode = #tpu.pipeline_mode<synchronous>, transform_indices = @transform_3, window_bounds = array<i64: 9, 128, 128>}, {transform_indices = @transform_4, window_bounds = array<i64: 1, 16, 16, 128>}, {transform_indices = @transform_5, window_bounds = array<i64: 1, 2, 128>}]} {
    %c0 = arith.constant 0 : index
    %c0_0 = arith.constant 0 : index
    %c0_1 = arith.constant 0 : index
    %c0_2 = arith.constant 0 : index
    %0 = vector.load %arg1[%c0, %c0_0, %c0_1, %c0_2] : memref<1x18x18x128xf32, #tpu.memory_space<vmem>>, vector<1x18x18x128xf32>
    %1 = vector.shape_cast %0 : vector<1x18x18x128xf32> to vector<18x18x128xf32>
    %c0_3 = arith.constant 0 : index
    %c0_4 = arith.constant 0 : index
    %2 = vector.load %arg2[%c0_3, %c0_4] : memref<1x128xf32, #tpu.memory_space<vmem>>, vector<1x128xf32>
    %3 = vector.shape_cast %2 : vector<1x128xf32> to vector<1x1x128xf32>
    %4 = vector.broadcast %3 : vector<1x1x128xf32> to vector<18x18x128xf32>
    %5 = arith.mulf %1, %4 : vector<18x18x128xf32>
    %c0_5 = arith.constant 0 : index
    %c0_6 = arith.constant 0 : index
    %6 = vector.load %arg3[%c0_5, %c0_6] : memref<1x128xf32, #tpu.memory_space<vmem>>, vector<1x128xf32>
    %7 = vector.shape_cast %6 : vector<1x128xf32> to vector<1x1x128xf32>
    %8 = vector.broadcast %7 : vector<1x1x128xf32> to vector<18x18x128xf32>
    %9 = arith.addf %5, %8 : vector<18x18x128xf32>
    %cst = arith.constant 0.000000e+00 : f32
    %10 = vector.broadcast %cst : f32 to vector<18x18x128xf32>
    %11 = arith.maximumf %9, %10 : vector<18x18x128xf32>
    %12 = tpu.iota {dimensions = array<i32: 0>} : vector<18x18x1xi32>
    %13 = tpu.iota {dimensions = array<i32: 1>} : vector<18x18x1xi32>
    %c1_i32 = arith.constant 1 : i32
    %14 = vector.broadcast %c1_i32 : i32 to vector<18x18x1xi32>
    %15 = arith.cmpi sge, %12, %14 : vector<18x18x1xi32>
    %c16_i32 = arith.constant 16 : i32
    %16 = vector.broadcast %c16_i32 : i32 to vector<18x18x1xi32>
    %17 = arith.cmpi sle, %12, %16 : vector<18x18x1xi32>
    %18 = arith.andi %15, %17 : vector<18x18x1xi1>
    %c1_i32_7 = arith.constant 1 : i32
    %19 = vector.broadcast %c1_i32_7 : i32 to vector<18x18x1xi32>
    %20 = arith.cmpi sge, %13, %19 : vector<18x18x1xi32>
    %21 = arith.andi %18, %20 : vector<18x18x1xi1>
    %c16_i32_8 = arith.constant 16 : i32
    %22 = vector.broadcast %c16_i32_8 : i32 to vector<18x18x1xi32>
    %23 = arith.cmpi sle, %13, %22 : vector<18x18x1xi32>
    %24 = arith.andi %21, %23 : vector<18x18x1xi1>
    %cst_9 = arith.constant 0.000000e+00 : f32
    %25 = vector.shape_cast %24 : vector<18x18x1xi1> to vector<18x18x1xi1>
    %26 = vector.broadcast %25 : vector<18x18x1xi1> to vector<18x18x128xi1>
    %27 = vector.broadcast %cst_9 : f32 to vector<18x18x128xf32>
    %28 = arith.select %26, %11, %27 : vector<18x18x128xi1>, vector<18x18x128xf32>
    %cst_10 = arith.constant 0.000000e+00 : f32
    %29 = vector.broadcast %cst_10 : f32 to vector<256x128xf32>
    %30 = vector.extract_strided_slice %28 {offsets = [0, 0, 0], sizes = [16, 16, 128], strides = [1, 1, 1]} : vector<18x18x128xf32> to vector<16x16x128xf32>
    %31 = vector.shape_cast %30 : vector<16x16x128xf32> to vector<256x128xf32>
    %32 = arith.truncf %31 : vector<256x128xf32> to vector<256x128xbf16>
    %c0_11 = arith.constant 0 : index
    %c0_12 = arith.constant 0 : index
    %c0_13 = arith.constant 0 : index
    %33 = vector.load %arg4[%c0_11, %c0_12, %c0_13] : memref<9x128x128xbf16, #tpu.memory_space<vmem>>, vector<1x128x128xbf16>
    %34 = vector.shape_cast %33 : vector<1x128x128xbf16> to vector<128x128xbf16>
    %cst_14 = arith.constant dense<0.000000e+00> : vector<256x128xf32>
    %35 = tpu.matmul %32, %34, %cst_14 {dimension_numbers = #tpu.dot_dimension_numbers<[1], [0], [0], [1], [0, 0, 1, 1], [], []>} : vector<256x128xbf16>, vector<128x128xbf16>, vector<256x128xf32> -> vector<256x128xf32>
    %36 = arith.addf %29, %35 : vector<256x128xf32>
    %37 = vector.extract_strided_slice %28 {offsets = [0, 1, 0], sizes = [16, 16, 128], strides = [1, 1, 1]} : vector<18x18x128xf32> to vector<16x16x128xf32>
    %38 = vector.shape_cast %37 : vector<16x16x128xf32> to vector<256x128xf32>
    %39 = arith.truncf %38 : vector<256x128xf32> to vector<256x128xbf16>
    %c1 = arith.constant 1 : index
    %c0_15 = arith.constant 0 : index
    %c0_16 = arith.constant 0 : index
    %40 = vector.load %arg4[%c1, %c0_15, %c0_16] : memref<9x128x128xbf16, #tpu.memory_space<vmem>>, vector<1x128x128xbf16>
    %41 = vector.shape_cast %40 : vector<1x128x128xbf16> to vector<128x128xbf16>
    %cst_17 = arith.constant dense<0.000000e+00> : vector<256x128xf32>
    %42 = tpu.matmul %39, %41, %cst_17 {dimension_numbers = #tpu.dot_dimension_numbers<[1], [0], [0], [1], [0, 0, 1, 1], [], []>} : vector<256x128xbf16>, vector<128x128xbf16>, vector<256x128xf32> -> vector<256x128xf32>
    %43 = arith.addf %36, %42 : vector<256x128xf32>
    %44 = vector.extract_strided_slice %28 {offsets = [0, 2, 0], sizes = [16, 16, 128], strides = [1, 1, 1]} : vector<18x18x128xf32> to vector<16x16x128xf32>
    %45 = vector.shape_cast %44 : vector<16x16x128xf32> to vector<256x128xf32>
    %46 = arith.truncf %45 : vector<256x128xf32> to vector<256x128xbf16>
    %c2 = arith.constant 2 : index
    %c0_18 = arith.constant 0 : index
    %c0_19 = arith.constant 0 : index
    %47 = vector.load %arg4[%c2, %c0_18, %c0_19] : memref<9x128x128xbf16, #tpu.memory_space<vmem>>, vector<1x128x128xbf16>
    %48 = vector.shape_cast %47 : vector<1x128x128xbf16> to vector<128x128xbf16>
    %cst_20 = arith.constant dense<0.000000e+00> : vector<256x128xf32>
    %49 = tpu.matmul %46, %48, %cst_20 {dimension_numbers = #tpu.dot_dimension_numbers<[1], [0], [0], [1], [0, 0, 1, 1], [], []>} : vector<256x128xbf16>, vector<128x128xbf16>, vector<256x128xf32> -> vector<256x128xf32>
    %50 = arith.addf %43, %49 : vector<256x128xf32>
    %51 = vector.extract_strided_slice %28 {offsets = [1, 0, 0], sizes = [16, 16, 128], strides = [1, 1, 1]} : vector<18x18x128xf32> to vector<16x16x128xf32>
    %52 = vector.shape_cast %51 : vector<16x16x128xf32> to vector<256x128xf32>
    %53 = arith.truncf %52 : vector<256x128xf32> to vector<256x128xbf16>
    %c3 = arith.constant 3 : index
    %c0_21 = arith.constant 0 : index
    %c0_22 = arith.constant 0 : index
    %54 = vector.load %arg4[%c3, %c0_21, %c0_22] : memref<9x128x128xbf16, #tpu.memory_space<vmem>>, vector<1x128x128xbf16>
    %55 = vector.shape_cast %54 : vector<1x128x128xbf16> to vector<128x128xbf16>
    %cst_23 = arith.constant dense<0.000000e+00> : vector<256x128xf32>
    %56 = tpu.matmul %53, %55, %cst_23 {dimension_numbers = #tpu.dot_dimension_numbers<[1], [0], [0], [1], [0, 0, 1, 1], [], []>} : vector<256x128xbf16>, vector<128x128xbf16>, vector<256x128xf32> -> vector<256x128xf32>
    %57 = arith.addf %50, %56 : vector<256x128xf32>
    %58 = vector.extract_strided_slice %28 {offsets = [1, 1, 0], sizes = [16, 16, 128], strides = [1, 1, 1]} : vector<18x18x128xf32> to vector<16x16x128xf32>
    %59 = vector.shape_cast %58 : vector<16x16x128xf32> to vector<256x128xf32>
    %60 = arith.truncf %59 : vector<256x128xf32> to vector<256x128xbf16>
    %c4 = arith.constant 4 : index
    %c0_24 = arith.constant 0 : index
    %c0_25 = arith.constant 0 : index
    %61 = vector.load %arg4[%c4, %c0_24, %c0_25] : memref<9x128x128xbf16, #tpu.memory_space<vmem>>, vector<1x128x128xbf16>
    %62 = vector.shape_cast %61 : vector<1x128x128xbf16> to vector<128x128xbf16>
    %cst_26 = arith.constant dense<0.000000e+00> : vector<256x128xf32>
    %63 = tpu.matmul %60, %62, %cst_26 {dimension_numbers = #tpu.dot_dimension_numbers<[1], [0], [0], [1], [0, 0, 1, 1], [], []>} : vector<256x128xbf16>, vector<128x128xbf16>, vector<256x128xf32> -> vector<256x128xf32>
    %64 = arith.addf %57, %63 : vector<256x128xf32>
    %65 = vector.extract_strided_slice %28 {offsets = [1, 2, 0], sizes = [16, 16, 128], strides = [1, 1, 1]} : vector<18x18x128xf32> to vector<16x16x128xf32>
    %66 = vector.shape_cast %65 : vector<16x16x128xf32> to vector<256x128xf32>
    %67 = arith.truncf %66 : vector<256x128xf32> to vector<256x128xbf16>
    %c5 = arith.constant 5 : index
    %c0_27 = arith.constant 0 : index
    %c0_28 = arith.constant 0 : index
    %68 = vector.load %arg4[%c5, %c0_27, %c0_28] : memref<9x128x128xbf16, #tpu.memory_space<vmem>>, vector<1x128x128xbf16>
    %69 = vector.shape_cast %68 : vector<1x128x128xbf16> to vector<128x128xbf16>
    %cst_29 = arith.constant dense<0.000000e+00> : vector<256x128xf32>
    %70 = tpu.matmul %67, %69, %cst_29 {dimension_numbers = #tpu.dot_dimension_numbers<[1], [0], [0], [1], [0, 0, 1, 1], [], []>} : vector<256x128xbf16>, vector<128x128xbf16>, vector<256x128xf32> -> vector<256x128xf32>
    %71 = arith.addf %64, %70 : vector<256x128xf32>
    %72 = vector.extract_strided_slice %28 {offsets = [2, 0, 0], sizes = [16, 16, 128], strides = [1, 1, 1]} : vector<18x18x128xf32> to vector<16x16x128xf32>
    %73 = vector.shape_cast %72 : vector<16x16x128xf32> to vector<256x128xf32>
    %74 = arith.truncf %73 : vector<256x128xf32> to vector<256x128xbf16>
    %c6 = arith.constant 6 : index
    %c0_30 = arith.constant 0 : index
    %c0_31 = arith.constant 0 : index
    %75 = vector.load %arg4[%c6, %c0_30, %c0_31] : memref<9x128x128xbf16, #tpu.memory_space<vmem>>, vector<1x128x128xbf16>
    %76 = vector.shape_cast %75 : vector<1x128x128xbf16> to vector<128x128xbf16>
    %cst_32 = arith.constant dense<0.000000e+00> : vector<256x128xf32>
    %77 = tpu.matmul %74, %76, %cst_32 {dimension_numbers = #tpu.dot_dimension_numbers<[1], [0], [0], [1], [0, 0, 1, 1], [], []>} : vector<256x128xbf16>, vector<128x128xbf16>, vector<256x128xf32> -> vector<256x128xf32>
    %78 = arith.addf %71, %77 : vector<256x128xf32>
    %79 = vector.extract_strided_slice %28 {offsets = [2, 1, 0], sizes = [16, 16, 128], strides = [1, 1, 1]} : vector<18x18x128xf32> to vector<16x16x128xf32>
    %80 = vector.shape_cast %79 : vector<16x16x128xf32> to vector<256x128xf32>
    %81 = arith.truncf %80 : vector<256x128xf32> to vector<256x128xbf16>
    %c7 = arith.constant 7 : index
    %c0_33 = arith.constant 0 : index
    %c0_34 = arith.constant 0 : index
    %82 = vector.load %arg4[%c7, %c0_33, %c0_34] : memref<9x128x128xbf16, #tpu.memory_space<vmem>>, vector<1x128x128xbf16>
    %83 = vector.shape_cast %82 : vector<1x128x128xbf16> to vector<128x128xbf16>
    %cst_35 = arith.constant dense<0.000000e+00> : vector<256x128xf32>
    %84 = tpu.matmul %81, %83, %cst_35 {dimension_numbers = #tpu.dot_dimension_numbers<[1], [0], [0], [1], [0, 0, 1, 1], [], []>} : vector<256x128xbf16>, vector<128x128xbf16>, vector<256x128xf32> -> vector<256x128xf32>
    %85 = arith.addf %78, %84 : vector<256x128xf32>
    %86 = vector.extract_strided_slice %28 {offsets = [2, 2, 0], sizes = [16, 16, 128], strides = [1, 1, 1]} : vector<18x18x128xf32> to vector<16x16x128xf32>
    %87 = vector.shape_cast %86 : vector<16x16x128xf32> to vector<256x128xf32>
    %88 = arith.truncf %87 : vector<256x128xf32> to vector<256x128xbf16>
    %c8 = arith.constant 8 : index
    %c0_36 = arith.constant 0 : index
    %c0_37 = arith.constant 0 : index
    %89 = vector.load %arg4[%c8, %c0_36, %c0_37] : memref<9x128x128xbf16, #tpu.memory_space<vmem>>, vector<1x128x128xbf16>
    %90 = vector.shape_cast %89 : vector<1x128x128xbf16> to vector<128x128xbf16>
    %cst_38 = arith.constant dense<0.000000e+00> : vector<256x128xf32>
    %91 = tpu.matmul %88, %90, %cst_38 {dimension_numbers = #tpu.dot_dimension_numbers<[1], [0], [0], [1], [0, 0, 1, 1], [], []>} : vector<256x128xbf16>, vector<128x128xbf16>, vector<256x128xf32> -> vector<256x128xf32>
    %92 = arith.addf %85, %91 : vector<256x128xf32>
    %93 = vector.shape_cast %92 : vector<256x128xf32> to vector<16x16x128xf32>
    %c0_39 = arith.constant 0 : index
    %c0_40 = arith.constant 0 : index
    %c0_41 = arith.constant 0 : index
    %c0_42 = arith.constant 0 : index
    %94 = vector.load %arg5[%c0_39, %c0_40, %c0_41, %c0_42] : memref<1x16x16x128xf32, #tpu.memory_space<vmem>>, vector<1x16x16x128xf32>
    %95 = vector.shape_cast %94 : vector<1x16x16x128xf32> to vector<16x16x128xf32>
    %96 = vector.shape_cast %93 : vector<16x16x128xf32> to vector<1x16x16x128xf32>
    tpu.vector_store %arg5[%c0_39, %c0_40, %c0_41, %c0_42], %96 {strides = array<i32>} : memref<1x16x16x128xf32, #tpu.memory_space<vmem>>, vector<1x16x16x128xf32>,
    %cst_43 = arith.constant dense<0.000000e+00> : vector<128xf32>
    %97 = vector.multi_reduction <add>, %92, %cst_43 [0] : vector<256x128xf32> to vector<128xf32>
    %98 = vector.shape_cast %97 : vector<128xf32> to vector<1x128xf32>
    %99 = vector.shape_cast %98 : vector<1x128xf32> to vector<1x1x128xf32>
    %c0_44 = arith.constant 0 : index
    %c0_45 = arith.constant 0 : index
    %c0_46 = arith.constant 0 : index
    %100 = vector.load %arg6[%c0_44, %c0_45, %c0_46] : memref<1x2x128xf32, #tpu.memory_space<vmem>>, vector<1x1x128xf32>
    tpu.vector_store %arg6[%c0_44, %c0_45, %c0_46], %99 {strides = array<i32>} : memref<1x2x128xf32, #tpu.memory_space<vmem>>, vector<1x1x128xf32>,
    %101 = arith.mulf %92, %92 : vector<256x128xf32>
    %cst_47 = arith.constant dense<0.000000e+00> : vector<128xf32>
    %102 = vector.multi_reduction <add>, %101, %cst_47 [0] : vector<256x128xf32> to vector<128xf32>
    %103 = vector.shape_cast %102 : vector<128xf32> to vector<1x128xf32>
    %104 = vector.shape_cast %103 : vector<1x128xf32> to vector<1x1x128xf32>
    %c0_48 = arith.constant 0 : index
    %c1_49 = arith.constant 1 : index
    %c0_50 = arith.constant 0 : index
    %105 = vector.load %arg6[%c0_48, %c1_49, %c0_50] : memref<1x2x128xf32, #tpu.memory_space<vmem>>, vector<1x1x128xf32>
    tpu.vector_store %arg6[%c0_48, %c1_49, %c0_50], %104 {strides = array<i32>} : memref<1x2x128xf32, #tpu.memory_space<vmem>>, vector<1x1x128xf32>,
    return
  }
  func.func @transform_0(%arg0: i32) -> (i32, i32, i32, i32) {
    %c0_i32 = arith.constant 0 : i32
    %c0_i32_0 = arith.constant 0 : i32
    %c0_i32_1 = arith.constant 0 : i32
    %c0_i32_2 = arith.constant 0 : i32
    return %arg0, %c0_i32, %c0_i32_0, %c0_i32_1 : i32, i32, i32, i32
  }
  func.func @transform_1(%arg0: i32) -> (i32, i32) {
    %c0_i32 = arith.constant 0 : i32
    %c0_i32_0 = arith.constant 0 : i32
    %c0_i32_1 = arith.constant 0 : i32
    return %c0_i32, %c0_i32_0 : i32, i32
  }
  func.func @transform_2(%arg0: i32) -> (i32, i32) {
    %c0_i32 = arith.constant 0 : i32
    %c0_i32_0 = arith.constant 0 : i32
    %c0_i32_1 = arith.constant 0 : i32
    return %c0_i32, %c0_i32_0 : i32, i32
  }
  func.func @transform_3(%arg0: i32) -> (i32, i32, i32) {
    %c0_i32 = arith.constant 0 : i32
    %c0_i32_0 = arith.constant 0 : i32
    %c0_i32_1 = arith.constant 0 : i32
    %c0_i32_2 = arith.constant 0 : i32
    return %c0_i32, %c0_i32_0, %c0_i32_1 : i32, i32, i32
  }
  func.func @transform_4(%arg0: i32) -> (i32, i32, i32, i32) {
    %c0_i32 = arith.constant 0 : i32
    %c0_i32_0 = arith.constant 0 : i32
    %c0_i32_1 = arith.constant 0 : i32
    %c0_i32_2 = arith.constant 0 : i32
    return %arg0, %c0_i32, %c0_i32_0, %c0_i32_1 : i32, i32, i32, i32
  }
  func.func @transform_5(%arg0: i32) -> (i32, i32, i32) {
    %c0_i32 = arith.constant 0 : i32
    %c0_i32_0 = arith.constant 0 : i32
    %c0_i32_1 = arith.constant 0 : i32
    return %arg0, %c0_i32, %c0_i32_0 : i32, i32, i32
  }
}

module attributes {stable_mosaic.version = 11 : i64} {
  func.func @_bn_relu_matmul_stats_kernel(%arg0: i32, %arg1: memref<256x128xf32, #tpu.memory_space<vmem>>, %arg2: memref<1x128xf32, #tpu.memory_space<vmem>>, %arg3: memref<1x128xf32, #tpu.memory_space<vmem>>, %arg4: memref<128x128xbf16, #tpu.memory_space<vmem>>, %arg5: memref<256x128xf32, #tpu.memory_space<vmem>>, %arg6: memref<1x2x128xf32, #tpu.memory_space<vmem>>) attributes {dimension_semantics = [#tpu.dimension_semantics<parallel>], iteration_bounds = array<i64: 2>, scalar_prefetch = 0 : i64, scratch_operands = 0 : i64, tpu.core_type = #tpu.core_type<tc>, window_params = [{transform_indices = @transform_0, window_bounds = array<i64: 256, 128>}, {pipeline_mode = #tpu.pipeline_mode<synchronous>, transform_indices = @transform_1, window_bounds = array<i64: 1, 128>}, {pipeline_mode = #tpu.pipeline_mode<synchronous>, transform_indices = @transform_2, window_bounds = array<i64: 1, 128>}, {pipeline_mode = #tpu.pipeline_mode<synchronous>, transform_indices = @transform_3, window_bounds = array<i64: 128, 128>}, {transform_indices = @transform_4, window_bounds = array<i64: 256, 128>}, {transform_indices = @transform_5, window_bounds = array<i64: 1, 2, 128>}]} {
    %c0 = arith.constant 0 : index
    %c0_0 = arith.constant 0 : index
    %0 = vector.load %arg1[%c0, %c0_0] : memref<256x128xf32, #tpu.memory_space<vmem>>, vector<256x128xf32>
    %c0_1 = arith.constant 0 : index
    %c0_2 = arith.constant 0 : index
    %1 = vector.load %arg2[%c0_1, %c0_2] : memref<1x128xf32, #tpu.memory_space<vmem>>, vector<1x128xf32>
    %2 = vector.broadcast %1 : vector<1x128xf32> to vector<256x128xf32>
    %3 = arith.mulf %0, %2 : vector<256x128xf32>
    %c0_3 = arith.constant 0 : index
    %c0_4 = arith.constant 0 : index
    %4 = vector.load %arg3[%c0_3, %c0_4] : memref<1x128xf32, #tpu.memory_space<vmem>>, vector<1x128xf32>
    %5 = vector.broadcast %4 : vector<1x128xf32> to vector<256x128xf32>
    %6 = arith.addf %3, %5 : vector<256x128xf32>
    %cst = arith.constant 0.000000e+00 : f32
    %7 = vector.broadcast %cst : f32 to vector<256x128xf32>
    %8 = arith.maximumf %6, %7 : vector<256x128xf32>
    %9 = arith.truncf %8 : vector<256x128xf32> to vector<256x128xbf16>
    %c0_5 = arith.constant 0 : index
    %c0_6 = arith.constant 0 : index
    %10 = vector.load %arg4[%c0_5, %c0_6] : memref<128x128xbf16, #tpu.memory_space<vmem>>, vector<128x128xbf16>
    %cst_7 = arith.constant dense<0.000000e+00> : vector<256x128xf32>
    %11 = tpu.matmul %9, %10, %cst_7 {dimension_numbers = #tpu.dot_dimension_numbers<[1], [0], [0], [1], [0, 0, 1, 1], [], []>} : vector<256x128xbf16>, vector<128x128xbf16>, vector<256x128xf32> -> vector<256x128xf32>
    %c0_8 = arith.constant 0 : index
    %c0_9 = arith.constant 0 : index
    %12 = vector.load %arg5[%c0_8, %c0_9] : memref<256x128xf32, #tpu.memory_space<vmem>>, vector<256x128xf32>
    tpu.vector_store %arg5[%c0_8, %c0_9], %11 {strides = array<i32>} : memref<256x128xf32, #tpu.memory_space<vmem>>, vector<256x128xf32>,
    %cst_10 = arith.constant dense<0.000000e+00> : vector<128xf32>
    %13 = vector.multi_reduction <add>, %11, %cst_10 [0] : vector<256x128xf32> to vector<128xf32>
    %14 = vector.shape_cast %13 : vector<128xf32> to vector<1x128xf32>
    %15 = vector.shape_cast %14 : vector<1x128xf32> to vector<1x1x128xf32>
    %c0_11 = arith.constant 0 : index
    %c0_12 = arith.constant 0 : index
    %c0_13 = arith.constant 0 : index
    %16 = vector.load %arg6[%c0_11, %c0_12, %c0_13] : memref<1x2x128xf32, #tpu.memory_space<vmem>>, vector<1x1x128xf32>
    tpu.vector_store %arg6[%c0_11, %c0_12, %c0_13], %15 {strides = array<i32>} : memref<1x2x128xf32, #tpu.memory_space<vmem>>, vector<1x1x128xf32>,
    %17 = arith.mulf %11, %11 : vector<256x128xf32>
    %cst_14 = arith.constant dense<0.000000e+00> : vector<128xf32>
    %18 = vector.multi_reduction <add>, %17, %cst_14 [0] : vector<256x128xf32> to vector<128xf32>
    %19 = vector.shape_cast %18 : vector<128xf32> to vector<1x128xf32>
    %20 = vector.shape_cast %19 : vector<1x128xf32> to vector<1x1x128xf32>
    %c0_15 = arith.constant 0 : index
    %c1 = arith.constant 1 : index
    %c0_16 = arith.constant 0 : index
    %21 = vector.load %arg6[%c0_15, %c1, %c0_16] : memref<1x2x128xf32, #tpu.memory_space<vmem>>, vector<1x1x128xf32>
    tpu.vector_store %arg6[%c0_15, %c1, %c0_16], %20 {strides = array<i32>} : memref<1x2x128xf32, #tpu.memory_space<vmem>>, vector<1x1x128xf32>,
    return
  }
  func.func @transform_0(%arg0: i32) -> (i32, i32) {
    %c0_i32 = arith.constant 0 : i32
    %c0_i32_0 = arith.constant 0 : i32
    return %arg0, %c0_i32 : i32, i32
  }
  func.func @transform_1(%arg0: i32) -> (i32, i32) {
    %c0_i32 = arith.constant 0 : i32
    %c0_i32_0 = arith.constant 0 : i32
    %c0_i32_1 = arith.constant 0 : i32
    return %c0_i32, %c0_i32_0 : i32, i32
  }
  func.func @transform_2(%arg0: i32) -> (i32, i32) {
    %c0_i32 = arith.constant 0 : i32
    %c0_i32_0 = arith.constant 0 : i32
    %c0_i32_1 = arith.constant 0 : i32
    return %c0_i32, %c0_i32_0 : i32, i32
  }
  func.func @transform_3(%arg0: i32) -> (i32, i32) {
    %c0_i32 = arith.constant 0 : i32
    %c0_i32_0 = arith.constant 0 : i32
    %c0_i32_1 = arith.constant 0 : i32
    return %c0_i32, %c0_i32_0 : i32, i32
  }
  func.func @transform_4(%arg0: i32) -> (i32, i32) {
    %c0_i32 = arith.constant 0 : i32
    %c0_i32_0 = arith.constant 0 : i32
    return %arg0, %c0_i32 : i32, i32
  }
  func.func @transform_5(%arg0: i32) -> (i32, i32, i32) {
    %c0_i32 = arith.constant 0 : i32
    %c0_i32_0 = arith.constant 0 : i32
    %c0_i32_1 = arith.constant 0 : i32
    return %arg0, %c0_i32, %c0_i32_0 : i32, i32, i32
  }
}

module attributes {stable_mosaic.version = 11 : i64} {
  func.func @_bn_add_relu_kernel(%arg0: i32, %arg1: memref<256x128xf32, #tpu.memory_space<vmem>>, %arg2: memref<1x128xf32, #tpu.memory_space<vmem>>, %arg3: memref<1x128xf32, #tpu.memory_space<vmem>>, %arg4: memref<256x128xf32, #tpu.memory_space<vmem>>, %arg5: memref<256x128xf32, #tpu.memory_space<vmem>>) attributes {dimension_semantics = [#tpu.dimension_semantics<parallel>], iteration_bounds = array<i64: 2>, scalar_prefetch = 0 : i64, scratch_operands = 0 : i64, tpu.core_type = #tpu.core_type<tc>, window_params = [{transform_indices = @transform_0, window_bounds = array<i64: 256, 128>}, {pipeline_mode = #tpu.pipeline_mode<synchronous>, transform_indices = @transform_1, window_bounds = array<i64: 1, 128>}, {pipeline_mode = #tpu.pipeline_mode<synchronous>, transform_indices = @transform_2, window_bounds = array<i64: 1, 128>}, {transform_indices = @transform_3, window_bounds = array<i64: 256, 128>}, {transform_indices = @transform_4, window_bounds = array<i64: 256, 128>}]} {
    %c0 = arith.constant 0 : index
    %c0_0 = arith.constant 0 : index
    %0 = vector.load %arg1[%c0, %c0_0] : memref<256x128xf32, #tpu.memory_space<vmem>>, vector<256x128xf32>
    %c0_1 = arith.constant 0 : index
    %c0_2 = arith.constant 0 : index
    %1 = vector.load %arg2[%c0_1, %c0_2] : memref<1x128xf32, #tpu.memory_space<vmem>>, vector<1x128xf32>
    %2 = vector.broadcast %1 : vector<1x128xf32> to vector<256x128xf32>
    %3 = arith.mulf %0, %2 : vector<256x128xf32>
    %c0_3 = arith.constant 0 : index
    %c0_4 = arith.constant 0 : index
    %4 = vector.load %arg3[%c0_3, %c0_4] : memref<1x128xf32, #tpu.memory_space<vmem>>, vector<1x128xf32>
    %5 = vector.broadcast %4 : vector<1x128xf32> to vector<256x128xf32>
    %6 = arith.addf %3, %5 : vector<256x128xf32>
    %c0_5 = arith.constant 0 : index
    %c0_6 = arith.constant 0 : index
    %7 = vector.load %arg4[%c0_5, %c0_6] : memref<256x128xf32, #tpu.memory_space<vmem>>, vector<256x128xf32>
    %8 = arith.addf %6, %7 : vector<256x128xf32>
    %cst = arith.constant 0.000000e+00 : f32
    %9 = vector.broadcast %cst : f32 to vector<256x128xf32>
    %10 = arith.maximumf %8, %9 : vector<256x128xf32>
    %c0_7 = arith.constant 0 : index
    %c0_8 = arith.constant 0 : index
    %11 = vector.load %arg5[%c0_7, %c0_8] : memref<256x128xf32, #tpu.memory_space<vmem>>, vector<256x128xf32>
    tpu.vector_store %arg5[%c0_7, %c0_8], %10 {strides = array<i32>} : memref<256x128xf32, #tpu.memory_space<vmem>>, vector<256x128xf32>,
    return
  }
  func.func @transform_0(%arg0: i32) -> (i32, i32) {
    %c0_i32 = arith.constant 0 : i32
    %c0_i32_0 = arith.constant 0 : i32
    return %arg0, %c0_i32 : i32, i32
  }
  func.func @transform_1(%arg0: i32) -> (i32, i32) {
    %c0_i32 = arith.constant 0 : i32
    %c0_i32_0 = arith.constant 0 : i32
    %c0_i32_1 = arith.constant 0 : i32
    return %c0_i32, %c0_i32_0 : i32, i32
  }
  func.func @transform_2(%arg0: i32) -> (i32, i32) {
    %c0_i32 = arith.constant 0 : i32
    %c0_i32_0 = arith.constant 0 : i32
    %c0_i32_1 = arith.constant 0 : i32
    return %c0_i32, %c0_i32_0 : i32, i32
  }
  func.func @transform_3(%arg0: i32) -> (i32, i32) {
    %c0_i32 = arith.constant 0 : i32
    %c0_i32_0 = arith.constant 0 : i32
    return %arg0, %c0_i32 : i32, i32
  }
  func.func @transform_4(%arg0: i32) -> (i32, i32) {
    %c0_i32 = arith.constant 0 : i32
    %c0_i32_0 = arith.constant 0 : i32
    return %arg0, %c0_i32 : i32, i32
  }
}

</mosaic_0001>

<llo_original>
// kernel: _lambda_.4
$region0: #{_lambda_.4}
  #allocation0 [shape = 'u32[]', space=smem, size = 0x4, offset = 0x4, fixed_abs, tag = 'smem constant byte address 0x4 - core index']
  #allocation1 [shape = 'u32[144,128]{1,0:T(1,128)}', space=vmem, size = 0x12000, scoped, tag = 'internal scratch']
  %s0 = inlined_call_operand.vmem [shape: f32[512,128], index: 0, kind: input, shape index: {}]
  %s1 = inlined_call_operand.vmem [shape: bf16[128,128], index: 1, kind: input, shape index: {}]
  %s2 = inlined_call_operand.vmem [shape: f32[512,128], index: 2, kind: output, shape index: {0}]
  %s3 = inlined_call_operand.vmem [shape: f32[2,2,128], index: 3, kind: output, shape index: {1}]
  %4 = xla_tuple %s2, %s3
  %s5 = sld [smem:[#allocation0]]
  $region49: #{_lambda_.4} parent=0
    _
  %s7 = ssub.s32 1, %s5
  %s8 = scalar_select 0, %s7, %s5
  loop: start=0, step=1, limit=4
  $region2: #{_lambda_.4} parent=0 // loop_pre_header
    _
  $region3: #{_lambda_.4} parent=0 // loop_header
    %s10 = sphi 0, %s14
    %p11 = scmp.ge.s32.totalorder %s10, 4
    %s20 = sphi 0, %s22
    %s23 = sphi 0, %s20
    %s24 = sphi 0, %s23
    %s40 = sphi 0, %s24
    %s44 = sphi 0, %s44
    %s46 = sphi 0, %s44
    %s47 = sphi 0, %s46
    %s61 = sphi 0, %s47
    %s67 = sphi 0, %s69
    %s70 = sphi 0, %s67
    %s71 = sphi 0, %s70
    %s87 = sphi 0, %s71
    %s93 = sphi 0, %s95
    %s96 = sphi 0, %s93
    %s97 = sphi 0, %s96
    %s113 = sphi 0, %s97
  $region4: #{_lambda_.4} parent=0 // loop_header_branch
    %13 = sbr.rel (%p11) target = $region8
  $region5: #{_lambda_.4} parent=0 // loop_body
    %s15 = ssub.s32 %s10, 1
    %s16 = ssub.s32 %s10, 2
    %s17 = sadd.s32 %s10, 1
    %s18 = ssub.s32 %s10, %s17
    %p19 = scmp.eq.s32.totalorder %s18, 0
    %s21 = sadd.s32 %s20, 1
    %s22 = scalar_select %p19, %s20, %s21
    %p25 = pneg %p19
    %p26 = scmp.eq.s32.totalorder %s10, 1
    %p27 = por %p25, %p26
    %p28 = scmp.ne.s32.totalorder %s20, %s23
    %p29 = scmp.eq.s32.totalorder %s10, 0
    %p30 = por %p28, %p29
    %p31 = scmp.ne.s32.totalorder %s20, %s23
    %p32 = scmp.eq.s32.totalorder %s15, 1
    %p33 = por %p31, %p32
    %p34 = scmp.ne.s32.totalorder %s23, %s24
    %p35 = scmp.eq.s32.totalorder %s15, 0
    %p36 = por %p34, %p35
    %p37 = scmp.ne.s32.totalorder %s23, %s24
    %p38 = scmp.eq.s32.totalorder %s16, 1
    %p39 = por %p37, %p38
    %p41 = scmp.ne.s32.totalorder %s24, %s40
    %p42 = scmp.eq.s32.totalorder %s16, 0
    %p43 = por %p41, %p42
    %s45 = sadd.s32 %s44, 1
    %p48 = scmp.eq.s32.totalorder %s10, 1
    %p49 = scmp.ne.s32.totalorder %s44, %s46
    %p50 = scmp.eq.s32.totalorder %s10, 0
    %p51 = por %p49, %p50
    %p52 = scmp.ne.s32.totalorder %s44, %s46
    %p53 = scmp.eq.s32.totalorder %s15, 1
    %p54 = por %p52, %p53
    %p55 = scmp.ne.s32.totalorder %s46, %s47
    %p56 = scmp.eq.s32.totalorder %s15, 0
    %p57 = por %p55, %p56
    %p58 = scmp.ne.s32.totalorder %s46, %s47
    %p59 = scmp.eq.s32.totalorder %s16, 1
    %p60 = por %p58, %p59
    %p62 = scmp.ne.s32.totalorder %s47, %s61
    %p63 = scmp.eq.s32.totalorder %s16, 0
    %p64 = por %p62, %p63
    %s65 = ssub.s32 %s10, %s17
    %p66 = scmp.eq.s32.totalorder %s65, 0
    %s68 = sadd.s32 %s67, 1
    %s69 = scalar_select %p66, %s67, %s68
    %p72 = pneg %p66
    %p73 = scmp.eq.s32.totalorder %s10, 1
    %p74 = por %p72, %p73
    %p75 = scmp.ne.s32.totalorder %s67, %s70
    %p76 = scmp.eq.s32.totalorder %s10, 0
    %p77 = por %p75, %p76
    %p78 = scmp.ne.s32.totalorder %s67, %s70
    %p79 = scmp.eq.s32.totalorder %s15, 1
    %p80 = por %p78, %p79
    %p81 = scmp.ne.s32.totalorder %s70, %s71
    %p82 = scmp.eq.s32.totalorder %s15, 0
    %p83 = por %p81, %p82
    %p84 = scmp.ne.s32.totalorder %s70, %s71
    %p85 = scmp.eq.s32.totalorder %s16, 1
    %p86 = por %p84, %p85
    %p88 = scmp.ne.s32.totalorder %s71, %s87
    %p89 = scmp.eq.s32.totalorder %s16, 0
    %p90 = por %p88, %p89
    %s91 = ssub.s32 %s10, %s17
    %p92 = scmp.eq.s32.totalorder %s91, 0
    %s94 = sadd.s32 %s93, 1
    %s95 = scalar_select %p92, %s93, %s94
    %p98 = pneg %p92
    %p99 = scmp.eq.s32.totalorder %s10, 1
    %p100 = por %p98, %p99
    %p101 = scmp.ne.s32.totalorder %s93, %s96
    %p102 = scmp.eq.s32.totalorder %s10, 0
    %p103 = por %p101, %p102
    %p104 = scmp.ne.s32.totalorder %s93, %s96
    %p105 = scmp.eq.s32.totalorder %s15, 1
    %p106 = por %p104, %p105
    %p107 = scmp.ne.s32.totalorder %s96, %s97
    %p108 = scmp.eq.s32.totalorder %s15, 0
    %p109 = por %p107, %p108
    %p110 = scmp.ne.s32.totalorder %s96, %s97
    %p111 = scmp.eq.s32.totalorder %s16, 1
    %p112 = por %p110, %p111
    %p114 = scmp.ne.s32.totalorder %s97, %s113
    %p115 = scmp.eq.s32.totalorder %s16, 0
    %p116 = por %p114, %p115
    %p117 = scmp.le.s32.totalorder 1, %s10
    %p118 = scmp.lt.s32.totalorder %s10, 3
    %p119 = pnand %p117, %p118
    %p120 = pneg %p119
    // Predicated region
    $region9: #{_lambda_.4} parent=5 // pred_check
      _
    $region10: #{_lambda_.4} parent=5 // pred_check_branch
      %122 = sbr.rel (%p119) target = $region12
    $region11: #{_lambda_.4} parent=5 // pred_region
      %s123 = ssub.s32 %s10, 1
      // Predicated region
      $region13: #{_lambda_.4} parent=11 // pred_check
        %p124 = pneg %p57
      $region14: #{_lambda_.4} parent=11 // pred_check_branch
        %126 = sbr.rel (%p124) target = $region16
      $region15: #{_lambda_.4} parent=11 // pred_region
        _
      $region16: #{_lambda_.4} parent=11 // pred_fallthru
        _
    $region12: #{_lambda_.4} parent=5 // pred_fallthru
      _
    %p127 = scmp.lt.s32.totalorder %s10, 2
    // Predicated region
    $region17: #{_lambda_.4} parent=5 // pred_check
      %p128 = pneg %p127
    $region18: #{_lambda_.4} parent=5 // pred_check_branch
      %130 = sbr.rel (%p128) target = $region20
    $region19: #{_lambda_.4} parent=5 // pred_region
      // Predicated region
      $region21: #{_lambda_.4} parent=19 // pred_check
        %p131 = pneg %p30
      $region22: #{_lambda_.4} parent=19 // pred_check_branch
        %133 = sbr.rel (%p131) target = $region24
      $region23: #{_lambda_.4} parent=19 // pred_region
        %s134 = smul.u32 32, %s10
        %p135 = scmp.lt.s32.totalorder %s134, 63
        %s136 = scalar_select %p135, %s134, 63
        %s137 = smul.addr %s136, 8
        %s138 = scalar_lea.vmem %s0, %s137
        %s139 = smul.u32 32, %s10
      $region24: #{_lambda_.4} parent=19 // pred_fallthru
        _
    $region20: #{_lambda_.4} parent=5 // pred_fallthru
      _
    %p140 = scmp.le.s32.totalorder 1, %s10
    %p141 = scmp.lt.s32.totalorder %s10, 3
    %p142 = pnand %p140, %p141
    %p143 = pneg %p142
    // Predicated region
    $region25: #{_lambda_.4} parent=5 // pred_check
      _
    $region26: #{_lambda_.4} parent=5 // pred_check_branch
      %145 = sbr.rel (%p142) target = $region28
    $region27: #{_lambda_.4} parent=5 // pred_region
      %s146 = ssub.s32 %s10, 1
      %s147 = smul.u32 32, %s15
      %p148 = scmp.lt.s32.totalorder %s147, 63
      %s149 = scalar_select %p148, %s147, 63
      %s150 = smul.addr %s149, 8
      %s151 = scalar_lea.vmem %s0, %s150
      %p152 = pneg %p36
      %p153 = pneg %p33
      %p154 = pneg %p57
      %p155 = pneg %p54
      %p156 = pneg %p83
      %p157 = pneg %p80
      %s158 = smul.u32 32, %s15
      %p159 = scmp.lt.s32.totalorder %s158, 63
      %s160 = scalar_select %p159, %s158, 63
      %s161 = smul.addr %s160, 8
      %s162 = scalar_lea.vmem %s2, %s161
      %p163 = pneg %p109
      %p164 = pneg %p106
      %p165 = scmp.lt.s32.totalorder %s15, 1
      %s166 = scalar_select %p165, %s15, 1
      %s167 = smul.addr %s166, 2
      %s168 = scalar_lea.vmem %s3, %s167
      %s169 = smul.u32 32, %s15
      %p170 = scmp.lt.s32.totalorder %s169, 63
      %s171 = scalar_select %p170, %s169, 63
      %s172 = smul.addr %s171, 8
      %s173 = scalar_lea.vmem %s0, %s172
      %s174 = smul.u32 32, %s15
      %s175 = smul.u32 32, %s15
      %p176 = scmp.lt.s32.totalorder %s175, 63
      %s177 = scalar_select %p176, %s175, 63
      %s178 = smul.addr %s177, 8
      %s179 = scalar_lea.vmem %s2, %s178
      %s180 = smul.u32 32, %s15
      %p181 = scmp.lt.s32.totalorder %s15, 1
      %s182 = scalar_select %p181, %s15, 1
      %s183 = smul.addr %s182, 2
      %s184 = scalar_lea.vmem %s3, %s183
      %v186 = vld [vmem:[%s173] sm:$0xff]
      %v187 = vld [vmem:[%s173 + $0x8] sm:$0xff]
      %v188 = vld [vmem:[%s173 + $0x10] sm:$0xff]
      %v189 = vld [vmem:[%s173 + $0x18] sm:$0xff]
      %v190 = vld [vmem:[%s173 + $0x20] sm:$0xff]
      %v191 = vld [vmem:[%s173 + $0x28] sm:$0xff]
      %v192 = vld [vmem:[%s173 + $0x30] sm:$0xff]
      %v193 = vld [vmem:[%s173 + $0x38] sm:$0xff]
      %v194 = vld [vmem:[%s173 + $0x40] sm:$0xff]
      %v195 = vld [vmem:[%s173 + $0x48] sm:$0xff]
      %v196 = vld [vmem:[%s173 + $0x50] sm:$0xff]
      %v197 = vld [vmem:[%s173 + $0x58] sm:$0xff]
      %v198 = vld [vmem:[%s173 + $0x60] sm:$0xff]
      %v199 = vld [vmem:[%s173 + $0x68] sm:$0xff]
      %v200 = vld [vmem:[%s173 + $0x70] sm:$0xff]
      %v201 = vld [vmem:[%s173 + $0x78] sm:$0xff]
      %v202 = vld [vmem:[%s173 + $0x80] sm:$0xff]
      %v203 = vld [vmem:[%s173 + $0x88] sm:$0xff]
      %v204 = vld [vmem:[%s173 + $0x90] sm:$0xff]
      %v205 = vld [vmem:[%s173 + $0x98] sm:$0xff]
      %v206 = vld [vmem:[%s173 + $0xa0] sm:$0xff]
      %v207 = vld [vmem:[%s173 + $0xa8] sm:$0xff]
      %v208 = vld [vmem:[%s173 + $0xb0] sm:$0xff]
      %v209 = vld [vmem:[%s173 + $0xb8] sm:$0xff]
      %v210 = vld [vmem:[%s173 + $0xc0] sm:$0xff]
      %v211 = vld [vmem:[%s173 + $0xc8] sm:$0xff]
      %v212 = vld [vmem:[%s173 + $0xd0] sm:$0xff]
      %v213 = vld [vmem:[%s173 + $0xd8] sm:$0xff]
      %v214 = vld [vmem:[%s173 + $0xe0] sm:$0xff]
      %v215 = vld [vmem:[%s173 + $0xe8] sm:$0xff]
      %v216 = vld [vmem:[%s173 + $0xf0] sm:$0xff]
      %v217 = vld [vmem:[%s173 + $0xf8] sm:$0xff]
      %v218 = vpack.c.bf16 %v187, %v186
      %v219 = vpack.c.bf16 %v189, %v188
      %v220 = vpack.c.bf16 %v191, %v190
      %v221 = vpack.c.bf16 %v193, %v192
      %v222 = vpack.c.bf16 %v195, %v194
      %v223 = vpack.c.bf16 %v197, %v196
      %v224 = vpack.c.bf16 %v199, %v198
      %v225 = vpack.c.bf16 %v201, %v200
      %v226 = vpack.c.bf16 %v203, %v202
      %v227 = vpack.c.bf16 %v205, %v204
      %v228 = vpack.c.bf16 %v207, %v206
      %v229 = vpack.c.bf16 %v209, %v208
      %v230 = vpack.c.bf16 %v211, %v210
      %v231 = vpack.c.bf16 %v213, %v212
      %v232 = vpack.c.bf16 %v215, %v214
      %v233 = vpack.c.bf16 %v217, %v216
      %v234 = vld [vmem:[%s1] sm:$0xf]
      %v235 = vld [vmem:[%s1 + $0x4] sm:$0xf]
      %v236 = vld [vmem:[%s1 + $0x8] sm:$0xf]
      %v237 = vld [vmem:[%s1 + $0xc] sm:$0xf]
      %v238 = vld [vmem:[%s1 + $0x10] sm:$0xf]
      %v239 = vld [vmem:[%s1 + $0x14] sm:$0xf]
      %v240 = vld [vmem:[%s1 + $0x18] sm:$0xf]
      %v241 = vld [vmem:[%s1 + $0x1c] sm:$0xf]
      %v242 = vld [vmem:[%s1 + $0x20] sm:$0xf]
      %v243 = vld [vmem:[%s1 + $0x24] sm:$0xf]
      %v244 = vld [vmem:[%s1 + $0x28] sm:$0xf]
      %v245 = vld [vmem:[%s1 + $0x2c] sm:$0xf]
      %v246 = vld [vmem:[%s1 + $0x30] sm:$0xf]
      %v247 = vld [vmem:[%s1 + $0x34] sm:$0xf]
      %v248 = vld [vmem:[%s1 + $0x38] sm:$0xf]
      %v249 = vld [vmem:[%s1 + $0x3c] sm:$0xf]
      %v266 = vunpack.c.l.b16 %v234
      %v267 = vunpack.c.l.b16 %v235
      %v268 = vunpack.c.l.b16 %v236
      %v269 = vunpack.c.l.b16 %v237
      %v270 = vunpack.c.l.b16 %v238
      %v271 = vunpack.c.l.b16 %v239
      %v272 = vunpack.c.l.b16 %v240
      %v273 = vunpack.c.l.b16 %v241
      %v274 = vunpack.c.l.b16 %v242
      %v275 = vunpack.c.l.b16 %v243
      %v276 = vunpack.c.l.b16 %v244
      %v277 = vunpack.c.l.b16 %v245
      %v278 = vunpack.c.l.b16 %v246
      %v279 = vunpack.c.l.b16 %v247
      %v280 = vunpack.c.l.b16 %v248
      %v281 = vunpack.c.l.b16 %v249
      %v282 = vpack.c.b16 %v267, %v266
      %v283 = vpack.c.b16 %v269, %v268
      %v284 = vpack.c.b16 %v271, %v270
      %v285 = vpack.c.b16 %v273, %v272
      %v286 = vpack.c.b16 %v275, %v274
      %v287 = vpack.c.b16 %v277, %v276
      %v288 = vpack.c.b16 %v279, %v278
      %v289 = vpack.c.b16 %v281, %v280
      %298 = vmatprep.subr.bf16.mxu0 0
      %299 = vmatpush1.bf16.msra.mxu0 %v282
      %300 = vmatprep.subr.bf16.mxu0 0
      %301 = vmatpush1.bf16.msra.mxu0 %v283
      %302 = vmatprep.subr.bf16.mxu0 0
      %303 = vmatpush1.bf16.msra.mxu0 %v284
      %304 = vmatprep.subr.bf16.mxu0 0
      %305 = vmatpush1.bf16.msra.mxu0 %v285
      %306 = vmatprep.subr.bf16.mxu0 0
      %307 = vmatpush1.bf16.msra.mxu0 %v286
      %308 = vmatprep.subr.bf16.mxu0 0
      %309 = vmatpush1.bf16.msra.mxu0 %v287
      %310 = vmatprep.subr.bf16.mxu0 0
      %311 = vmatpush1.bf16.msra.mxu0 %v288
      %312 = vmatprep.subr.bf16.mxu0 0
      %313 = vmatpush1.bf16.msra.mxu0 %v289
      %314 = vmatprep.subr.bf16.mxu0 0
      %315 = vmatpush1.bf16.msra.mxu0 0
      %316 = vmatprep.subr.bf16.mxu0 0
      %317 = vmatpush1.bf16.msra.mxu0 0
      %318 = vmatprep.subr.bf16.mxu0 0
      %319 = vmatpush1.bf16.msra.mxu0 0
      %320 = vmatprep.subr.bf16.mxu0 0
      %321 = vmatpush1.bf16.msra.mxu0 0
      %322 = vmatprep.subr.bf16.mxu0 0
      %323 = vmatpush1.bf16.msra.mxu0 0
      %324 = vmatprep.subr.bf16.mxu0 0
      %325 = vmatpush1.bf16.msra.mxu0 0
      %326 = vmatprep.subr.bf16.mxu0 0
      %327 = vmatpush1.bf16.msra.mxu0 0
      %328 = vmatprep.subr.bf16.mxu0 0
      %329 = vmatpush1.bf16.msra.mxu0 0
      %330 = vmatprep.mubr.bf16.mxu0 0
      %331 = vmatmul.mubr.bf16.gmra.mrb[0].mxu0 %v218
      %v332 = vpop.f32.mrb[0].mxu0
      %v333 = vadd.f32 0.0, %v332
      %v334 = vpop.f32.mrb[0].mxu0
      %v335 = vpop.f32.mrb[0].mxu0
      %v336 = vadd.f32 0.0, %v335
      %v337 = vpop.f32.mrb[0].mxu0
      %338 = vmatprep.mubr.bf16.mxu0 0
      %339 = vmatmul.mubr.bf16.gmra.mrb[0].mxu0 %v219
      %v340 = vpop.f32.mrb[0].mxu0
      %v341 = vadd.f32 0.0, %v340
      %v342 = vpop.f32.mrb[0].mxu0
      %v343 = vpop.f32.mrb[0].mxu0
      %v344 = vadd.f32 0.0, %v343
      %v345 = vpop.f32.mrb[0].mxu0
      %346 = vmatprep.mubr.bf16.mxu0 0
      %347 = vmatmul.mubr.bf16.gmra.mrb[0].mxu0 %v220
      %v348 = vpop.f32.mrb[0].mxu0
      %v349 = vadd.f32 0.0, %v348
      %v350 = vpop.f32.mrb[0].mxu0
      %v351 = vpop.f32.mrb[0].mxu0
      %v352 = vadd.f32 0.0, %v351
      %v353 = vpop.f32.mrb[0].mxu0
      %354 = vmatprep.mubr.bf16.mxu0 0
      %355 = vmatmul.mubr.bf16.gmra.mrb[0].mxu0 %v221
      %v356 = vpop.f32.mrb[0].mxu0
      %v357 = vadd.f32 0.0, %v356
      %v358 = vpop.f32.mrb[0].mxu0
      %v359 = vpop.f32.mrb[0].mxu0
      %v360 = vadd.f32 0.0, %v359
      %v361 = vpop.f32.mrb[0].mxu0
      %362 = vmatprep.mubr.bf16.mxu0 0
      %363 = vmatmul.mubr.bf16.gmra.mrb[0].mxu0 %v222
      %v364 = vpop.f32.mrb[0].mxu0
      %v365 = vadd.f32 0.0, %v364
      %v366 = vpop.f32.mrb[0].mxu0
      %v367 = vpop.f32.mrb[0].mxu0
      %v368 = vadd.f32 0.0, %v367
      %v369 = vpop.f32.mrb[0].mxu0
      %370 = vmatprep.mubr.bf16.mxu0 0
      %371 = vmatmul.mubr.bf16.gmra.mrb[0].mxu0 %v223
      %v372 = vpop.f32.mrb[0].mxu0
      %v373 = vadd.f32 0.0, %v372
      %v374 = vpop.f32.mrb[0].mxu0
      %v375 = vpop.f32.mrb[0].mxu0
      %v376 = vadd.f32 0.0, %v375
      %v377 = vpop.f32.mrb[0].mxu0
      %378 = vmatprep.mubr.bf16.mxu0 0
      %379 = vmatmul.mubr.bf16.gmra.mrb[0].mxu0 %v224
      %v380 = vpop.f32.mrb[0].mxu0
      %v381 = vadd.f32 0.0, %v380
      %v382 = vpop.f32.mrb[0].mxu0
      %v383 = vpop.f32.mrb[0].mxu0
      %v384 = vadd.f32 0.0, %v383
      %v385 = vpop.f32.mrb[0].mxu0
      %386 = vmatprep.mubr.bf16.mxu0 0
      %387 = vmatmul.mubr.bf16.gmra.mrb[0].mxu0 %v225
      %v388 = vpop.f32.mrb[0].mxu0
      %v389 = vadd.f32 0.0, %v388
      %v390 = vpop.f32.mrb[0].mxu0
      %v391 = vpop.f32.mrb[0].mxu0
      %v392 = vadd.f32 0.0, %v391
      %v393 = vpop.f32.mrb[0].mxu0
      %394 = vmatprep.mubr.bf16.mxu0 0
      %395 = vmatmul.mubr.bf16.gmra.mrb[0].mxu0 %v226
      %v396 = vpop.f32.mrb[0].mxu0
      %v397 = vadd.f32 0.0, %v396
      %v398 = vpop.f32.mrb[0].mxu0
      %v399 = vpop.f32.mrb[0].mxu0
      %v400 = vadd.f32 0.0, %v399
      %v401 = vpop.f32.mrb[0].mxu0
      %402 = vmatprep.mubr.bf16.mxu0 0
      %403 = vmatmul.mubr.bf16.gmra.mrb[0].mxu0 %v227
      %v404 = vpop.f32.mrb[0].mxu0
      %v405 = vadd.f32 0.0, %v404
      %v406 = vpop.f32.mrb[0].mxu0
      %v407 = vpop.f32.mrb[0].mxu0
      %v408 = vadd.f32 0.0, %v407
      %v409 = vpop.f32.mrb[0].mxu0
      %410 = vmatprep.mubr.bf16.mxu0 0
      %411 = vmatmul.mubr.bf16.gmra.mrb[0].mxu0 %v228
      %v412 = vpop.f32.mrb[0].mxu0
      %v413 = vadd.f32 0.0, %v412
      %v414 = vpop.f32.mrb[0].mxu0
      %v415 = vpop.f32.mrb[0].mxu0
      %v416 = vadd.f32 0.0, %v415
      %v417 = vpop.f32.mrb[0].mxu0
      %418 = vmatprep.mubr.bf16.mxu0 0
      %419 = vmatmul.mubr.bf16.gmra.mrb[0].mxu0 %v229
      %v420 = vpop.f32.mrb[0].mxu0
      %v421 = vadd.f32 0.0, %v420
      %v422 = vpop.f32.mrb[0].mxu0
      %v423 = vpop.f32.mrb[0].mxu0
      %v424 = vadd.f32 0.0, %v423
      %v425 = vpop.f32.mrb[0].mxu0
      %426 = vmatprep.mubr.bf16.mxu0 0
      %427 = vmatmul.mubr.bf16.gmra.mrb[0].mxu0 %v230
      %v428 = vpop.f32.mrb[0].mxu0
      %v429 = vadd.f32 0.0, %v428
      %v430 = vpop.f32.mrb[0].mxu0
      %v431 = vpop.f32.mrb[0].mxu0
      %v432 = vadd.f32 0.0, %v431
      %v433 = vpop.f32.mrb[0].mxu0
      %434 = vmatprep.mubr.bf16.mxu0 0
      %435 = vmatmul.mubr.bf16.gmra.mrb[0].mxu0 %v231
      %v436 = vpop.f32.mrb[0].mxu0
      %v437 = vadd.f32 0.0, %v436
      %v438 = vpop.f32.mrb[0].mxu0
      %v439 = vpop.f32.mrb[0].mxu0
      %v440 = vadd.f32 0.0, %v439
      %v441 = vpop.f32.mrb[0].mxu0
      %442 = vmatprep.mubr.bf16.mxu0 0
      %443 = vmatmul.mubr.bf16.gmra.mrb[0].mxu0 %v232
      %v444 = vpop.f32.mrb[0].mxu0
      %v445 = vadd.f32 0.0, %v444
      %v446 = vpop.f32.mrb[0].mxu0
      %v447 = vpop.f32.mrb[0].mxu0
      %v448 = vadd.f32 0.0, %v447
      %v449 = vpop.f32.mrb[0].mxu0
      %450 = vmatprep.mubr.bf16.mxu0 0
      %451 = vmatmul.mubr.bf16.gmra.mrb[0].mxu0 %v233
      %v452 = vpop.f32.mrb[0].mxu0
      %v453 = vadd.f32 0.0, %v452
      %v454 = vpop.f32.mrb[0].mxu0
      %v455 = vpop.f32.mrb[0].mxu0
      %v456 = vadd.f32 0.0, %v455
      %v457 = vpop.f32.mrb[0].mxu0
      %458 = vdwg.mxu0
      %459 = vst [vmem:[%s179] sm:$0xff] %v333
      %460 = vst [vmem:[%s179 + $0x8] sm:$0xff] %v336
      %461 = vst [vmem:[%s179 + $0x10] sm:$0xff] %v341
      %462 = vst [vmem:[%s179 + $0x18] sm:$0xff] %v344
      %463 = vst [vmem:[%s179 + $0x20] sm:$0xff] %v349
      %464 = vst [vmem:[%s179 + $0x28] sm:$0xff] %v352
      %465 = vst [vmem:[%s179 + $0x30] sm:$0xff] %v357
      %466 = vst [vmem:[%s179 + $0x38] sm:$0xff] %v360
      %467 = vst [vmem:[%s179 + $0x40] sm:$0xff] %v365
      %468 = vst [vmem:[%s179 + $0x48] sm:$0xff] %v368
      %469 = vst [vmem:[%s179 + $0x50] sm:$0xff] %v373
      %470 = vst [vmem:[%s179 + $0x58] sm:$0xff] %v376
      %471 = vst [vmem:[%s179 + $0x60] sm:$0xff] %v381
      %472 = vst [vmem:[%s179 + $0x68] sm:$0xff] %v384
      %473 = vst [vmem:[%s179 + $0x70] sm:$0xff] %v389
      %474 = vst [vmem:[%s179 + $0x78] sm:$0xff] %v392
      %475 = vst [vmem:[%s179 + $0x80] sm:$0xff] %v397
      %476 = vst [vmem:[%s179 + $0x88] sm:$0xff] %v400
      %477 = vst [vmem:[%s179 + $0x90] sm:$0xff] %v405
      %478 = vst [vmem:[%s179 + $0x98] sm:$0xff] %v408
      %479 = vst [vmem:[%s179 + $0xa0] sm:$0xff] %v413
      %480 = vst [vmem:[%s179 + $0xa8] sm:$0xff] %v416
      %481 = vst [vmem:[%s179 + $0xb0] sm:$0xff] %v421
      %482 = vst [vmem:[%s179 + $0xb8] sm:$0xff] %v424
      %483 = vst [vmem:[%s179 + $0xc0] sm:$0xff] %v429
      %484 = vst [vmem:[%s179 + $0xc8] sm:$0xff] %v432
      %485 = vst [vmem:[%s179 + $0xd0] sm:$0xff] %v437
      %486 = vst [vmem:[%s179 + $0xd8] sm:$0xff] %v440
      %487 = vst [vmem:[%s179 + $0xe0] sm:$0xff] %v445
      %488 = vst [vmem:[%s179 + $0xe8] sm:$0xff] %v448
      %489 = vst [vmem:[%s179 + $0xf0] sm:$0xff] %v453
      %490 = vst [vmem:[%s179 + $0xf8] sm:$0xff] %v456
      %v491 = vadd.f32 %v333, %v336
      %v492 = vadd.f32 %v491, %v341
      %v493 = vadd.f32 %v492, %v344
      %v494 = vadd.f32 %v493, %v349
      %v495 = vadd.f32 %v494, %v352
      %v496 = vadd.f32 %v495, %v357
      %v497 = vadd.f32 %v496, %v360
      %v498 = vadd.f32 %v497, %v365
      %v499 = vadd.f32 %v498, %v368
      %v500 = vadd.f32 %v499, %v373
      %v501 = vadd.f32 %v500, %v376
      %v502 = vadd.f32 %v501, %v381
      %v503 = vadd.f32 %v502, %v384
      %v504 = vadd.f32 %v503, %v389
      %v505 = vadd.f32 %v504, %v392
      %v506 = vadd.f32 %v505, %v397
      %v507 = vadd.f32 %v506, %v400
      %v508 = vadd.f32 %v507, %v405
      %v509 = vadd.f32 %v508, %v408
      %v510 = vadd.f32 %v509, %v413
      %v511 = vadd.f32 %v510, %v416
      %v512 = vadd.f32 %v511, %v421
      %v513 = vadd.f32 %v512, %v424
      %v514 = vadd.f32 %v513, %v429
      %v515 = vadd.f32 %v514, %v432
      %v516 = vadd.f32 %v515, %v437
      %v517 = vadd.f32 %v516, %v440
      %v518 = vadd.f32 %v517, %v445
      %v519 = vadd.f32 %v518, %v448
      %v520 = vadd.f32 %v519, %v453
      %v521 = vadd.f32 %v520, %v456
      %v522 = vrot.slane %v521, 4
      %v523 = vadd.f32 %v521, %v522
      %v524 = vrot.slane %v523, 2
      %v525 = vadd.f32 %v523, %v524
      %v526 = vrot.slane %v525, 1
      %v527 = vadd.f32 %v525, %v526
      %528 = vst [vmem:[%s184] sm:$0x1] %v527
      %v529 = vmul.f32 %v333, %v333
      %v530 = vmul.f32 %v336, %v336
      %v531 = vmul.f32 %v341, %v341
      %v532 = vmul.f32 %v344, %v344
      %v533 = vmul.f32 %v349, %v349
      %v534 = vmul.f32 %v352, %v352
      %v535 = vmul.f32 %v357, %v357
      %v536 = vmul.f32 %v360, %v360
      %v537 = vmul.f32 %v365, %v365
      %v538 = vmul.f32 %v368, %v368
      %v539 = vmul.f32 %v373, %v373
      %v540 = vmul.f32 %v376, %v376
      %v541 = vmul.f32 %v381, %v381
      %v542 = vmul.f32 %v384, %v384
      %v543 = vmul.f32 %v389, %v389
      %v544 = vmul.f32 %v392, %v392
      %v545 = vmul.f32 %v397, %v397
      %v546 = vmul.f32 %v400, %v400
      %v547 = vmul.f32 %v405, %v405
      %v548 = vmul.f32 %v408, %v408
      %v549 = vmul.f32 %v413, %v413
      %v550 = vmul.f32 %v416, %v416
      %v551 = vmul.f32 %v421, %v421
      %v552 = vmul.f32 %v424, %v424
      %v553 = vmul.f32 %v429, %v429
      %v554 = vmul.f32 %v432, %v432
      %v555 = vmul.f32 %v437, %v437
      %v556 = vmul.f32 %v440, %v440
      %v557 = vmul.f32 %v445, %v445
      %v558 = vmul.f32 %v448, %v448
      %v559 = vmul.f32 %v453, %v453
      %v560 = vmul.f32 %v456, %v456
      %v561 = vadd.f32 %v529, %v530
      %v562 = vadd.f32 %v561, %v531
      %v563 = vadd.f32 %v562, %v532
      %v564 = vadd.f32 %v563, %v533
      %v565 = vadd.f32 %v564, %v534
      %v566 = vadd.f32 %v565, %v535
      %v567 = vadd.f32 %v566, %v536
      %v568 = vadd.f32 %v567, %v537
      %v569 = vadd.f32 %v568, %v538
      %v570 = vadd.f32 %v569, %v539
      %v571 = vadd.f32 %v570, %v540
      %v572 = vadd.f32 %v571, %v541
      %v573 = vadd.f32 %v572, %v542
      %v574 = vadd.f32 %v573, %v543
      %v575 = vadd.f32 %v574, %v544
      %v576 = vadd.f32 %v575, %v545
      %v577 = vadd.f32 %v576, %v546
      %v578 = vadd.f32 %v577, %v547
      %v579 = vadd.f32 %v578, %v548
      %v580 = vadd.f32 %v579, %v549
      %v581 = vadd.f32 %v580, %v550
      %v582 = vadd.f32 %v581, %v551
      %v583 = vadd.f32 %v582, %v552
      %v584 = vadd.f32 %v583, %v553
      %v585 = vadd.f32 %v584, %v554
      %v586 = vadd.f32 %v585, %v555
      %v587 = vadd.f32 %v586, %v556
      %v588 = vadd.f32 %v587, %v557
      %v589 = vadd.f32 %v588, %v558
      %v590 = vadd.f32 %v589, %v559
      %v591 = vadd.f32 %v590, %v560
      %v592 = vrot.slane %v591, 4
      %v593 = vadd.f32 %v591, %v592
      %v594 = vrot.slane %v593, 2
      %v595 = vadd.f32 %v593, %v594
      %v596 = vrot.slane %v595, 1
      %v597 = vadd.f32 %v595, %v596
      %598 = vst [vmem:[%s184 + $0x1] sm:$0x1] %v597
      %s599 = smul.u32 32, %s15
      %p600 = scmp.lt.s32.totalorder %s599, 63
      %s601 = scalar_select %p600, %s599, 63
      %s602 = smul.addr %s601, 8
      %s603 = scalar_lea.vmem %s2, %s602
      %p604 = scmp.lt.s32.totalorder %s15, 1
      %s605 = scalar_select %p604, %s15, 1
      %s606 = smul.addr %s605, 2
      %s607 = scalar_lea.vmem %s3, %s606
      // Predicated region
      $region29: #{_lambda_.4} parent=27 // pred_check
        %p608 = pneg %p80
      $region30: #{_lambda_.4} parent=27 // pred_check_branch
        %610 = sbr.rel (%p608) target = $region32
      $region31: #{_lambda_.4} parent=27 // pred_region
        %s611 = smul.u32 32, %s15
      $region32: #{_lambda_.4} parent=27 // pred_fallthru
        _
      // Predicated region
      $region33: #{_lambda_.4} parent=27 // pred_check
        %p612 = pneg %p106
      $region34: #{_lambda_.4} parent=27 // pred_check_branch
        %614 = sbr.rel (%p612) target = $region36
      $region35: #{_lambda_.4} parent=27 // pred_region
        _
      $region36: #{_lambda_.4} parent=27 // pred_fallthru
        _
    $region28: #{_lambda_.4} parent=5 // pred_fallthru
      _
    %p615 = scmp.le.s32.totalorder 2, %s10
    // Predicated region
    $region37: #{_lambda_.4} parent=5 // pred_check
      %p616 = pneg %p615
    $region38: #{_lambda_.4} parent=5 // pred_check_branch
      %618 = sbr.rel (%p616) target = $region40
    $region39: #{_lambda_.4} parent=5 // pred_region
      %s619 = ssub.s32 %s10, 2
      // Predicated region
      $region41: #{_lambda_.4} parent=39 // pred_check
        %p620 = pneg %p86
      $region42: #{_lambda_.4} parent=39 // pred_check_branch
        %622 = sbr.rel (%p620) target = $region44
      $region43: #{_lambda_.4} parent=39 // pred_region
        %s623 = smul.u32 32, %s16
        %p624 = scmp.lt.s32.totalorder %s623, 63
        %s625 = scalar_select %p624, %s623, 63
        %s626 = smul.addr %s625, 8
        %s627 = scalar_lea.vmem %s2, %s626
      $region44: #{_lambda_.4} parent=39 // pred_fallthru
        _
      // Predicated region
      $region45: #{_lambda_.4} parent=39 // pred_check
        %p628 = pneg %p112
      $region46: #{_lambda_.4} parent=39 // pred_check_branch
        %630 = sbr.rel (%p628) target = $region48
      $region47: #{_lambda_.4} parent=39 // pred_region
        %p631 = scmp.lt.s32.totalorder %s16, 1
        %s632 = scalar_select %p631, %s16, 1
        %s633 = smul.addr %s632, 2
        %s634 = scalar_lea.vmem %s3, %s633
      $region48: #{_lambda_.4} parent=39 // pred_fallthru
        _
    $region40: #{_lambda_.4} parent=5 // pred_fallthru
      _
  $region6: #{_lambda_.4} parent=0 // loop_footer
    %s14 = sadd.s32 1, %s10
  $region7: #{_lambda_.4} parent=0 // loop_footer_branch
    %9 = sbr.rel target = $region3
  $region8: #{_lambda_.4} parent=0 // loop_exit
    _

// kernel: _lambda_.7
$region0: #{_lambda_.7}
  #allocation0 [shape = 'u32[]', space=smem, size = 0x4, offset = 0x4, fixed_abs, tag = 'smem constant byte address 0x4 - core index']
  #allocation1 [shape = 'u32[144,128]{1,0:T(1,128)}', space=vmem, size = 0x12000, scoped, tag = 'internal scratch']
  %s0 = inlined_call_operand.vmem [shape: f32[512,128], index: 0, kind: input, shape index: {}]
  %s1 = inlined_call_operand.vmem [shape: f32[1,128], index: 1, kind: input, shape index: {}]
  %s2 = inlined_call_operand.vmem [shape: f32[1,128], index: 2, kind: input, shape index: {}]
  %s3 = inlined_call_operand.vmem [shape: f32[512,128], index: 3, kind: input, shape index: {}]
  %s4 = inlined_call_operand.vmem [shape: f32[512,128], index: 4, kind: output, shape index: {}]
  %s5 = sld [smem:[#allocation0]]
  $region49: #{_lambda_.7} parent=0
    _
  %s7 = ssub.s32 1, %s5
  %s8 = scalar_select 0, %s7, %s5
  loop: start=0, step=1, limit=4
  $region2: #{_lambda_.7} parent=0 // loop_pre_header
    _
  $region3: #{_lambda_.7} parent=0 // loop_header
    %s10 = sphi 0, %s14
    %p11 = scmp.ge.s32.totalorder %s10, 4
    %s20 = sphi 0, %s22
    %s23 = sphi 0, %s20
    %s24 = sphi 0, %s23
    %s40 = sphi 0, %s24
    %s44 = sphi 0, %s44
    %s46 = sphi 0, %s44
    %s47 = sphi 0, %s46
    %s61 = sphi 0, %s47
    %s65 = sphi 0, %s65
    %s67 = sphi 0, %s65
    %s68 = sphi 0, %s67
    %s82 = sphi 0, %s68
    %s88 = sphi 0, %s90
    %s91 = sphi 0, %s88
    %s92 = sphi 0, %s91
    %s108 = sphi 0, %s92
    %s114 = sphi 0, %s116
    %s117 = sphi 0, %s114
    %s118 = sphi 0, %s117
    %s134 = sphi 0, %s118
  $region4: #{_lambda_.7} parent=0 // loop_header_branch
    %13 = sbr.rel (%p11) target = $region8
  $region5: #{_lambda_.7} parent=0 // loop_body
    %s15 = ssub.s32 %s10, 1
    %s16 = ssub.s32 %s10, 2
    %s17 = sadd.s32 %s10, 1
    %s18 = ssub.s32 %s10, %s17
    %p19 = scmp.eq.s32.totalorder %s18, 0
    %s21 = sadd.s32 %s20, 1
    %s22 = scalar_select %p19, %s20, %s21
    %p25 = pneg %p19
    %p26 = scmp.eq.s32.totalorder %s10, 1
    %p27 = por %p25, %p26
    %p28 = scmp.ne.s32.totalorder %s20, %s23
    %p29 = scmp.eq.s32.totalorder %s10, 0
    %p30 = por %p28, %p29
    %p31 = scmp.ne.s32.totalorder %s20, %s23
    %p32 = scmp.eq.s32.totalorder %s15, 1
    %p33 = por %p31, %p32
    %p34 = scmp.ne.s32.totalorder %s23, %s24
    %p35 = scmp.eq.s32.totalorder %s15, 0
    %p36 = por %p34, %p35
    %p37 = scmp.ne.s32.totalorder %s23, %s24
    %p38 = scmp.eq.s32.totalorder %s16, 1
    %p39 = por %p37, %p38
    %p41 = scmp.ne.s32.totalorder %s24, %s40
    %p42 = scmp.eq.s32.totalorder %s16, 0
    %p43 = por %p41, %p42
    %s45 = sadd.s32 %s44, 1
    %p48 = scmp.eq.s32.totalorder %s10, 1
    %p49 = scmp.ne.s32.totalorder %s44, %s46
    %p50 = scmp.eq.s32.totalorder %s10, 0
    %p51 = por %p49, %p50
    %p52 = scmp.ne.s32.totalorder %s44, %s46
    %p53 = scmp.eq.s32.totalorder %s15, 1
    %p54 = por %p52, %p53
    %p55 = scmp.ne.s32.totalorder %s46, %s47
    %p56 = scmp.eq.s32.totalorder %s15, 0
    %p57 = por %p55, %p56
    %p58 = scmp.ne.s32.totalorder %s46, %s47
    %p59 = scmp.eq.s32.totalorder %s16, 1
    %p60 = por %p58, %p59
    %p62 = scmp.ne.s32.totalorder %s47, %s61
    %p63 = scmp.eq.s32.totalorder %s16, 0
    %p64 = por %p62, %p63
    %s66 = sadd.s32 %s65, 1
    %p69 = scmp.eq.s32.totalorder %s10, 1
    %p70 = scmp.ne.s32.totalorder %s65, %s67
    %p71 = scmp.eq.s32.totalorder %s10, 0
    %p72 = por %p70, %p71
    %p73 = scmp.ne.s32.totalorder %s65, %s67
    %p74 = scmp.eq.s32.totalorder %s15, 1
    %p75 = por %p73, %p74
    %p76 = scmp.ne.s32.totalorder %s67, %s68
    %p77 = scmp.eq.s32.totalorder %s15, 0
    %p78 = por %p76, %p77
    %p79 = scmp.ne.s32.totalorder %s67, %s68
    %p80 = scmp.eq.s32.totalorder %s16, 1
    %p81 = por %p79, %p80
    %p83 = scmp.ne.s32.totalorder %s68, %s82
    %p84 = scmp.eq.s32.totalorder %s16, 0
    %p85 = por %p83, %p84
    %s86 = ssub.s32 %s10, %s17
    %p87 = scmp.eq.s32.totalorder %s86, 0
    %s89 = sadd.s32 %s88, 1
    %s90 = scalar_select %p87, %s88, %s89
    %p93 = pneg %p87
    %p94 = scmp.eq.s32.totalorder %s10, 1
    %p95 = por %p93, %p94
    %p96 = scmp.ne.s32.totalorder %s88, %s91
    %p97 = scmp.eq.s32.totalorder %s10, 0
    %p98 = por %p96, %p97
    %p99 = scmp.ne.s32.totalorder %s88, %s91
    %p100 = scmp.eq.s32.totalorder %s15, 1
    %p101 = por %p99, %p100
    %p102 = scmp.ne.s32.totalorder %s91, %s92
    %p103 = scmp.eq.s32.totalorder %s15, 0
    %p104 = por %p102, %p103
    %p105 = scmp.ne.s32.totalorder %s91, %s92
    %p106 = scmp.eq.s32.totalorder %s16, 1
    %p107 = por %p105, %p106
    %p109 = scmp.ne.s32.totalorder %s92, %s108
    %p110 = scmp.eq.s32.totalorder %s16, 0
    %p111 = por %p109, %p110
    %s112 = ssub.s32 %s10, %s17
    %p113 = scmp.eq.s32.totalorder %s112, 0
    %s115 = sadd.s32 %s114, 1
    %s116 = scalar_select %p113, %s114, %s115
    %p119 = pneg %p113
    %p120 = scmp.eq.s32.totalorder %s10, 1
    %p121 = por %p119, %p120
    %p122 = scmp.ne.s32.totalorder %s114, %s117
    %p123 = scmp.eq.s32.totalorder %s10, 0
    %p124 = por %p122, %p123
    %p125 = scmp.ne.s32.totalorder %s114, %s117
    %p126 = scmp.eq.s32.totalorder %s15, 1
    %p127 = por %p125, %p126
    %p128 = scmp.ne.s32.totalorder %s117, %s118
    %p129 = scmp.eq.s32.totalorder %s15, 0
    %p130 = por %p128, %p129
    %p131 = scmp.ne.s32.totalorder %s117, %s118
    %p132 = scmp.eq.s32.totalorder %s16, 1
    %p133 = por %p131, %p132
    %p135 = scmp.ne.s32.totalorder %s118, %s134
    %p136 = scmp.eq.s32.totalorder %s16, 0
    %p137 = por %p135, %p136
    %p138 = scmp.le.s32.totalorder 1, %s10
    %p139 = scmp.lt.s32.totalorder %s10, 3
    %p140 = pnand %p138, %p139
    %p141 = pneg %p140
    // Predicated region
    $region9: #{_lambda_.7} parent=5 // pred_check
      _
    $region10: #{_lambda_.7} parent=5 // pred_check_branch
      %143 = sbr.rel (%p140) target = $region12
    $region11: #{_lambda_.7} parent=5 // pred_region
      %s144 = ssub.s32 %s10, 1
      // Predicated region
      $region13: #{_lambda_.7} parent=11 // pred_check
        %p145 = pneg %p57
      $region14: #{_lambda_.7} parent=11 // pred_check_branch
        %147 = sbr.rel (%p145) target = $region16
      $region15: #{_lambda_.7} parent=11 // pred_region
        _
      $region16: #{_lambda_.7} parent=11 // pred_fallthru
        _
      // Predicated region
      $region17: #{_lambda_.7} parent=11 // pred_check
        %p148 = pneg %p78
      $region18: #{_lambda_.7} parent=11 // pred_check_branch
        %150 = sbr.rel (%p148) target = $region20
      $region19: #{_lambda_.7} parent=11 // pred_region
        _
      $region20: #{_lambda_.7} parent=11 // pred_fallthru
        _
    $region12: #{_lambda_.7} parent=5 // pred_fallthru
      _
    %p151 = scmp.lt.s32.totalorder %s10, 2
    // Predicated region
    $region21: #{_lambda_.7} parent=5 // pred_check
      %p152 = pneg %p151
    $region22: #{_lambda_.7} parent=5 // pred_check_branch
      %154 = sbr.rel (%p152) target = $region24
    $region23: #{_lambda_.7} parent=5 // pred_region
      // Predicated region
      $region25: #{_lambda_.7} parent=23 // pred_check
        %p155 = pneg %p30
      $region26: #{_lambda_.7} parent=23 // pred_check_branch
        %157 = sbr.rel (%p155) target = $region28
      $region27: #{_lambda_.7} parent=23 // pred_region
        %s158 = smul.u32 32, %s10
        %p159 = scmp.lt.s32.totalorder %s158, 63
        %s160 = scalar_select %p159, %s158, 63
        %s161 = smul.addr %s160, 8
        %s162 = scalar_lea.vmem %s0, %s161
        %s163 = smul.u32 32, %s10
      $region28: #{_lambda_.7} parent=23 // pred_fallthru
        _
      // Predicated region
      $region29: #{_lambda_.7} parent=23 // pred_check
        %p164 = pneg %p98
      $region30: #{_lambda_.7} parent=23 // pred_check_branch
        %166 = sbr.rel (%p164) target = $region32
      $region31: #{_lambda_.7} parent=23 // pred_region
        %s167 = smul.u32 32, %s10
        %p168 = scmp.lt.s32.totalorder %s167, 63
        %s169 = scalar_select %p168, %s167, 63
        %s170 = smul.addr %s169, 8
        %s171 = scalar_lea.vmem %s3, %s170
        %s172 = smul.u32 32, %s10
      $region32: #{_lambda_.7} parent=23 // pred_fallthru
        _
    $region24: #{_lambda_.7} parent=5 // pred_fallthru
      _
    %p173 = scmp.le.s32.totalorder 1, %s10
    %p174 = scmp.lt.s32.totalorder %s10, 3
    %p175 = pnand %p173, %p174
    %p176 = pneg %p175
    // Predicated region
    $region33: #{_lambda_.7} parent=5 // pred_check
      _
    $region34: #{_lambda_.7} parent=5 // pred_check_branch
      %178 = sbr.rel (%p175) target = $region36
    $region35: #{_lambda_.7} parent=5 // pred_region
      %s179 = ssub.s32 %s10, 1
      %s180 = smul.u32 32, %s15
      %p181 = scmp.lt.s32.totalorder %s180, 63
      %s182 = scalar_select %p181, %s180, 63
      %s183 = smul.addr %s182, 8
      %s184 = scalar_lea.vmem %s0, %s183
      %p185 = pneg %p36
      %p186 = pneg %p33
      %p187 = pneg %p57
      %p188 = pneg %p54
      %p189 = pneg %p78
      %p190 = pneg %p75
      %s191 = smul.u32 32, %s15
      %p192 = scmp.lt.s32.totalorder %s191, 63
      %s193 = scalar_select %p192, %s191, 63
      %s194 = smul.addr %s193, 8
      %s195 = scalar_lea.vmem %s3, %s194
      %p196 = pneg %p104
      %p197 = pneg %p101
      %p198 = pneg %p130
      %p199 = pneg %p127
      %s200 = smul.u32 32, %s15
      %p201 = scmp.lt.s32.totalorder %s200, 63
      %s202 = scalar_select %p201, %s200, 63
      %s203 = smul.addr %s202, 8
      %s204 = scalar_lea.vmem %s4, %s203
      %s205 = smul.u32 32, %s15
      %p206 = scmp.lt.s32.totalorder %s205, 63
      %s207 = scalar_select %p206, %s205, 63
      %s208 = smul.addr %s207, 8
      %s209 = scalar_lea.vmem %s0, %s208
      %s210 = smul.u32 32, %s15
      %s211 = smul.u32 32, %s15
      %p212 = scmp.lt.s32.totalorder %s211, 63
      %s213 = scalar_select %p212, %s211, 63
      %s214 = smul.addr %s213, 8
      %s215 = scalar_lea.vmem %s3, %s214
      %s216 = smul.u32 32, %s15
      %s217 = smul.u32 32, %s15
      %p218 = scmp.lt.s32.totalorder %s217, 63
      %s219 = scalar_select %p218, %s217, 63
      %s220 = smul.addr %s219, 8
      %s221 = scalar_lea.vmem %s4, %s220
      %s222 = smul.u32 32, %s15
      %v223 = vld [vmem:[%s209] sm:$0xff]
      %v224 = vld [vmem:[%s209 + $0x8] sm:$0xff]
      %v225 = vld [vmem:[%s209 + $0x10] sm:$0xff]
      %v226 = vld [vmem:[%s209 + $0x18] sm:$0xff]
      %v227 = vld [vmem:[%s209 + $0x20] sm:$0xff]
      %v228 = vld [vmem:[%s209 + $0x28] sm:$0xff]
      %v229 = vld [vmem:[%s209 + $0x30] sm:$0xff]
      %v230 = vld [vmem:[%s209 + $0x38] sm:$0xff]
      %v231 = vld [vmem:[%s209 + $0x40] sm:$0xff]
      %v232 = vld [vmem:[%s209 + $0x48] sm:$0xff]
      %v233 = vld [vmem:[%s209 + $0x50] sm:$0xff]
      %v234 = vld [vmem:[%s209 + $0x58] sm:$0xff]
      %v235 = vld [vmem:[%s209 + $0x60] sm:$0xff]
      %v236 = vld [vmem:[%s209 + $0x68] sm:$0xff]
      %v237 = vld [vmem:[%s209 + $0x70] sm:$0xff]
      %v238 = vld [vmem:[%s209 + $0x78] sm:$0xff]
      %v239 = vld [vmem:[%s209 + $0x80] sm:$0xff]
      %v240 = vld [vmem:[%s209 + $0x88] sm:$0xff]
      %v241 = vld [vmem:[%s209 + $0x90] sm:$0xff]
      %v242 = vld [vmem:[%s209 + $0x98] sm:$0xff]
      %v243 = vld [vmem:[%s209 + $0xa0] sm:$0xff]
      %v244 = vld [vmem:[%s209 + $0xa8] sm:$0xff]
      %v245 = vld [vmem:[%s209 + $0xb0] sm:$0xff]
      %v246 = vld [vmem:[%s209 + $0xb8] sm:$0xff]
      %v247 = vld [vmem:[%s209 + $0xc0] sm:$0xff]
      %v248 = vld [vmem:[%s209 + $0xc8] sm:$0xff]
      %v249 = vld [vmem:[%s209 + $0xd0] sm:$0xff]
      %v250 = vld [vmem:[%s209 + $0xd8] sm:$0xff]
      %v251 = vld [vmem:[%s209 + $0xe0] sm:$0xff]
      %v252 = vld [vmem:[%s209 + $0xe8] sm:$0xff]
      %v253 = vld [vmem:[%s209 + $0xf0] sm:$0xff]
      %v254 = vld [vmem:[%s209 + $0xf8] sm:$0xff]
      %v255 = vld [vmem:[%s1] sm:$0x1]
      %v257 = vlaneseq
      %v258 = vshrl.u32 %v257, 7
      %v259 = vsub.s32 0, %v258
      %v260 = vrot.slane %v255, %v259
      %v262 = vmul.f32 %v223, %v260
      %v263 = vmul.f32 %v224, %v260
      %v264 = vmul.f32 %v225, %v260
      %v265 = vmul.f32 %v226, %v260
      %v266 = vmul.f32 %v227, %v260
      %v267 = vmul.f32 %v228, %v260
      %v268 = vmul.f32 %v229, %v260
      %v269 = vmul.f32 %v230, %v260
      %v270 = vmul.f32 %v231, %v260
      %v271 = vmul.f32 %v232, %v260
      %v272 = vmul.f32 %v233, %v260
      %v273 = vmul.f32 %v234, %v260
      %v274 = vmul.f32 %v235, %v260
      %v275 = vmul.f32 %v236, %v260
      %v276 = vmul.f32 %v237, %v260
      %v277 = vmul.f32 %v238, %v260
      %v278 = vmul.f32 %v239, %v260
      %v279 = vmul.f32 %v240, %v260
      %v280 = vmul.f32 %v241, %v260
      %v281 = vmul.f32 %v242, %v260
      %v282 = vmul.f32 %v243, %v260
      %v283 = vmul.f32 %v244, %v260
      %v284 = vmul.f32 %v245, %v260
      %v285 = vmul.f32 %v246, %v260
      %v286 = vmul.f32 %v247, %v260
      %v287 = vmul.f32 %v248, %v260
      %v288 = vmul.f32 %v249, %v260
      %v289 = vmul.f32 %v250, %v260
      %v290 = vmul.f32 %v251, %v260
      %v291 = vmul.f32 %v252, %v260
      %v292 = vmul.f32 %v253, %v260
      %v293 = vmul.f32 %v254, %v260
      %v294 = vld [vmem:[%s2] sm:$0x1]
      %v296 = vlaneseq
      %v297 = vshrl.u32 %v296, 7
      %v298 = vsub.s32 0, %v297
      %v299 = vrot.slane %v294, %v298
      %v301 = vadd.f32 %v262, %v299
      %v302 = vadd.f32 %v263, %v299
      %v303 = vadd.f32 %v264, %v299
      %v304 = vadd.f32 %v265, %v299
      %v305 = vadd.f32 %v266, %v299
      %v306 = vadd.f32 %v267, %v299
      %v307 = vadd.f32 %v268, %v299
      %v308 = vadd.f32 %v269, %v299
      %v309 = vadd.f32 %v270, %v299
      %v310 = vadd.f32 %v271, %v299
      %v311 = vadd.f32 %v272, %v299
      %v312 = vadd.f32 %v273, %v299
      %v313 = vadd.f32 %v274, %v299
      %v314 = vadd.f32 %v275, %v299
      %v315 = vadd.f32 %v276, %v299
      %v316 = vadd.f32 %v277, %v299
      %v317 = vadd.f32 %v278, %v299
      %v318 = vadd.f32 %v279, %v299
      %v319 = vadd.f32 %v280, %v299
      %v320 = vadd.f32 %v281, %v299
      %v321 = vadd.f32 %v282, %v299
      %v322 = vadd.f32 %v283, %v299
      %v323 = vadd.f32 %v284, %v299
      %v324 = vadd.f32 %v285, %v299
      %v325 = vadd.f32 %v286, %v299
      %v326 = vadd.f32 %v287, %v299
      %v327 = vadd.f32 %v288, %v299
      %v328 = vadd.f32 %v289, %v299
      %v329 = vadd.f32 %v290, %v299
      %v330 = vadd.f32 %v291, %v299
      %v331 = vadd.f32 %v292, %v299
      %v332 = vadd.f32 %v293, %v299
      %v333 = vld [vmem:[%s215] sm:$0xff]
      %v334 = vld [vmem:[%s215 + $0x8] sm:$0xff]
      %v335 = vld [vmem:[%s215 + $0x10] sm:$0xff]
      %v336 = vld [vmem:[%s215 + $0x18] sm:$0xff]
      %v337 = vld [vmem:[%s215 + $0x20] sm:$0xff]
      %v338 = vld [vmem:[%s215 + $0x28] sm:$0xff]
      %v339 = vld [vmem:[%s215 + $0x30] sm:$0xff]
      %v340 = vld [vmem:[%s215 + $0x38] sm:$0xff]
      %v341 = vld [vmem:[%s215 + $0x40] sm:$0xff]
      %v342 = vld [vmem:[%s215 + $0x48] sm:$0xff]
      %v343 = vld [vmem:[%s215 + $0x50] sm:$0xff]
      %v344 = vld [vmem:[%s215 + $0x58] sm:$0xff]
      %v345 = vld [vmem:[%s215 + $0x60] sm:$0xff]
      %v346 = vld [vmem:[%s215 + $0x68] sm:$0xff]
      %v347 = vld [vmem:[%s215 + $0x70] sm:$0xff]
      %v348 = vld [vmem:[%s215 + $0x78] sm:$0xff]
      %v349 = vld [vmem:[%s215 + $0x80] sm:$0xff]
      %v350 = vld [vmem:[%s215 + $0x88] sm:$0xff]
      %v351 = vld [vmem:[%s215 + $0x90] sm:$0xff]
      %v352 = vld [vmem:[%s215 + $0x98] sm:$0xff]
      %v353 = vld [vmem:[%s215 + $0xa0] sm:$0xff]
      %v354 = vld [vmem:[%s215 + $0xa8] sm:$0xff]
      %v355 = vld [vmem:[%s215 + $0xb0] sm:$0xff]
      %v356 = vld [vmem:[%s215 + $0xb8] sm:$0xff]
      %v357 = vld [vmem:[%s215 + $0xc0] sm:$0xff]
      %v358 = vld [vmem:[%s215 + $0xc8] sm:$0xff]
      %v359 = vld [vmem:[%s215 + $0xd0] sm:$0xff]
      %v360 = vld [vmem:[%s215 + $0xd8] sm:$0xff]
      %v361 = vld [vmem:[%s215 + $0xe0] sm:$0xff]
      %v362 = vld [vmem:[%s215 + $0xe8] sm:$0xff]
      %v363 = vld [vmem:[%s215 + $0xf0] sm:$0xff]
      %v364 = vld [vmem:[%s215 + $0xf8] sm:$0xff]
      %v365 = vadd.f32 %v301, %v333
      %v366 = vadd.f32 %v302, %v334
      %v367 = vadd.f32 %v303, %v335
      %v368 = vadd.f32 %v304, %v336
      %v369 = vadd.f32 %v305, %v337
      %v370 = vadd.f32 %v306, %v338
      %v371 = vadd.f32 %v307, %v339
      %v372 = vadd.f32 %v308, %v340
      %v373 = vadd.f32 %v309, %v341
      %v374 = vadd.f32 %v310, %v342
      %v375 = vadd.f32 %v311, %v343
      %v376 = vadd.f32 %v312, %v344
      %v377 = vadd.f32 %v313, %v345
      %v378 = vadd.f32 %v314, %v346
      %v379 = vadd.f32 %v315, %v347
      %v380 = vadd.f32 %v316, %v348
      %v381 = vadd.f32 %v317, %v349
      %v382 = vadd.f32 %v318, %v350
      %v383 = vadd.f32 %v319, %v351
      %v384 = vadd.f32 %v320, %v352
      %v385 = vadd.f32 %v321, %v353
      %v386 = vadd.f32 %v322, %v354
      %v387 = vadd.f32 %v323, %v355
      %v388 = vadd.f32 %v324, %v356
      %v389 = vadd.f32 %v325, %v357
      %v390 = vadd.f32 %v326, %v358
      %v391 = vadd.f32 %v327, %v359
      %v392 = vadd.f32 %v328, %v360
      %v393 = vadd.f32 %v329, %v361
      %v394 = vadd.f32 %v330, %v362
      %v395 = vadd.f32 %v331, %v363
      %v396 = vadd.f32 %v332, %v364
      %v397 = vmax.f32 %v365, 0.0
      %v398 = vmax.f32 %v366, 0.0
      %v399 = vmax.f32 %v367, 0.0
      %v400 = vmax.f32 %v368, 0.0
      %v401 = vmax.f32 %v369, 0.0
      %v402 = vmax.f32 %v370, 0.0
      %v403 = vmax.f32 %v371, 0.0
      %v404 = vmax.f32 %v372, 0.0
      %v405 = vmax.f32 %v373, 0.0
      %v406 = vmax.f32 %v374, 0.0
      %v407 = vmax.f32 %v375, 0.0
      %v408 = vmax.f32 %v376, 0.0
      %v409 = vmax.f32 %v377, 0.0
      %v410 = vmax.f32 %v378, 0.0
      %v411 = vmax.f32 %v379, 0.0
      %v412 = vmax.f32 %v380, 0.0
      %v413 = vmax.f32 %v381, 0.0
      %v414 = vmax.f32 %v382, 0.0
      %v415 = vmax.f32 %v383, 0.0
      %v416 = vmax.f32 %v384, 0.0
      %v417 = vmax.f32 %v385, 0.0
      %v418 = vmax.f32 %v386, 0.0
      %v419 = vmax.f32 %v387, 0.0
      %v420 = vmax.f32 %v388, 0.0
      %v421 = vmax.f32 %v389, 0.0
      %v422 = vmax.f32 %v390, 0.0
      %v423 = vmax.f32 %v391, 0.0
      %v424 = vmax.f32 %v392, 0.0
      %v425 = vmax.f32 %v393, 0.0
      %v426 = vmax.f32 %v394, 0.0
      %v427 = vmax.f32 %v395, 0.0
      %v428 = vmax.f32 %v396, 0.0
      %429 = vst [vmem:[%s221] sm:$0xff] %v397
      %430 = vst [vmem:[%s221 + $0x8] sm:$0xff] %v398
      %431 = vst [vmem:[%s221 + $0x10] sm:$0xff] %v399
      %432 = vst [vmem:[%s221 + $0x18] sm:$0xff] %v400
      %433 = vst [vmem:[%s221 + $0x20] sm:$0xff] %v401
      %434 = vst [vmem:[%s221 + $0x28] sm:$0xff] %v402
      %435 = vst [vmem:[%s221 + $0x30] sm:$0xff] %v403
      %436 = vst [vmem:[%s221 + $0x38] sm:$0xff] %v404
      %437 = vst [vmem:[%s221 + $0x40] sm:$0xff] %v405
      %438 = vst [vmem:[%s221 + $0x48] sm:$0xff] %v406
      %439 = vst [vmem:[%s221 + $0x50] sm:$0xff] %v407
      %440 = vst [vmem:[%s221 + $0x58] sm:$0xff] %v408
      %441 = vst [vmem:[%s221 + $0x60] sm:$0xff] %v409
      %442 = vst [vmem:[%s221 + $0x68] sm:$0xff] %v410
      %443 = vst [vmem:[%s221 + $0x70] sm:$0xff] %v411
      %444 = vst [vmem:[%s221 + $0x78] sm:$0xff] %v412
      %445 = vst [vmem:[%s221 + $0x80] sm:$0xff] %v413
      %446 = vst [vmem:[%s221 + $0x88] sm:$0xff] %v414
      %447 = vst [vmem:[%s221 + $0x90] sm:$0xff] %v415
      %448 = vst [vmem:[%s221 + $0x98] sm:$0xff] %v416
      %449 = vst [vmem:[%s221 + $0xa0] sm:$0xff] %v417
      %450 = vst [vmem:[%s221 + $0xa8] sm:$0xff] %v418
      %451 = vst [vmem:[%s221 + $0xb0] sm:$0xff] %v419
      %452 = vst [vmem:[%s221 + $0xb8] sm:$0xff] %v420
      %453 = vst [vmem:[%s221 + $0xc0] sm:$0xff] %v421
      %454 = vst [vmem:[%s221 + $0xc8] sm:$0xff] %v422
      %455 = vst [vmem:[%s221 + $0xd0] sm:$0xff] %v423
      %456 = vst [vmem:[%s221 + $0xd8] sm:$0xff] %v424
      %457 = vst [vmem:[%s221 + $0xe0] sm:$0xff] %v425
      %458 = vst [vmem:[%s221 + $0xe8] sm:$0xff] %v426
      %459 = vst [vmem:[%s221 + $0xf0] sm:$0xff] %v427
      %460 = vst [vmem:[%s221 + $0xf8] sm:$0xff] %v428
      %s461 = smul.u32 32, %s15
      %p462 = scmp.lt.s32.totalorder %s461, 63
      %s463 = scalar_select %p462, %s461, 63
      %s464 = smul.addr %s463, 8
      %s465 = scalar_lea.vmem %s4, %s464
      // Predicated region
      $region37: #{_lambda_.7} parent=35 // pred_check
        %p466 = pneg %p127
      $region38: #{_lambda_.7} parent=35 // pred_check_branch
        %468 = sbr.rel (%p466) target = $region40
      $region39: #{_lambda_.7} parent=35 // pred_region
        %s469 = smul.u32 32, %s15
      $region40: #{_lambda_.7} parent=35 // pred_fallthru
        _
    $region36: #{_lambda_.7} parent=5 // pred_fallthru
      _
    %p470 = scmp.le.s32.totalorder 2, %s10
    // Predicated region
    $region41: #{_lambda_.7} parent=5 // pred_check
      %p471 = pneg %p470
    $region42: #{_lambda_.7} parent=5 // pred_check_branch
      %473 = sbr.rel (%p471) target = $region44
    $region43: #{_lambda_.7} parent=5 // pred_region
      %s474 = ssub.s32 %s10, 2
      // Predicated region
      $region45: #{_lambda_.7} parent=43 // pred_check
        %p475 = pneg %p133
      $region46: #{_lambda_.7} parent=43 // pred_check_branch
        %477 = sbr.rel (%p475) target = $region48
      $region47: #{_lambda_.7} parent=43 // pred_region
        %s478 = smul.u32 32, %s16
        %p479 = scmp.lt.s32.totalorder %s478, 63
        %s480 = scalar_select %p479, %s478, 63
        %s481 = smul.addr %s480, 8
        %s482 = scalar_lea.vmem %s4, %s481
      $region48: #{_lambda_.7} parent=43 // pred_fallthru
        _
    $region44: #{_lambda_.7} parent=5 // pred_fallthru
      _
  $region6: #{_lambda_.7} parent=0 // loop_footer
    %s14 = sadd.s32 1, %s10
  $region7: #{_lambda_.7} parent=0 // loop_footer_branch
    %9 = sbr.rel target = $region3
  $region8: #{_lambda_.7} parent=0 // loop_exit
    _

// kernel: _lambda_.6
$region0: #{_lambda_.6}
  #allocation0 [shape = 'u32[]', space=smem, size = 0x4, offset = 0x4, fixed_abs, tag = 'smem constant byte address 0x4 - core index']
  #allocation1 [shape = 'u32[144,128]{1,0:T(1,128)}', space=vmem, size = 0x12000, scoped, tag = 'internal scratch']
  %s0 = inlined_call_operand.vmem [shape: f32[512,128], index: 0, kind: input, shape index: {}]
  %s1 = inlined_call_operand.vmem [shape: f32[1,128], index: 1, kind: input, shape index: {}]
  %s2 = inlined_call_operand.vmem [shape: f32[1,128], index: 2, kind: input, shape index: {}]
  %s3 = inlined_call_operand.vmem [shape: bf16[128,128], index: 3, kind: input, shape index: {}]
  %s4 = inlined_call_operand.vmem [shape: f32[512,128], index: 4, kind: output, shape index: {0}]
  %s5 = inlined_call_operand.vmem [shape: f32[2,2,128], index: 5, kind: output, shape index: {1}]
  %6 = xla_tuple %s4, %s5
  %s7 = sld [smem:[#allocation0]]
  $region57: #{_lambda_.6} parent=0
    _
  %s9 = ssub.s32 1, %s7
  %s10 = scalar_select 0, %s9, %s7
  loop: start=0, step=1, limit=4
  $region2: #{_lambda_.6} parent=0 // loop_pre_header
    _
  $region3: #{_lambda_.6} parent=0 // loop_header
    %s12 = sphi 0, %s16
    %p13 = scmp.ge.s32.totalorder %s12, 4
    %s22 = sphi 0, %s24
    %s25 = sphi 0, %s22
    %s26 = sphi 0, %s25
    %s42 = sphi 0, %s26
    %s46 = sphi 0, %s46
    %s48 = sphi 0, %s46
    %s49 = sphi 0, %s48
    %s63 = sphi 0, %s49
    %s67 = sphi 0, %s67
    %s69 = sphi 0, %s67
    %s70 = sphi 0, %s69
    %s84 = sphi 0, %s70
    %s88 = sphi 0, %s88
    %s90 = sphi 0, %s88
    %s91 = sphi 0, %s90
    %s105 = sphi 0, %s91
    %s111 = sphi 0, %s113
    %s114 = sphi 0, %s111
    %s115 = sphi 0, %s114
    %s131 = sphi 0, %s115
    %s137 = sphi 0, %s139
    %s140 = sphi 0, %s137
    %s141 = sphi 0, %s140
    %s157 = sphi 0, %s141
  $region4: #{_lambda_.6} parent=0 // loop_header_branch
    %15 = sbr.rel (%p13) target = $region8
  $region5: #{_lambda_.6} parent=0 // loop_body
    %s17 = ssub.s32 %s12, 1
    %s18 = ssub.s32 %s12, 2
    %s19 = sadd.s32 %s12, 1
    %s20 = ssub.s32 %s12, %s19
    %p21 = scmp.eq.s32.totalorder %s20, 0
    %s23 = sadd.s32 %s22, 1
    %s24 = scalar_select %p21, %s22, %s23
    %p27 = pneg %p21
    %p28 = scmp.eq.s32.totalorder %s12, 1
    %p29 = por %p27, %p28
    %p30 = scmp.ne.s32.totalorder %s22, %s25
    %p31 = scmp.eq.s32.totalorder %s12, 0
    %p32 = por %p30, %p31
    %p33 = scmp.ne.s32.totalorder %s22, %s25
    %p34 = scmp.eq.s32.totalorder %s17, 1
    %p35 = por %p33, %p34
    %p36 = scmp.ne.s32.totalorder %s25, %s26
    %p37 = scmp.eq.s32.totalorder %s17, 0
    %p38 = por %p36, %p37
    %p39 = scmp.ne.s32.totalorder %s25, %s26
    %p40 = scmp.eq.s32.totalorder %s18, 1
    %p41 = por %p39, %p40
    %p43 = scmp.ne.s32.totalorder %s26, %s42
    %p44 = scmp.eq.s32.totalorder %s18, 0
    %p45 = por %p43, %p44
    %s47 = sadd.s32 %s46, 1
    %p50 = scmp.eq.s32.totalorder %s12, 1
    %p51 = scmp.ne.s32.totalorder %s46, %s48
    %p52 = scmp.eq.s32.totalorder %s12, 0
    %p53 = por %p51, %p52
    %p54 = scmp.ne.s32.totalorder %s46, %s48
    %p55 = scmp.eq.s32.totalorder %s17, 1
    %p56 = por %p54, %p55
    %p57 = scmp.ne.s32.totalorder %s48, %s49
    %p58 = scmp.eq.s32.totalorder %s17, 0
    %p59 = por %p57, %p58
    %p60 = scmp.ne.s32.totalorder %s48, %s49
    %p61 = scmp.eq.s32.totalorder %s18, 1
    %p62 = por %p60, %p61
    %p64 = scmp.ne.s32.totalorder %s49, %s63
    %p65 = scmp.eq.s32.totalorder %s18, 0
    %p66 = por %p64, %p65
    %s68 = sadd.s32 %s67, 1
    %p71 = scmp.eq.s32.totalorder %s12, 1
    %p72 = scmp.ne.s32.totalorder %s67, %s69
    %p73 = scmp.eq.s32.totalorder %s12, 0
    %p74 = por %p72, %p73
    %p75 = scmp.ne.s32.totalorder %s67, %s69
    %p76 = scmp.eq.s32.totalorder %s17, 1
    %p77 = por %p75, %p76
    %p78 = scmp.ne.s32.totalorder %s69, %s70
    %p79 = scmp.eq.s32.totalorder %s17, 0
    %p80 = por %p78, %p79
    %p81 = scmp.ne.s32.totalorder %s69, %s70
    %p82 = scmp.eq.s32.totalorder %s18, 1
    %p83 = por %p81, %p82
    %p85 = scmp.ne.s32.totalorder %s70, %s84
    %p86 = scmp.eq.s32.totalorder %s18, 0
    %p87 = por %p85, %p86
    %s89 = sadd.s32 %s88, 1
    %p92 = scmp.eq.s32.totalorder %s12, 1
    %p93 = scmp.ne.s32.totalorder %s88, %s90
    %p94 = scmp.eq.s32.totalorder %s12, 0
    %p95 = por %p93, %p94
    %p96 = scmp.ne.s32.totalorder %s88, %s90
    %p97 = scmp.eq.s32.totalorder %s17, 1
    %p98 = por %p96, %p97
    %p99 = scmp.ne.s32.totalorder %s90, %s91
    %p100 = scmp.eq.s32.totalorder %s17, 0
    %p101 = por %p99, %p100
    %p102 = scmp.ne.s32.totalorder %s90, %s91
    %p103 = scmp.eq.s32.totalorder %s18, 1
    %p104 = por %p102, %p103
    %p106 = scmp.ne.s32.totalorder %s91, %s105
    %p107 = scmp.eq.s32.totalorder %s18, 0
    %p108 = por %p106, %p107
    %s109 = ssub.s32 %s12, %s19
    %p110 = scmp.eq.s32.totalorder %s109, 0
    %s112 = sadd.s32 %s111, 1
    %s113 = scalar_select %p110, %s111, %s112
    %p116 = pneg %p110
    %p117 = scmp.eq.s32.totalorder %s12, 1
    %p118 = por %p116, %p117
    %p119 = scmp.ne.s32.totalorder %s111, %s114
    %p120 = scmp.eq.s32.totalorder %s12, 0
    %p121 = por %p119, %p120
    %p122 = scmp.ne.s32.totalorder %s111, %s114
    %p123 = scmp.eq.s32.totalorder %s17, 1
    %p124 = por %p122, %p123
    %p125 = scmp.ne.s32.totalorder %s114, %s115
    %p126 = scmp.eq.s32.totalorder %s17, 0
    %p127 = por %p125, %p126
    %p128 = scmp.ne.s32.totalorder %s114, %s115
    %p129 = scmp.eq.s32.totalorder %s18, 1
    %p130 = por %p128, %p129
    %p132 = scmp.ne.s32.totalorder %s115, %s131
    %p133 = scmp.eq.s32.totalorder %s18, 0
    %p134 = por %p132, %p133
    %s135 = ssub.s32 %s12, %s19
    %p136 = scmp.eq.s32.totalorder %s135, 0
    %s138 = sadd.s32 %s137, 1
    %s139 = scalar_select %p136, %s137, %s138
    %p142 = pneg %p136
    %p143 = scmp.eq.s32.totalorder %s12, 1
    %p144 = por %p142, %p143
    %p145 = scmp.ne.s32.totalorder %s137, %s140
    %p146 = scmp.eq.s32.totalorder %s12, 0
    %p147 = por %p145, %p146
    %p148 = scmp.ne.s32.totalorder %s137, %s140
    %p149 = scmp.eq.s32.totalorder %s17, 1
    %p150 = por %p148, %p149
    %p151 = scmp.ne.s32.totalorder %s140, %s141
    %p152 = scmp.eq.s32.totalorder %s17, 0
    %p153 = por %p151, %p152
    %p154 = scmp.ne.s32.totalorder %s140, %s141
    %p155 = scmp.eq.s32.totalorder %s18, 1
    %p156 = por %p154, %p155
    %p158 = scmp.ne.s32.totalorder %s141, %s157
    %p159 = scmp.eq.s32.totalorder %s18, 0
    %p160 = por %p158, %p159
    %p161 = scmp.le.s32.totalorder 1, %s12
    %p162 = scmp.lt.s32.totalorder %s12, 3
    %p163 = pnand %p161, %p162
    %p164 = pneg %p163
    // Predicated region
    $region9: #{_lambda_.6} parent=5 // pred_check
      _
    $region10: #{_lambda_.6} parent=5 // pred_check_branch
      %166 = sbr.rel (%p163) target = $region12
    $region11: #{_lambda_.6} parent=5 // pred_region
      %s167 = ssub.s32 %s12, 1
      // Predicated region
      $region13: #{_lambda_.6} parent=11 // pred_check
        %p168 = pneg %p59
      $region14: #{_lambda_.6} parent=11 // pred_check_branch
        %170 = sbr.rel (%p168) target = $region16
      $region15: #{_lambda_.6} parent=11 // pred_region
        _
      $region16: #{_lambda_.6} parent=11 // pred_fallthru
        _
      // Predicated region
      $region17: #{_lambda_.6} parent=11 // pred_check
        %p171 = pneg %p80
      $region18: #{_lambda_.6} parent=11 // pred_check_branch
        %173 = sbr.rel (%p171) target = $region20
      $region19: #{_lambda_.6} parent=11 // pred_region
        _
      $region20: #{_lambda_.6} parent=11 // pred_fallthru
        _
      // Predicated region
      $region21: #{_lambda_.6} parent=11 // pred_check
        %p174 = pneg %p101
      $region22: #{_lambda_.6} parent=11 // pred_check_branch
        %176 = sbr.rel (%p174) target = $region24
      $region23: #{_lambda_.6} parent=11 // pred_region
        _
      $region24: #{_lambda_.6} parent=11 // pred_fallthru
        _
    $region12: #{_lambda_.6} parent=5 // pred_fallthru
      _
    %p177 = scmp.lt.s32.totalorder %s12, 2
    // Predicated region
    $region25: #{_lambda_.6} parent=5 // pred_check
      %p178 = pneg %p177
    $region26: #{_lambda_.6} parent=5 // pred_check_branch
      %180 = sbr.rel (%p178) target = $region28
    $region27: #{_lambda_.6} parent=5 // pred_region
      // Predicated region
      $region29: #{_lambda_.6} parent=27 // pred_check
        %p181 = pneg %p32
      $region30: #{_lambda_.6} parent=27 // pred_check_branch
        %183 = sbr.rel (%p181) target = $region32
      $region31: #{_lambda_.6} parent=27 // pred_region
        %s184 = smul.u32 32, %s12
        %p185 = scmp.lt.s32.totalorder %s184, 63
        %s186 = scalar_select %p185, %s184, 63
        %s187 = smul.addr %s186, 8
        %s188 = scalar_lea.vmem %s0, %s187
        %s189 = smul.u32 32, %s12
      $region32: #{_lambda_.6} parent=27 // pred_fallthru
        _
    $region28: #{_lambda_.6} parent=5 // pred_fallthru
      _
    %p190 = scmp.le.s32.totalorder 1, %s12
    %p191 = scmp.lt.s32.totalorder %s12, 3
    %p192 = pnand %p190, %p191
    %p193 = pneg %p192
    // Predicated region
    $region33: #{_lambda_.6} parent=5 // pred_check
      _
    $region34: #{_lambda_.6} parent=5 // pred_check_branch
      %195 = sbr.rel (%p192) target = $region36
    $region35: #{_lambda_.6} parent=5 // pred_region
      %s196 = ssub.s32 %s12, 1
      %s197 = smul.u32 32, %s17
      %p198 = scmp.lt.s32.totalorder %s197, 63
      %s199 = scalar_select %p198, %s197, 63
      %s200 = smul.addr %s199, 8
      %s201 = scalar_lea.vmem %s0, %s200
      %p202 = pneg %p38
      %p203 = pneg %p35
      %p204 = pneg %p59
      %p205 = pneg %p56
      %p206 = pneg %p80
      %p207 = pneg %p77
      %p208 = pneg %p101
      %p209 = pneg %p98
      %p210 = pneg %p127
      %p211 = pneg %p124
      %s212 = smul.u32 32, %s17
      %p213 = scmp.lt.s32.totalorder %s212, 63
      %s214 = scalar_select %p213, %s212, 63
      %s215 = smul.addr %s214, 8
      %s216 = scalar_lea.vmem %s4, %s215
      %p217 = pneg %p153
      %p218 = pneg %p150
      %p219 = scmp.lt.s32.totalorder %s17, 1
      %s220 = scalar_select %p219, %s17, 1
      %s221 = smul.addr %s220, 2
      %s222 = scalar_lea.vmem %s5, %s221
      %s223 = smul.u32 32, %s17
      %p224 = scmp.lt.s32.totalorder %s223, 63
      %s225 = scalar_select %p224, %s223, 63
      %s226 = smul.addr %s225, 8
      %s227 = scalar_lea.vmem %s0, %s226
      %s228 = smul.u32 32, %s17
      %s229 = smul.u32 32, %s17
      %p230 = scmp.lt.s32.totalorder %s229, 63
      %s231 = scalar_select %p230, %s229, 63
      %s232 = smul.addr %s231, 8
      %s233 = scalar_lea.vmem %s4, %s232
      %s234 = smul.u32 32, %s17
      %p235 = scmp.lt.s32.totalorder %s17, 1
      %s236 = scalar_select %p235, %s17, 1
      %s237 = smul.addr %s236, 2
      %s238 = scalar_lea.vmem %s5, %s237
      %v240 = vld [vmem:[%s227] sm:$0xff]
      %v241 = vld [vmem:[%s227 + $0x8] sm:$0xff]
      %v242 = vld [vmem:[%s227 + $0x10] sm:$0xff]
      %v243 = vld [vmem:[%s227 + $0x18] sm:$0xff]
      %v244 = vld [vmem:[%s227 + $0x20] sm:$0xff]
      %v245 = vld [vmem:[%s227 + $0x28] sm:$0xff]
      %v246 = vld [vmem:[%s227 + $0x30] sm:$0xff]
      %v247 = vld [vmem:[%s227 + $0x38] sm:$0xff]
      %v248 = vld [vmem:[%s227 + $0x40] sm:$0xff]
      %v249 = vld [vmem:[%s227 + $0x48] sm:$0xff]
      %v250 = vld [vmem:[%s227 + $0x50] sm:$0xff]
      %v251 = vld [vmem:[%s227 + $0x58] sm:$0xff]
      %v252 = vld [vmem:[%s227 + $0x60] sm:$0xff]
      %v253 = vld [vmem:[%s227 + $0x68] sm:$0xff]
      %v254 = vld [vmem:[%s227 + $0x70] sm:$0xff]
      %v255 = vld [vmem:[%s227 + $0x78] sm:$0xff]
      %v256 = vld [vmem:[%s227 + $0x80] sm:$0xff]
      %v257 = vld [vmem:[%s227 + $0x88] sm:$0xff]
      %v258 = vld [vmem:[%s227 + $0x90] sm:$0xff]
      %v259 = vld [vmem:[%s227 + $0x98] sm:$0xff]
      %v260 = vld [vmem:[%s227 + $0xa0] sm:$0xff]
      %v261 = vld [vmem:[%s227 + $0xa8] sm:$0xff]
      %v262 = vld [vmem:[%s227 + $0xb0] sm:$0xff]
      %v263 = vld [vmem:[%s227 + $0xb8] sm:$0xff]
      %v264 = vld [vmem:[%s227 + $0xc0] sm:$0xff]
      %v265 = vld [vmem:[%s227 + $0xc8] sm:$0xff]
      %v266 = vld [vmem:[%s227 + $0xd0] sm:$0xff]
      %v267 = vld [vmem:[%s227 + $0xd8] sm:$0xff]
      %v268 = vld [vmem:[%s227 + $0xe0] sm:$0xff]
      %v269 = vld [vmem:[%s227 + $0xe8] sm:$0xff]
      %v270 = vld [vmem:[%s227 + $0xf0] sm:$0xff]
      %v271 = vld [vmem:[%s227 + $0xf8] sm:$0xff]
      %v272 = vld [vmem:[%s1] sm:$0x1]
      %v274 = vlaneseq
      %v275 = vshrl.u32 %v274, 7
      %v276 = vsub.s32 0, %v275
      %v277 = vrot.slane %v272, %v276
      %v279 = vmul.f32 %v240, %v277
      %v280 = vmul.f32 %v241, %v277
      %v281 = vmul.f32 %v242, %v277
      %v282 = vmul.f32 %v243, %v277
      %v283 = vmul.f32 %v244, %v277
      %v284 = vmul.f32 %v245, %v277
      %v285 = vmul.f32 %v246, %v277
      %v286 = vmul.f32 %v247, %v277
      %v287 = vmul.f32 %v248, %v277
      %v288 = vmul.f32 %v249, %v277
      %v289 = vmul.f32 %v250, %v277
      %v290 = vmul.f32 %v251, %v277
      %v291 = vmul.f32 %v252, %v277
      %v292 = vmul.f32 %v253, %v277
      %v293 = vmul.f32 %v254, %v277
      %v294 = vmul.f32 %v255, %v277
      %v295 = vmul.f32 %v256, %v277
      %v296 = vmul.f32 %v257, %v277
      %v297 = vmul.f32 %v258, %v277
      %v298 = vmul.f32 %v259, %v277
      %v299 = vmul.f32 %v260, %v277
      %v300 = vmul.f32 %v261, %v277
      %v301 = vmul.f32 %v262, %v277
      %v302 = vmul.f32 %v263, %v277
      %v303 = vmul.f32 %v264, %v277
      %v304 = vmul.f32 %v265, %v277
      %v305 = vmul.f32 %v266, %v277
      %v306 = vmul.f32 %v267, %v277
      %v307 = vmul.f32 %v268, %v277
      %v308 = vmul.f32 %v269, %v277
      %v309 = vmul.f32 %v270, %v277
      %v310 = vmul.f32 %v271, %v277
      %v311 = vld [vmem:[%s2] sm:$0x1]
      %v313 = vlaneseq
      %v314 = vshrl.u32 %v313, 7
      %v315 = vsub.s32 0, %v314
      %v316 = vrot.slane %v311, %v315
      %v318 = vadd.f32 %v279, %v316
      %v319 = vadd.f32 %v280, %v316
      %v320 = vadd.f32 %v281, %v316
      %v321 = vadd.f32 %v282, %v316
      %v322 = vadd.f32 %v283, %v316
      %v323 = vadd.f32 %v284, %v316
      %v324 = vadd.f32 %v285, %v316
      %v325 = vadd.f32 %v286, %v316
      %v326 = vadd.f32 %v287, %v316
      %v327 = vadd.f32 %v288, %v316
      %v328 = vadd.f32 %v289, %v316
      %v329 = vadd.f32 %v290, %v316
      %v330 = vadd.f32 %v291, %v316
      %v331 = vadd.f32 %v292, %v316
      %v332 = vadd.f32 %v293, %v316
      %v333 = vadd.f32 %v294, %v316
      %v334 = vadd.f32 %v295, %v316
      %v335 = vadd.f32 %v296, %v316
      %v336 = vadd.f32 %v297, %v316
      %v337 = vadd.f32 %v298, %v316
      %v338 = vadd.f32 %v299, %v316
      %v339 = vadd.f32 %v300, %v316
      %v340 = vadd.f32 %v301, %v316
      %v341 = vadd.f32 %v302, %v316
      %v342 = vadd.f32 %v303, %v316
      %v343 = vadd.f32 %v304, %v316
      %v344 = vadd.f32 %v305, %v316
      %v345 = vadd.f32 %v306, %v316
      %v346 = vadd.f32 %v307, %v316
      %v347 = vadd.f32 %v308, %v316
      %v348 = vadd.f32 %v309, %v316
      %v349 = vadd.f32 %v310, %v316
      %v350 = vmax.f32 %v318, 0.0
      %v351 = vmax.f32 %v319, 0.0
      %v352 = vmax.f32 %v320, 0.0
      %v353 = vmax.f32 %v321, 0.0
      %v354 = vmax.f32 %v322, 0.0
      %v355 = vmax.f32 %v323, 0.0
      %v356 = vmax.f32 %v324, 0.0
      %v357 = vmax.f32 %v325, 0.0
      %v358 = vmax.f32 %v326, 0.0
      %v359 = vmax.f32 %v327, 0.0
      %v360 = vmax.f32 %v328, 0.0
      %v361 = vmax.f32 %v329, 0.0
      %v362 = vmax.f32 %v330, 0.0
      %v363 = vmax.f32 %v331, 0.0
      %v364 = vmax.f32 %v332, 0.0
      %v365 = vmax.f32 %v333, 0.0
      %v366 = vmax.f32 %v334, 0.0
      %v367 = vmax.f32 %v335, 0.0
      %v368 = vmax.f32 %v336, 0.0
      %v369 = vmax.f32 %v337, 0.0
      %v370 = vmax.f32 %v338, 0.0
      %v371 = vmax.f32 %v339, 0.0
      %v372 = vmax.f32 %v340, 0.0
      %v373 = vmax.f32 %v341, 0.0
      %v374 = vmax.f32 %v342, 0.0
      %v375 = vmax.f32 %v343, 0.0
      %v376 = vmax.f32 %v344, 0.0
      %v377 = vmax.f32 %v345, 0.0
      %v378 = vmax.f32 %v346, 0.0
      %v379 = vmax.f32 %v347, 0.0
      %v380 = vmax.f32 %v348, 0.0
      %v381 = vmax.f32 %v349, 0.0
      %v382 = vpack.c.bf16 %v351, %v350
      %v383 = vpack.c.bf16 %v353, %v352
      %v384 = vpack.c.bf16 %v355, %v354
      %v385 = vpack.c.bf16 %v357, %v356
      %v386 = vpack.c.bf16 %v359, %v358
      %v387 = vpack.c.bf16 %v361, %v360
      %v388 = vpack.c.bf16 %v363, %v362
      %v389 = vpack.c.bf16 %v365, %v364
      %v390 = vpack.c.bf16 %v367, %v366
      %v391 = vpack.c.bf16 %v369, %v368
      %v392 = vpack.c.bf16 %v371, %v370
      %v393 = vpack.c.bf16 %v373, %v372
      %v394 = vpack.c.bf16 %v375, %v374
      %v395 = vpack.c.bf16 %v377, %v376
      %v396 = vpack.c.bf16 %v379, %v378
      %v397 = vpack.c.bf16 %v381, %v380
      %v398 = vld [vmem:[%s3] sm:$0xf]
      %v399 = vld [vmem:[%s3 + $0x4] sm:$0xf]
      %v400 = vld [vmem:[%s3 + $0x8] sm:$0xf]
      %v401 = vld [vmem:[%s3 + $0xc] sm:$0xf]
      %v402 = vld [vmem:[%s3 + $0x10] sm:$0xf]
      %v403 = vld [vmem:[%s3 + $0x14] sm:$0xf]
      %v404 = vld [vmem:[%s3 + $0x18] sm:$0xf]
      %v405 = vld [vmem:[%s3 + $0x1c] sm:$0xf]
      %v406 = vld [vmem:[%s3 + $0x20] sm:$0xf]
      %v407 = vld [vmem:[%s3 + $0x24] sm:$0xf]
      %v408 = vld [vmem:[%s3 + $0x28] sm:$0xf]
      %v409 = vld [vmem:[%s3 + $0x2c] sm:$0xf]
      %v410 = vld [vmem:[%s3 + $0x30] sm:$0xf]
      %v411 = vld [vmem:[%s3 + $0x34] sm:$0xf]
      %v412 = vld [vmem:[%s3 + $0x38] sm:$0xf]
      %v413 = vld [vmem:[%s3 + $0x3c] sm:$0xf]
      %v430 = vunpack.c.l.b16 %v398
      %v431 = vunpack.c.l.b16 %v399
      %v432 = vunpack.c.l.b16 %v400
      %v433 = vunpack.c.l.b16 %v401
      %v434 = vunpack.c.l.b16 %v402
      %v435 = vunpack.c.l.b16 %v403
      %v436 = vunpack.c.l.b16 %v404
      %v437 = vunpack.c.l.b16 %v405
      %v438 = vunpack.c.l.b16 %v406
      %v439 = vunpack.c.l.b16 %v407
      %v440 = vunpack.c.l.b16 %v408
      %v441 = vunpack.c.l.b16 %v409
      %v442 = vunpack.c.l.b16 %v410
      %v443 = vunpack.c.l.b16 %v411
      %v444 = vunpack.c.l.b16 %v412
      %v445 = vunpack.c.l.b16 %v413
      %v446 = vpack.c.b16 %v431, %v430
      %v447 = vpack.c.b16 %v433, %v432
      %v448 = vpack.c.b16 %v435, %v434
      %v449 = vpack.c.b16 %v437, %v436
      %v450 = vpack.c.b16 %v439, %v438
      %v451 = vpack.c.b16 %v441, %v440
      %v452 = vpack.c.b16 %v443, %v442
      %v453 = vpack.c.b16 %v445, %v444
      %462 = vmatprep.subr.bf16.mxu0 0
      %463 = vmatpush1.bf16.msra.mxu0 %v446
      %464 = vmatprep.subr.bf16.mxu0 0
      %465 = vmatpush1.bf16.msra.mxu0 %v447
      %466 = vmatprep.subr.bf16.mxu0 0
      %467 = vmatpush1.bf16.msra.mxu0 %v448
      %468 = vmatprep.subr.bf16.mxu0 0
      %469 = vmatpush1.bf16.msra.mxu0 %v449
      %470 = vmatprep.subr.bf16.mxu0 0
      %471 = vmatpush1.bf16.msra.mxu0 %v450
      %472 = vmatprep.subr.bf16.mxu0 0
      %473 = vmatpush1.bf16.msra.mxu0 %v451
      %474 = vmatprep.subr.bf16.mxu0 0
      %475 = vmatpush1.bf16.msra.mxu0 %v452
      %476 = vmatprep.subr.bf16.mxu0 0
      %477 = vmatpush1.bf16.msra.mxu0 %v453
      %478 = vmatprep.subr.bf16.mxu0 0
      %479 = vmatpush1.bf16.msra.mxu0 0
      %480 = vmatprep.subr.bf16.mxu0 0
      %481 = vmatpush1.bf16.msra.mxu0 0
      %482 = vmatprep.subr.bf16.mxu0 0
      %483 = vmatpush1.bf16.msra.mxu0 0
      %484 = vmatprep.subr.bf16.mxu0 0
      %485 = vmatpush1.bf16.msra.mxu0 0
      %486 = vmatprep.subr.bf16.mxu0 0
      %487 = vmatpush1.bf16.msra.mxu0 0
      %488 = vmatprep.subr.bf16.mxu0 0
      %489 = vmatpush1.bf16.msra.mxu0 0
      %490 = vmatprep.subr.bf16.mxu0 0
      %491 = vmatpush1.bf16.msra.mxu0 0
      %492 = vmatprep.subr.bf16.mxu0 0
      %493 = vmatpush1.bf16.msra.mxu0 0
      %494 = vmatprep.mubr.bf16.mxu0 0
      %495 = vmatmul.mubr.bf16.gmra.mrb[0].mxu0 %v382
      %v496 = vpop.f32.mrb[0].mxu0
      %v497 = vadd.f32 0.0, %v496
      %v498 = vpop.f32.mrb[0].mxu0
      %v499 = vpop.f32.mrb[0].mxu0
      %v500 = vadd.f32 0.0, %v499
      %v501 = vpop.f32.mrb[0].mxu0
      %502 = vmatprep.mubr.bf16.mxu0 0
      %503 = vmatmul.mubr.bf16.gmra.mrb[0].mxu0 %v383
      %v504 = vpop.f32.mrb[0].mxu0
      %v505 = vadd.f32 0.0, %v504
      %v506 = vpop.f32.mrb[0].mxu0
      %v507 = vpop.f32.mrb[0].mxu0
      %v508 = vadd.f32 0.0, %v507
      %v509 = vpop.f32.mrb[0].mxu0
      %510 = vmatprep.mubr.bf16.mxu0 0
      %511 = vmatmul.mubr.bf16.gmra.mrb[0].mxu0 %v384
      %v512 = vpop.f32.mrb[0].mxu0
      %v513 = vadd.f32 0.0, %v512
      %v514 = vpop.f32.mrb[0].mxu0
      %v515 = vpop.f32.mrb[0].mxu0
      %v516 = vadd.f32 0.0, %v515
      %v517 = vpop.f32.mrb[0].mxu0
      %518 = vmatprep.mubr.bf16.mxu0 0
      %519 = vmatmul.mubr.bf16.gmra.mrb[0].mxu0 %v385
      %v520 = vpop.f32.mrb[0].mxu0
      %v521 = vadd.f32 0.0, %v520
      %v522 = vpop.f32.mrb[0].mxu0
      %v523 = vpop.f32.mrb[0].mxu0
      %v524 = vadd.f32 0.0, %v523
      %v525 = vpop.f32.mrb[0].mxu0
      %526 = vmatprep.mubr.bf16.mxu0 0
      %527 = vmatmul.mubr.bf16.gmra.mrb[0].mxu0 %v386
      %v528 = vpop.f32.mrb[0].mxu0
      %v529 = vadd.f32 0.0, %v528
      %v530 = vpop.f32.mrb[0].mxu0
      %v531 = vpop.f32.mrb[0].mxu0
      %v532 = vadd.f32 0.0, %v531
      %v533 = vpop.f32.mrb[0].mxu0
      %534 = vmatprep.mubr.bf16.mxu0 0
      %535 = vmatmul.mubr.bf16.gmra.mrb[0].mxu0 %v387
      %v536 = vpop.f32.mrb[0].mxu0
      %v537 = vadd.f32 0.0, %v536
      %v538 = vpop.f32.mrb[0].mxu0
      %v539 = vpop.f32.mrb[0].mxu0
      %v540 = vadd.f32 0.0, %v539
      %v541 = vpop.f32.mrb[0].mxu0
      %542 = vmatprep.mubr.bf16.mxu0 0
      %543 = vmatmul.mubr.bf16.gmra.mrb[0].mxu0 %v388
      %v544 = vpop.f32.mrb[0].mxu0
      %v545 = vadd.f32 0.0, %v544
      %v546 = vpop.f32.mrb[0].mxu0
      %v547 = vpop.f32.mrb[0].mxu0
      %v548 = vadd.f32 0.0, %v547
      %v549 = vpop.f32.mrb[0].mxu0
      %550 = vmatprep.mubr.bf16.mxu0 0
      %551 = vmatmul.mubr.bf16.gmra.mrb[0].mxu0 %v389
      %v552 = vpop.f32.mrb[0].mxu0
      %v553 = vadd.f32 0.0, %v552
      %v554 = vpop.f32.mrb[0].mxu0
      %v555 = vpop.f32.mrb[0].mxu0
      %v556 = vadd.f32 0.0, %v555
      %v557 = vpop.f32.mrb[0].mxu0
      %558 = vmatprep.mubr.bf16.mxu0 0
      %559 = vmatmul.mubr.bf16.gmra.mrb[0].mxu0 %v390
      %v560 = vpop.f32.mrb[0].mxu0
      %v561 = vadd.f32 0.0, %v560
      %v562 = vpop.f32.mrb[0].mxu0
      %v563 = vpop.f32.mrb[0].mxu0
      %v564 = vadd.f32 0.0, %v563
      %v565 = vpop.f32.mrb[0].mxu0
      %566 = vmatprep.mubr.bf16.mxu0 0
      %567 = vmatmul.mubr.bf16.gmra.mrb[0].mxu0 %v391
      %v568 = vpop.f32.mrb[0].mxu0
      %v569 = vadd.f32 0.0, %v568
      %v570 = vpop.f32.mrb[0].mxu0
      %v571 = vpop.f32.mrb[0].mxu0
      %v572 = vadd.f32 0.0, %v571
      %v573 = vpop.f32.mrb[0].mxu0
      %574 = vmatprep.mubr.bf16.mxu0 0
      %575 = vmatmul.mubr.bf16.gmra.mrb[0].mxu0 %v392
      %v576 = vpop.f32.mrb[0].mxu0
      %v577 = vadd.f32 0.0, %v576
      %v578 = vpop.f32.mrb[0].mxu0
      %v579 = vpop.f32.mrb[0].mxu0
      %v580 = vadd.f32 0.0, %v579
      %v581 = vpop.f32.mrb[0].mxu0
      %582 = vmatprep.mubr.bf16.mxu0 0
      %583 = vmatmul.mubr.bf16.gmra.mrb[0].mxu0 %v393
      %v584 = vpop.f32.mrb[0].mxu0
      %v585 = vadd.f32 0.0, %v584
      %v586 = vpop.f32.mrb[0].mxu0
      %v587 = vpop.f32.mrb[0].mxu0
      %v588 = vadd.f32 0.0, %v587
      %v589 = vpop.f32.mrb[0].mxu0
      %590 = vmatprep.mubr.bf16.mxu0 0
      %591 = vmatmul.mubr.bf16.gmra.mrb[0].mxu0 %v394
      %v592 = vpop.f32.mrb[0].mxu0
      %v593 = vadd.f32 0.0, %v592
      %v594 = vpop.f32.mrb[0].mxu0
      %v595 = vpop.f32.mrb[0].mxu0
      %v596 = vadd.f32 0.0, %v595
      %v597 = vpop.f32.mrb[0].mxu0
      %598 = vmatprep.mubr.bf16.mxu0 0
      %599 = vmatmul.mubr.bf16.gmra.mrb[0].mxu0 %v395
      %v600 = vpop.f32.mrb[0].mxu0
      %v601 = vadd.f32 0.0, %v600
      %v602 = vpop.f32.mrb[0].mxu0
      %v603 = vpop.f32.mrb[0].mxu0
      %v604 = vadd.f32 0.0, %v603
      %v605 = vpop.f32.mrb[0].mxu0
      %606 = vmatprep.mubr.bf16.mxu0 0
      %607 = vmatmul.mubr.bf16.gmra.mrb[0].mxu0 %v396
      %v608 = vpop.f32.mrb[0].mxu0
      %v609 = vadd.f32 0.0, %v608
      %v610 = vpop.f32.mrb[0].mxu0
      %v611 = vpop.f32.mrb[0].mxu0
      %v612 = vadd.f32 0.0, %v611
      %v613 = vpop.f32.mrb[0].mxu0
      %614 = vmatprep.mubr.bf16.mxu0 0
      %615 = vmatmul.mubr.bf16.gmra.mrb[0].mxu0 %v397
      %v616 = vpop.f32.mrb[0].mxu0
      %v617 = vadd.f32 0.0, %v616
      %v618 = vpop.f32.mrb[0].mxu0
      %v619 = vpop.f32.mrb[0].mxu0
      %v620 = vadd.f32 0.0, %v619
      %v621 = vpop.f32.mrb[0].mxu0
      %622 = vdwg.mxu0
      %623 = vst [vmem:[%s233] sm:$0xff] %v497
      %624 = vst [vmem:[%s233 + $0x8] sm:$0xff] %v500
      %625 = vst [vmem:[%s233 + $0x10] sm:$0xff] %v505
      %626 = vst [vmem:[%s233 + $0x18] sm:$0xff] %v508
      %627 = vst [vmem:[%s233 + $0x20] sm:$0xff] %v513
      %628 = vst [vmem:[%s233 + $0x28] sm:$0xff] %v516
      %629 = vst [vmem:[%s233 + $0x30] sm:$0xff] %v521
      %630 = vst [vmem:[%s233 + $0x38] sm:$0xff] %v524
      %631 = vst [vmem:[%s233 + $0x40] sm:$0xff] %v529
      %632 = vst [vmem:[%s233 + $0x48] sm:$0xff] %v532
      %633 = vst [vmem:[%s233 + $0x50] sm:$0xff] %v537
      %634 = vst [vmem:[%s233 + $0x58] sm:$0xff] %v540
      %635 = vst [vmem:[%s233 + $0x60] sm:$0xff] %v545
      %636 = vst [vmem:[%s233 + $0x68] sm:$0xff] %v548
      %637 = vst [vmem:[%s233 + $0x70] sm:$0xff] %v553
      %638 = vst [vmem:[%s233 + $0x78] sm:$0xff] %v556
      %639 = vst [vmem:[%s233 + $0x80] sm:$0xff] %v561
      %640 = vst [vmem:[%s233 + $0x88] sm:$0xff] %v564
      %641 = vst [vmem:[%s233 + $0x90] sm:$0xff] %v569
      %642 = vst [vmem:[%s233 + $0x98] sm:$0xff] %v572
      %643 = vst [vmem:[%s233 + $0xa0] sm:$0xff] %v577
      %644 = vst [vmem:[%s233 + $0xa8] sm:$0xff] %v580
      %645 = vst [vmem:[%s233 + $0xb0] sm:$0xff] %v585
      %646 = vst [vmem:[%s233 + $0xb8] sm:$0xff] %v588
      %647 = vst [vmem:[%s233 + $0xc0] sm:$0xff] %v593
      %648 = vst [vmem:[%s233 + $0xc8] sm:$0xff] %v596
      %649 = vst [vmem:[%s233 + $0xd0] sm:$0xff] %v601
      %650 = vst [vmem:[%s233 + $0xd8] sm:$0xff] %v604
      %651 = vst [vmem:[%s233 + $0xe0] sm:$0xff] %v609
      %652 = vst [vmem:[%s233 + $0xe8] sm:$0xff] %v612
      %653 = vst [vmem:[%s233 + $0xf0] sm:$0xff] %v617
      %654 = vst [vmem:[%s233 + $0xf8] sm:$0xff] %v620
      %v655 = vadd.f32 %v497, %v500
      %v656 = vadd.f32 %v655, %v505
      %v657 = vadd.f32 %v656, %v508
      %v658 = vadd.f32 %v657, %v513
      %v659 = vadd.f32 %v658, %v516
      %v660 = vadd.f32 %v659, %v521
      %v661 = vadd.f32 %v660, %v524
      %v662 = vadd.f32 %v661, %v529
      %v663 = vadd.f32 %v662, %v532
      %v664 = vadd.f32 %v663, %v537
      %v665 = vadd.f32 %v664, %v540
      %v666 = vadd.f32 %v665, %v545
      %v667 = vadd.f32 %v666, %v548
      %v668 = vadd.f32 %v667, %v553
      %v669 = vadd.f32 %v668, %v556
      %v670 = vadd.f32 %v669, %v561
      %v671 = vadd.f32 %v670, %v564
      %v672 = vadd.f32 %v671, %v569
      %v673 = vadd.f32 %v672, %v572
      %v674 = vadd.f32 %v673, %v577
      %v675 = vadd.f32 %v674, %v580
      %v676 = vadd.f32 %v675, %v585
      %v677 = vadd.f32 %v676, %v588
      %v678 = vadd.f32 %v677, %v593
      %v679 = vadd.f32 %v678, %v596
      %v680 = vadd.f32 %v679, %v601
      %v681 = vadd.f32 %v680, %v604
      %v682 = vadd.f32 %v681, %v609
      %v683 = vadd.f32 %v682, %v612
      %v684 = vadd.f32 %v683, %v617
      %v685 = vadd.f32 %v684, %v620
      %v686 = vrot.slane %v685, 4
      %v687 = vadd.f32 %v685, %v686
      %v688 = vrot.slane %v687, 2
      %v689 = vadd.f32 %v687, %v688
      %v690 = vrot.slane %v689, 1
      %v691 = vadd.f32 %v689, %v690
      %692 = vst [vmem:[%s238] sm:$0x1] %v691
      %v693 = vmul.f32 %v497, %v497
      %v694 = vmul.f32 %v500, %v500
      %v695 = vmul.f32 %v505, %v505
      %v696 = vmul.f32 %v508, %v508
      %v697 = vmul.f32 %v513, %v513
      %v698 = vmul.f32 %v516, %v516
      %v699 = vmul.f32 %v521, %v521
      %v700 = vmul.f32 %v524, %v524
      %v701 = vmul.f32 %v529, %v529
      %v702 = vmul.f32 %v532, %v532
      %v703 = vmul.f32 %v537, %v537
      %v704 = vmul.f32 %v540, %v540
      %v705 = vmul.f32 %v545, %v545
      %v706 = vmul.f32 %v548, %v548
      %v707 = vmul.f32 %v553, %v553
      %v708 = vmul.f32 %v556, %v556
      %v709 = vmul.f32 %v561, %v561
      %v710 = vmul.f32 %v564, %v564
      %v711 = vmul.f32 %v569, %v569
      %v712 = vmul.f32 %v572, %v572
      %v713 = vmul.f32 %v577, %v577
      %v714 = vmul.f32 %v580, %v580
      %v715 = vmul.f32 %v585, %v585
      %v716 = vmul.f32 %v588, %v588
      %v717 = vmul.f32 %v593, %v593
      %v718 = vmul.f32 %v596, %v596
      %v719 = vmul.f32 %v601, %v601
      %v720 = vmul.f32 %v604, %v604
      %v721 = vmul.f32 %v609, %v609
      %v722 = vmul.f32 %v612, %v612
      %v723 = vmul.f32 %v617, %v617
      %v724 = vmul.f32 %v620, %v620
      %v725 = vadd.f32 %v693, %v694
      %v726 = vadd.f32 %v725, %v695
      %v727 = vadd.f32 %v726, %v696
      %v728 = vadd.f32 %v727, %v697
      %v729 = vadd.f32 %v728, %v698
      %v730 = vadd.f32 %v729, %v699
      %v731 = vadd.f32 %v730, %v700
      %v732 = vadd.f32 %v731, %v701
      %v733 = vadd.f32 %v732, %v702
      %v734 = vadd.f32 %v733, %v703
      %v735 = vadd.f32 %v734, %v704
      %v736 = vadd.f32 %v735, %v705
      %v737 = vadd.f32 %v736, %v706
      %v738 = vadd.f32 %v737, %v707
      %v739 = vadd.f32 %v738, %v708
      %v740 = vadd.f32 %v739, %v709
      %v741 = vadd.f32 %v740, %v710
      %v742 = vadd.f32 %v741, %v711
      %v743 = vadd.f32 %v742, %v712
      %v744 = vadd.f32 %v743, %v713
      %v745 = vadd.f32 %v744, %v714
      %v746 = vadd.f32 %v745, %v715
      %v747 = vadd.f32 %v746, %v716
      %v748 = vadd.f32 %v747, %v717
      %v749 = vadd.f32 %v748, %v718
      %v750 = vadd.f32 %v749, %v719
      %v751 = vadd.f32 %v750, %v720
      %v752 = vadd.f32 %v751, %v721
      %v753 = vadd.f32 %v752, %v722
      %v754 = vadd.f32 %v753, %v723
      %v755 = vadd.f32 %v754, %v724
      %v756 = vrot.slane %v755, 4
      %v757 = vadd.f32 %v755, %v756
      %v758 = vrot.slane %v757, 2
      %v759 = vadd.f32 %v757, %v758
      %v760 = vrot.slane %v759, 1
      %v761 = vadd.f32 %v759, %v760
      %762 = vst [vmem:[%s238 + $0x1] sm:$0x1] %v761
      %s763 = smul.u32 32, %s17
      %p764 = scmp.lt.s32.totalorder %s763, 63
      %s765 = scalar_select %p764, %s763, 63
      %s766 = smul.addr %s765, 8
      %s767 = scalar_lea.vmem %s4, %s766
      %p768 = scmp.lt.s32.totalorder %s17, 1
      %s769 = scalar_select %p768, %s17, 1
      %s770 = smul.addr %s769, 2
      %s771 = scalar_lea.vmem %s5, %s770
      // Predicated region
      $region37: #{_lambda_.6} parent=35 // pred_check
        %p772 = pneg %p124
      $region38: #{_lambda_.6} parent=35 // pred_check_branch
        %774 = sbr.rel (%p772) target = $region40
      $region39: #{_lambda_.6} parent=35 // pred_region
        %s775 = smul.u32 32, %s17
      $region40: #{_lambda_.6} parent=35 // pred_fallthru
        _
      // Predicated region
      $region41: #{_lambda_.6} parent=35 // pred_check
        %p776 = pneg %p150
      $region42: #{_lambda_.6} parent=35 // pred_check_branch
        %778 = sbr.rel (%p776) target = $region44
      $region43: #{_lambda_.6} parent=35 // pred_region
        _
      $region44: #{_lambda_.6} parent=35 // pred_fallthru
        _
    $region36: #{_lambda_.6} parent=5 // pred_fallthru
      _
    %p779 = scmp.le.s32.totalorder 2, %s12
    // Predicated region
    $region45: #{_lambda_.6} parent=5 // pred_check
      %p780 = pneg %p779
    $region46: #{_lambda_.6} parent=5 // pred_check_branch
      %782 = sbr.rel (%p780) target = $region48
    $region47: #{_lambda_.6} parent=5 // pred_region
      %s783 = ssub.s32 %s12, 2
      // Predicated region
      $region49: #{_lambda_.6} parent=47 // pred_check
        %p784 = pneg %p130
      $region50: #{_lambda_.6} parent=47 // pred_check_branch
        %786 = sbr.rel (%p784) target = $region52
      $region51: #{_lambda_.6} parent=47 // pred_region
        %s787 = smul.u32 32, %s18
        %p788 = scmp.lt.s32.totalorder %s787, 63
        %s789 = scalar_select %p788, %s787, 63
        %s790 = smul.addr %s789, 8
        %s791 = scalar_lea.vmem %s4, %s790
      $region52: #{_lambda_.6} parent=47 // pred_fallthru
        _
      // Predicated region
      $region53: #{_lambda_.6} parent=47 // pred_check
        %p792 = pneg %p156
      $region54: #{_lambda_.6} parent=47 // pred_check_branch
        %794 = sbr.rel (%p792) target = $region56
      $region55: #{_lambda_.6} parent=47 // pred_region
        %p795 = scmp.lt.s32.totalorder %s18, 1
        %s796 = scalar_select %p795, %s18, 1
        %s797 = smul.addr %s796, 2
        %s798 = scalar_lea.vmem %s5, %s797
      $region56: #{_lambda_.6} parent=47 // pred_fallthru
        _
    $region48: #{_lambda_.6} parent=5 // pred_fallthru
      _
  $region6: #{_lambda_.6} parent=0 // loop_footer
    %s16 = sadd.s32 1, %s12
  $region7: #{_lambda_.6} parent=0 // loop_footer_branch
    %11 = sbr.rel target = $region3
  $region8: #{_lambda_.6} parent=0 // loop_exit
    _

// kernel: _lambda_.5
$region0: #{_lambda_.5}
  #allocation0 [shape = 'u32[]', space=smem, size = 0x4, offset = 0x4, fixed_abs, tag = 'smem constant byte address 0x4 - core index']
  #allocation1 [shape = 'u32[144,128]{1,0:T(1,128)}', space=vmem, size = 0x12000, scoped, tag = 'internal scratch']
  %s0 = inlined_call_operand.vmem [shape: f32[2,18,18,128], index: 0, kind: input, shape index: {}]
  %s1 = inlined_call_operand.vmem [shape: f32[1,128], index: 1, kind: input, shape index: {}]
  %s2 = inlined_call_operand.vmem [shape: f32[1,128], index: 2, kind: input, shape index: {}]
  %s3 = inlined_call_operand.vmem [shape: bf16[9,128,128], index: 3, kind: input, shape index: {}]
  %s4 = inlined_call_operand.vmem [shape: f32[2,16,16,128], index: 4, kind: output, shape index: {0}]
  %s5 = inlined_call_operand.vmem [shape: f32[2,2,128], index: 5, kind: output, shape index: {1}]
  %6 = xla_tuple %s4, %s5
  %s7 = sld [smem:[#allocation0]]
  $region57: #{_lambda_.5} parent=0
    _
  %s9 = ssub.s32 1, %s7
  %s10 = scalar_select 0, %s9, %s7
  loop: start=0, step=1, limit=4
  $region2: #{_lambda_.5} parent=0 // loop_pre_header
    _
  $region3: #{_lambda_.5} parent=0 // loop_header
    %s12 = sphi 0, %s16
    %p13 = scmp.ge.s32.totalorder %s12, 4
    %s22 = sphi 0, %s24
    %s25 = sphi 0, %s22
    %s26 = sphi 0, %s25
    %s42 = sphi 0, %s26
    %s46 = sphi 0, %s46
    %s48 = sphi 0, %s46
    %s49 = sphi 0, %s48
    %s63 = sphi 0, %s49
    %s67 = sphi 0, %s67
    %s69 = sphi 0, %s67
    %s70 = sphi 0, %s69
    %s84 = sphi 0, %s70
    %s88 = sphi 0, %s88
    %s90 = sphi 0, %s88
    %s91 = sphi 0, %s90
    %s105 = sphi 0, %s91
    %s111 = sphi 0, %s113
    %s114 = sphi 0, %s111
    %s115 = sphi 0, %s114
    %s131 = sphi 0, %s115
    %s137 = sphi 0, %s139
    %s140 = sphi 0, %s137
    %s141 = sphi 0, %s140
    %s157 = sphi 0, %s141
  $region4: #{_lambda_.5} parent=0 // loop_header_branch
    %15 = sbr.rel (%p13) target = $region8
  $region5: #{_lambda_.5} parent=0 // loop_body
    %s17 = ssub.s32 %s12, 1
    %s18 = ssub.s32 %s12, 2
    %s19 = sadd.s32 %s12, 1
    %s20 = ssub.s32 %s12, %s19
    %p21 = scmp.eq.s32.totalorder %s20, 0
    %s23 = sadd.s32 %s22, 1
    %s24 = scalar_select %p21, %s22, %s23
    %p27 = pneg %p21
    %p28 = scmp.eq.s32.totalorder %s12, 1
    %p29 = por %p27, %p28
    %p30 = scmp.ne.s32.totalorder %s22, %s25
    %p31 = scmp.eq.s32.totalorder %s12, 0
    %p32 = por %p30, %p31
    %p33 = scmp.ne.s32.totalorder %s22, %s25
    %p34 = scmp.eq.s32.totalorder %s17, 1
    %p35 = por %p33, %p34
    %p36 = scmp.ne.s32.totalorder %s25, %s26
    %p37 = scmp.eq.s32.totalorder %s17, 0
    %p38 = por %p36, %p37
    %p39 = scmp.ne.s32.totalorder %s25, %s26
    %p40 = scmp.eq.s32.totalorder %s18, 1
    %p41 = por %p39, %p40
    %p43 = scmp.ne.s32.totalorder %s26, %s42
    %p44 = scmp.eq.s32.totalorder %s18, 0
    %p45 = por %p43, %p44
    %s47 = sadd.s32 %s46, 1
    %p50 = scmp.eq.s32.totalorder %s12, 1
    %p51 = scmp.ne.s32.totalorder %s46, %s48
    %p52 = scmp.eq.s32.totalorder %s12, 0
    %p53 = por %p51, %p52
    %p54 = scmp.ne.s32.totalorder %s46, %s48
    %p55 = scmp.eq.s32.totalorder %s17, 1
    %p56 = por %p54, %p55
    %p57 = scmp.ne.s32.totalorder %s48, %s49
    %p58 = scmp.eq.s32.totalorder %s17, 0
    %p59 = por %p57, %p58
    %p60 = scmp.ne.s32.totalorder %s48, %s49
    %p61 = scmp.eq.s32.totalorder %s18, 1
    %p62 = por %p60, %p61
    %p64 = scmp.ne.s32.totalorder %s49, %s63
    %p65 = scmp.eq.s32.totalorder %s18, 0
    %p66 = por %p64, %p65
    %s68 = sadd.s32 %s67, 1
    %p71 = scmp.eq.s32.totalorder %s12, 1
    %p72 = scmp.ne.s32.totalorder %s67, %s69
    %p73 = scmp.eq.s32.totalorder %s12, 0
    %p74 = por %p72, %p73
    %p75 = scmp.ne.s32.totalorder %s67, %s69
    %p76 = scmp.eq.s32.totalorder %s17, 1
    %p77 = por %p75, %p76
    %p78 = scmp.ne.s32.totalorder %s69, %s70
    %p79 = scmp.eq.s32.totalorder %s17, 0
    %p80 = por %p78, %p79
    %p81 = scmp.ne.s32.totalorder %s69, %s70
    %p82 = scmp.eq.s32.totalorder %s18, 1
    %p83 = por %p81, %p82
    %p85 = scmp.ne.s32.totalorder %s70, %s84
    %p86 = scmp.eq.s32.totalorder %s18, 0
    %p87 = por %p85, %p86
    %s89 = sadd.s32 %s88, 1
    %p92 = scmp.eq.s32.totalorder %s12, 1
    %p93 = scmp.ne.s32.totalorder %s88, %s90
    %p94 = scmp.eq.s32.totalorder %s12, 0
    %p95 = por %p93, %p94
    %p96 = scmp.ne.s32.totalorder %s88, %s90
    %p97 = scmp.eq.s32.totalorder %s17, 1
    %p98 = por %p96, %p97
    %p99 = scmp.ne.s32.totalorder %s90, %s91
    %p100 = scmp.eq.s32.totalorder %s17, 0
    %p101 = por %p99, %p100
    %p102 = scmp.ne.s32.totalorder %s90, %s91
    %p103 = scmp.eq.s32.totalorder %s18, 1
    %p104 = por %p102, %p103
    %p106 = scmp.ne.s32.totalorder %s91, %s105
    %p107 = scmp.eq.s32.totalorder %s18, 0
    %p108 = por %p106, %p107
    %s109 = ssub.s32 %s12, %s19
    %p110 = scmp.eq.s32.totalorder %s109, 0
    %s112 = sadd.s32 %s111, 1
    %s113 = scalar_select %p110, %s111, %s112
    %p116 = pneg %p110
    %p117 = scmp.eq.s32.totalorder %s12, 1
    %p118 = por %p116, %p117
    %p119 = scmp.ne.s32.totalorder %s111, %s114
    %p120 = scmp.eq.s32.totalorder %s12, 0
    %p121 = por %p119, %p120
    %p122 = scmp.ne.s32.totalorder %s111, %s114
    %p123 = scmp.eq.s32.totalorder %s17, 1
    %p124 = por %p122, %p123
    %p125 = scmp.ne.s32.totalorder %s114, %s115
    %p126 = scmp.eq.s32.totalorder %s17, 0
    %p127 = por %p125, %p126
    %p128 = scmp.ne.s32.totalorder %s114, %s115
    %p129 = scmp.eq.s32.totalorder %s18, 1
    %p130 = por %p128, %p129
    %p132 = scmp.ne.s32.totalorder %s115, %s131
    %p133 = scmp.eq.s32.totalorder %s18, 0
    %p134 = por %p132, %p133
    %s135 = ssub.s32 %s12, %s19
    %p136 = scmp.eq.s32.totalorder %s135, 0
    %s138 = sadd.s32 %s137, 1
    %s139 = scalar_select %p136, %s137, %s138
    %p142 = pneg %p136
    %p143 = scmp.eq.s32.totalorder %s12, 1
    %p144 = por %p142, %p143
    %p145 = scmp.ne.s32.totalorder %s137, %s140
    %p146 = scmp.eq.s32.totalorder %s12, 0
    %p147 = por %p145, %p146
    %p148 = scmp.ne.s32.totalorder %s137, %s140
    %p149 = scmp.eq.s32.totalorder %s17, 1
    %p150 = por %p148, %p149
    %p151 = scmp.ne.s32.totalorder %s140, %s141
    %p152 = scmp.eq.s32.totalorder %s17, 0
    %p153 = por %p151, %p152
    %p154 = scmp.ne.s32.totalorder %s140, %s141
    %p155 = scmp.eq.s32.totalorder %s18, 1
    %p156 = por %p154, %p155
    %p158 = scmp.ne.s32.totalorder %s141, %s157
    %p159 = scmp.eq.s32.totalorder %s18, 0
    %p160 = por %p158, %p159
    %p161 = scmp.le.s32.totalorder 1, %s12
    %p162 = scmp.lt.s32.totalorder %s12, 3
    %p163 = pnand %p161, %p162
    %p164 = pneg %p163
    // Predicated region
    $region9: #{_lambda_.5} parent=5 // pred_check
      _
    $region10: #{_lambda_.5} parent=5 // pred_check_branch
      %166 = sbr.rel (%p163) target = $region12
    $region11: #{_lambda_.5} parent=5 // pred_region
      %s167 = ssub.s32 %s12, 1
      // Predicated region
      $region13: #{_lambda_.5} parent=11 // pred_check
        %p168 = pneg %p59
      $region14: #{_lambda_.5} parent=11 // pred_check_branch
        %170 = sbr.rel (%p168) target = $region16
      $region15: #{_lambda_.5} parent=11 // pred_region
        _
      $region16: #{_lambda_.5} parent=11 // pred_fallthru
        _
      // Predicated region
      $region17: #{_lambda_.5} parent=11 // pred_check
        %p171 = pneg %p80
      $region18: #{_lambda_.5} parent=11 // pred_check_branch
        %173 = sbr.rel (%p171) target = $region20
      $region19: #{_lambda_.5} parent=11 // pred_region
        _
      $region20: #{_lambda_.5} parent=11 // pred_fallthru
        _
      // Predicated region
      $region21: #{_lambda_.5} parent=11 // pred_check
        %p174 = pneg %p101
      $region22: #{_lambda_.5} parent=11 // pred_check_branch
        %176 = sbr.rel (%p174) target = $region24
      $region23: #{_lambda_.5} parent=11 // pred_region
        _
      $region24: #{_lambda_.5} parent=11 // pred_fallthru
        _
    $region12: #{_lambda_.5} parent=5 // pred_fallthru
      _
    %p177 = scmp.lt.s32.totalorder %s12, 2
    // Predicated region
    $region25: #{_lambda_.5} parent=5 // pred_check
      %p178 = pneg %p177
    $region26: #{_lambda_.5} parent=5 // pred_check_branch
      %180 = sbr.rel (%p178) target = $region28
    $region27: #{_lambda_.5} parent=5 // pred_region
      // Predicated region
      $region29: #{_lambda_.5} parent=27 // pred_check
        %p181 = pneg %p32
      $region30: #{_lambda_.5} parent=27 // pred_check_branch
        %183 = sbr.rel (%p181) target = $region32
      $region31: #{_lambda_.5} parent=27 // pred_region
        %p184 = scmp.lt.s32.totalorder %s12, 1
        %s185 = scalar_select %p184, %s12, 1
        %s186 = smul.addr %s185, 54
        %s187 = smul.addr %s186, 8
        %s188 = scalar_lea.vmem %s0, %s187
      $region32: #{_lambda_.5} parent=27 // pred_fallthru
        _
    $region28: #{_lambda_.5} parent=5 // pred_fallthru
      _
    %p189 = scmp.le.s32.totalorder 1, %s12
    %p190 = scmp.lt.s32.totalorder %s12, 3
    %p191 = pnand %p189, %p190
    %p192 = pneg %p191
    // Predicated region
    $region33: #{_lambda_.5} parent=5 // pred_check
      _
    $region34: #{_lambda_.5} parent=5 // pred_check_branch
      %194 = sbr.rel (%p191) target = $region36
    $region35: #{_lambda_.5} parent=5 // pred_region
      %s195 = ssub.s32 %s12, 1
      %p196 = scmp.lt.s32.totalorder %s17, 1
      %s197 = scalar_select %p196, %s17, 1
      %s198 = smul.addr %s197, 54
      %s199 = smul.addr %s198, 8
      %s200 = scalar_lea.vmem %s0, %s199
      %p201 = pneg %p38
      %p202 = pneg %p35
      %p203 = pneg %p59
      %p204 = pneg %p56
      %p205 = pneg %p80
      %p206 = pneg %p77
      %p207 = pneg %p101
      %p208 = pneg %p98
      %p209 = pneg %p127
      %p210 = pneg %p124
      %p211 = scmp.lt.s32.totalorder %s17, 1
      %s212 = scalar_select %p211, %s17, 1
      %s213 = smul.addr %s212, 32
      %s214 = smul.addr %s213, 8
      %s215 = scalar_lea.vmem %s4, %s214
      %p216 = pneg %p153
      %p217 = pneg %p150
      %p218 = scmp.lt.s32.totalorder %s17, 1
      %s219 = scalar_select %p218, %s17, 1
      %s220 = smul.addr %s219, 2
      %s221 = scalar_lea.vmem %s5, %s220
      %p222 = scmp.lt.s32.totalorder %s17, 1
      %s223 = scalar_select %p222, %s17, 1
      %s224 = smul.addr %s223, 54
      %s225 = smul.addr %s224, 8
      %s226 = scalar_lea.vmem %s0, %s225
      %p227 = scmp.lt.s32.totalorder %s17, 1
      %s228 = scalar_select %p227, %s17, 1
      %s229 = smul.addr %s228, 32
      %s230 = smul.addr %s229, 8
      %s231 = scalar_lea.vmem %s4, %s230
      %p232 = scmp.lt.s32.totalorder %s17, 1
      %s233 = scalar_select %p232, %s17, 1
      %s234 = smul.addr %s233, 2
      %s235 = scalar_lea.vmem %s5, %s234
      %v237 = vld [vmem:[%s226] sm:$0xff]
      %v238 = vld [vmem:[%s226 + $0x8] sm:$0xff]
      %v239 = vld [vmem:[%s226 + $0x10] sm:$0x3]
      %v240 = vld [vmem:[%s226 + $0x18] sm:$0xff]
      %v241 = vld [vmem:[%s226 + $0x20] sm:$0xff]
      %v242 = vld [vmem:[%s226 + $0x28] sm:$0x3]
      %v243 = vld [vmem:[%s226 + $0x30] sm:$0xff]
      %v244 = vld [vmem:[%s226 + $0x38] sm:$0xff]
      %v245 = vld [vmem:[%s226 + $0x40] sm:$0x3]
      %v246 = vld [vmem:[%s226 + $0x48] sm:$0xff]
      %v247 = vld [vmem:[%s226 + $0x50] sm:$0xff]
      %v248 = vld [vmem:[%s226 + $0x58] sm:$0x3]
      %v249 = vld [vmem:[%s226 + $0x60] sm:$0xff]
      %v250 = vld [vmem:[%s226 + $0x68] sm:$0xff]
      %v251 = vld [vmem:[%s226 + $0x70] sm:$0x3]
      %v252 = vld [vmem:[%s226 + $0x78] sm:$0xff]
      %v253 = vld [vmem:[%s226 + $0x80] sm:$0xff]
      %v254 = vld [vmem:[%s226 + $0x88] sm:$0x3]
      %v255 = vld [vmem:[%s226 + $0x90] sm:$0xff]
      %v256 = vld [vmem:[%s226 + $0x98] sm:$0xff]
      %v257 = vld [vmem:[%s226 + $0xa0] sm:$0x3]
      %v258 = vld [vmem:[%s226 + $0xa8] sm:$0xff]
      %v259 = vld [vmem:[%s226 + $0xb0] sm:$0xff]
      %v260 = vld [vmem:[%s226 + $0xb8] sm:$0x3]
      %v261 = vld [vmem:[%s226 + $0xc0] sm:$0xff]
      %v262 = vld [vmem:[%s226 + $0xc8] sm:$0xff]
      %v263 = vld [vmem:[%s226 + $0xd0] sm:$0x3]
      %v264 = vld [vmem:[%s226 + $0xd8] sm:$0xff]
      %v265 = vld [vmem:[%s226 + $0xe0] sm:$0xff]
      %v266 = vld [vmem:[%s226 + $0xe8] sm:$0x3]
      %v267 = vld [vmem:[%s226 + $0xf0] sm:$0xff]
      %v268 = vld [vmem:[%s226 + $0xf8] sm:$0xff]
      %v269 = vld [vmem:[%s226 + $0x100] sm:$0x3]
      %v270 = vld [vmem:[%s226 + $0x108] sm:$0xff]
      %v271 = vld [vmem:[%s226 + $0x110] sm:$0xff]
      %v272 = vld [vmem:[%s226 + $0x118] sm:$0x3]
      %v273 = vld [vmem:[%s226 + $0x120] sm:$0xff]
      %v274 = vld [vmem:[%s226 + $0x128] sm:$0xff]
      %v275 = vld [vmem:[%s226 + $0x130] sm:$0x3]
      %v276 = vld [vmem:[%s226 + $0x138] sm:$0xff]
      %v277 = vld [vmem:[%s226 + $0x140] sm:$0xff]
      %v278 = vld [vmem:[%s226 + $0x148] sm:$0x3]
      %v279 = vld [vmem:[%s226 + $0x150] sm:$0xff]
      %v280 = vld [vmem:[%s226 + $0x158] sm:$0xff]
      %v281 = vld [vmem:[%s226 + $0x160] sm:$0x3]
      %v282 = vld [vmem:[%s226 + $0x168] sm:$0xff]
      %v283 = vld [vmem:[%s226 + $0x170] sm:$0xff]
      %v284 = vld [vmem:[%s226 + $0x178] sm:$0x3]
      %v285 = vld [vmem:[%s226 + $0x180] sm:$0xff]
      %v286 = vld [vmem:[%s226 + $0x188] sm:$0xff]
      %v287 = vld [vmem:[%s226 + $0x190] sm:$0x3]
      %v288 = vld [vmem:[%s226 + $0x198] sm:$0xff]
      %v289 = vld [vmem:[%s226 + $0x1a0] sm:$0xff]
      %v290 = vld [vmem:[%s226 + $0x1a8] sm:$0x3]
      %v291 = vld [vmem:[%s1] sm:$0x1]
      %v293 = vlaneseq
      %v294 = vshrl.u32 %v293, 7
      %v295 = vsub.s32 0, %v294
      %v296 = vrot.slane %v291, %v295
      %v298 = vmul.f32 %v237, %v296
      %v299 = vmul.f32 %v238, %v296
      %v300 = vmul.f32 %v239, %v296
      %v301 = vmul.f32 %v240, %v296
      %v302 = vmul.f32 %v241, %v296
      %v303 = vmul.f32 %v242, %v296
      %v304 = vmul.f32 %v243, %v296
      %v305 = vmul.f32 %v244, %v296
      %v306 = vmul.f32 %v245, %v296
      %v307 = vmul.f32 %v246, %v296
      %v308 = vmul.f32 %v247, %v296
      %v309 = vmul.f32 %v248, %v296
      %v310 = vmul.f32 %v249, %v296
      %v311 = vmul.f32 %v250, %v296
      %v312 = vmul.f32 %v251, %v296
      %v313 = vmul.f32 %v252, %v296
      %v314 = vmul.f32 %v253, %v296
      %v315 = vmul.f32 %v254, %v296
      %v316 = vmul.f32 %v255, %v296
      %v317 = vmul.f32 %v256, %v296
      %v318 = vmul.f32 %v257, %v296
      %v319 = vmul.f32 %v258, %v296
      %v320 = vmul.f32 %v259, %v296
      %v321 = vmul.f32 %v260, %v296
      %v322 = vmul.f32 %v261, %v296
      %v323 = vmul.f32 %v262, %v296
      %v324 = vmul.f32 %v263, %v296
      %v325 = vmul.f32 %v264, %v296
      %v326 = vmul.f32 %v265, %v296
      %v327 = vmul.f32 %v266, %v296
      %v328 = vmul.f32 %v267, %v296
      %v329 = vmul.f32 %v268, %v296
      %v330 = vmul.f32 %v269, %v296
      %v331 = vmul.f32 %v270, %v296
      %v332 = vmul.f32 %v271, %v296
      %v333 = vmul.f32 %v272, %v296
      %v334 = vmul.f32 %v273, %v296
      %v335 = vmul.f32 %v274, %v296
      %v336 = vmul.f32 %v275, %v296
      %v337 = vmul.f32 %v276, %v296
      %v338 = vmul.f32 %v277, %v296
      %v339 = vmul.f32 %v278, %v296
      %v340 = vmul.f32 %v279, %v296
      %v341 = vmul.f32 %v280, %v296
      %v342 = vmul.f32 %v281, %v296
      %v343 = vmul.f32 %v282, %v296
      %v344 = vmul.f32 %v283, %v296
      %v345 = vmul.f32 %v284, %v296
      %v346 = vmul.f32 %v285, %v296
      %v347 = vmul.f32 %v286, %v296
      %v348 = vmul.f32 %v287, %v296
      %v349 = vmul.f32 %v288, %v296
      %v350 = vmul.f32 %v289, %v296
      %v351 = vmul.f32 %v290, %v296
      %v352 = vld [vmem:[%s2] sm:$0x1]
      %v354 = vlaneseq
      %v355 = vshrl.u32 %v354, 7
      %v356 = vsub.s32 0, %v355
      %v357 = vrot.slane %v352, %v356
      %v359 = vadd.f32 %v298, %v357
      %v360 = vadd.f32 %v299, %v357
      %v361 = vadd.f32 %v300, %v357
      %v362 = vadd.f32 %v301, %v357
      %v363 = vadd.f32 %v302, %v357
      %v364 = vadd.f32 %v303, %v357
      %v365 = vadd.f32 %v304, %v357
      %v366 = vadd.f32 %v305, %v357
      %v367 = vadd.f32 %v306, %v357
      %v368 = vadd.f32 %v307, %v357
      %v369 = vadd.f32 %v308, %v357
      %v370 = vadd.f32 %v309, %v357
      %v371 = vadd.f32 %v310, %v357
      %v372 = vadd.f32 %v311, %v357
      %v373 = vadd.f32 %v312, %v357
      %v374 = vadd.f32 %v313, %v357
      %v375 = vadd.f32 %v314, %v357
      %v376 = vadd.f32 %v315, %v357
      %v377 = vadd.f32 %v316, %v357
      %v378 = vadd.f32 %v317, %v357
      %v379 = vadd.f32 %v318, %v357
      %v380 = vadd.f32 %v319, %v357
      %v381 = vadd.f32 %v320, %v357
      %v382 = vadd.f32 %v321, %v357
      %v383 = vadd.f32 %v322, %v357
      %v384 = vadd.f32 %v323, %v357
      %v385 = vadd.f32 %v324, %v357
      %v386 = vadd.f32 %v325, %v357
      %v387 = vadd.f32 %v326, %v357
      %v388 = vadd.f32 %v327, %v357
      %v389 = vadd.f32 %v328, %v357
      %v390 = vadd.f32 %v329, %v357
      %v391 = vadd.f32 %v330, %v357
      %v392 = vadd.f32 %v331, %v357
      %v393 = vadd.f32 %v332, %v357
      %v394 = vadd.f32 %v333, %v357
      %v395 = vadd.f32 %v334, %v357
      %v396 = vadd.f32 %v335, %v357
      %v397 = vadd.f32 %v336, %v357
      %v398 = vadd.f32 %v337, %v357
      %v399 = vadd.f32 %v338, %v357
      %v400 = vadd.f32 %v339, %v357
      %v401 = vadd.f32 %v340, %v357
      %v402 = vadd.f32 %v341, %v357
      %v403 = vadd.f32 %v342, %v357
      %v404 = vadd.f32 %v343, %v357
      %v405 = vadd.f32 %v344, %v357
      %v406 = vadd.f32 %v345, %v357
      %v407 = vadd.f32 %v346, %v357
      %v408 = vadd.f32 %v347, %v357
      %v409 = vadd.f32 %v348, %v357
      %v410 = vadd.f32 %v349, %v357
      %v411 = vadd.f32 %v350, %v357
      %v412 = vadd.f32 %v351, %v357
      %v413 = vmax.f32 %v359, 0.0
      %v414 = vmax.f32 %v360, 0.0
      %v415 = vmax.f32 %v361, 0.0
      %v416 = vmax.f32 %v362, 0.0
      %v417 = vmax.f32 %v363, 0.0
      %v418 = vmax.f32 %v364, 0.0
      %v419 = vmax.f32 %v365, 0.0
      %v420 = vmax.f32 %v366, 0.0
      %v421 = vmax.f32 %v367, 0.0
      %v422 = vmax.f32 %v368, 0.0
      %v423 = vmax.f32 %v369, 0.0
      %v424 = vmax.f32 %v370, 0.0
      %v425 = vmax.f32 %v371, 0.0
      %v426 = vmax.f32 %v372, 0.0
      %v427 = vmax.f32 %v373, 0.0
      %v428 = vmax.f32 %v374, 0.0
      %v429 = vmax.f32 %v375, 0.0
      %v430 = vmax.f32 %v376, 0.0
      %v431 = vmax.f32 %v377, 0.0
      %v432 = vmax.f32 %v378, 0.0
      %v433 = vmax.f32 %v379, 0.0
      %v434 = vmax.f32 %v380, 0.0
      %v435 = vmax.f32 %v381, 0.0
      %v436 = vmax.f32 %v382, 0.0
      %v437 = vmax.f32 %v383, 0.0
      %v438 = vmax.f32 %v384, 0.0
      %v439 = vmax.f32 %v385, 0.0
      %v440 = vmax.f32 %v386, 0.0
      %v441 = vmax.f32 %v387, 0.0
      %v442 = vmax.f32 %v388, 0.0
      %v443 = vmax.f32 %v389, 0.0
      %v444 = vmax.f32 %v390, 0.0
      %v445 = vmax.f32 %v391, 0.0
      %v446 = vmax.f32 %v392, 0.0
      %v447 = vmax.f32 %v393, 0.0
      %v448 = vmax.f32 %v394, 0.0
      %v449 = vmax.f32 %v395, 0.0
      %v450 = vmax.f32 %v396, 0.0
      %v451 = vmax.f32 %v397, 0.0
      %v452 = vmax.f32 %v398, 0.0
      %v453 = vmax.f32 %v399, 0.0
      %v454 = vmax.f32 %v400, 0.0
      %v455 = vmax.f32 %v401, 0.0
      %v456 = vmax.f32 %v402, 0.0
      %v457 = vmax.f32 %v403, 0.0
      %v458 = vmax.f32 %v404, 0.0
      %v459 = vmax.f32 %v405, 0.0
      %v460 = vmax.f32 %v406, 0.0
      %v461 = vmax.f32 %v407, 0.0
      %v462 = vmax.f32 %v408, 0.0
      %v463 = vmax.f32 %v409, 0.0
      %v464 = vmax.f32 %v410, 0.0
      %v465 = vmax.f32 %v411, 0.0
      %v466 = vmax.f32 %v412, 0.0
      %v467 = vlaneseq
      %v468 = vshrl.u32 %v467, 7
      %v469 = vadd.s32 %v468, 8
      %v470 = vadd.s32 %v468, 16
      %vm471 = vcmp.ge.s32.totalorder %v468, 1
      %vm472 = vcmp.ge.s32.totalorder %v469, 1
      %vm473 = vcmp.ge.s32.totalorder %v470, 1
      %vm474 = vmand 0, %vm471
      %vm475 = vmand 0, %vm472
      %vm476 = vmand 0, %vm473
      %vm477 = vmand 1, %vm471
      %vm478 = vmand 1, %vm472
      %vm479 = vmand 1, %vm473
      %vm480 = vcmp.le.s32.totalorder %v468, 16
      %vm481 = vcmp.le.s32.totalorder %v469, 16
      %vm482 = vcmp.le.s32.totalorder %v470, 16
      %vm483 = vmand %vm474, %vm480
      %vm484 = vmand %vm475, %vm481
      %vm485 = vmand %vm476, %vm482
      %vm486 = vmand %vm477, %vm480
      %vm487 = vmand %vm478, %vm481
      %vm488 = vmand %vm479, %vm482
      %v489 = vsel %vm483, 1, 0
      %v490 = vsel %vm484, 1, 0
      %v491 = vsel %vm485, 1, 0
      %v492 = vsel %vm486, 1, 0
      %v493 = vsel %vm487, 1, 0
      %v494 = vsel %vm488, 1, 0
      %vm495 = vcmp.eq.s32.totalorder %v489, 1
      %vm496 = vcmp.eq.s32.totalorder %v490, 1
      %vm497 = vcmp.eq.s32.totalorder %v491, 1
      %vm498 = vcmp.eq.s32.totalorder %v492, 1
      %vm499 = vcmp.eq.s32.totalorder %v493, 1
      %vm500 = vcmp.eq.s32.totalorder %v494, 1
      %v501 = vsel %vm495, %v413, 0.0
      %v502 = vsel %vm496, %v414, 0.0
      %v503 = vsel %vm497, %v415, 0.0
      %v504 = vsel %vm498, %v416, 0.0
      %v505 = vsel %vm499, %v417, 0.0
      %v506 = vsel %vm500, %v418, 0.0
      %v507 = vsel %vm498, %v419, 0.0
      %v508 = vsel %vm499, %v420, 0.0
      %v509 = vsel %vm500, %v421, 0.0
      %v510 = vsel %vm498, %v422, 0.0
      %v511 = vsel %vm499, %v423, 0.0
      %v512 = vsel %vm500, %v424, 0.0
      %v513 = vsel %vm498, %v425, 0.0
      %v514 = vsel %vm499, %v426, 0.0
      %v515 = vsel %vm500, %v427, 0.0
      %v516 = vsel %vm498, %v428, 0.0
      %v517 = vsel %vm499, %v429, 0.0
      %v518 = vsel %vm500, %v430, 0.0
      %v519 = vsel %vm498, %v431, 0.0
      %v520 = vsel %vm499, %v432, 0.0
      %v521 = vsel %vm500, %v433, 0.0
      %v522 = vsel %vm498, %v434, 0.0
      %v523 = vsel %vm499, %v435, 0.0
      %v524 = vsel %vm500, %v436, 0.0
      %v525 = vsel %vm498, %v437, 0.0
      %v526 = vsel %vm499, %v438, 0.0
      %v527 = vsel %vm500, %v439, 0.0
      %v528 = vsel %vm498, %v440, 0.0
      %v529 = vsel %vm499, %v441, 0.0
      %v530 = vsel %vm500, %v442, 0.0
      %v531 = vsel %vm498, %v443, 0.0
      %v532 = vsel %vm499, %v444, 0.0
      %v533 = vsel %vm500, %v445, 0.0
      %v534 = vsel %vm498, %v446, 0.0
      %v535 = vsel %vm499, %v447, 0.0
      %v536 = vsel %vm500, %v448, 0.0
      %v537 = vsel %vm498, %v449, 0.0
      %v538 = vsel %vm499, %v450, 0.0
      %v539 = vsel %vm500, %v451, 0.0
      %v540 = vsel %vm498, %v452, 0.0
      %v541 = vsel %vm499, %v453, 0.0
      %v542 = vsel %vm500, %v454, 0.0
      %v543 = vsel %vm498, %v455, 0.0
      %v544 = vsel %vm499, %v456, 0.0
      %v545 = vsel %vm500, %v457, 0.0
      %v546 = vsel %vm498, %v458, 0.0
      %v547 = vsel %vm499, %v459, 0.0
      %v548 = vsel %vm500, %v460, 0.0
      %v549 = vsel %vm498, %v461, 0.0
      %v550 = vsel %vm499, %v462, 0.0
      %v551 = vsel %vm500, %v463, 0.0
      %v552 = vsel %vm495, %v464, 0.0
      %v553 = vsel %vm496, %v465, 0.0
      %v554 = vsel %vm497, %v466, 0.0
      %v555 = vpack.c.bf16 %v502, %v501
      %v556 = vpack.c.bf16 %v505, %v504
      %v557 = vpack.c.bf16 %v508, %v507
      %v558 = vpack.c.bf16 %v511, %v510
      %v559 = vpack.c.bf16 %v514, %v513
      %v560 = vpack.c.bf16 %v517, %v516
      %v561 = vpack.c.bf16 %v520, %v519
      %v562 = vpack.c.bf16 %v523, %v522
      %v563 = vpack.c.bf16 %v526, %v525
      %v564 = vpack.c.bf16 %v529, %v528
      %v565 = vpack.c.bf16 %v532, %v531
      %v566 = vpack.c.bf16 %v535, %v534
      %v567 = vpack.c.bf16 %v538, %v537
      %v568 = vpack.c.bf16 %v541, %v540
      %v569 = vpack.c.bf16 %v544, %v543
      %v570 = vpack.c.bf16 %v547, %v546
      %v571 = vld [vmem:[%s3] sm:$0xf]
      %v572 = vld [vmem:[%s3 + $0x4] sm:$0xf]
      %v573 = vld [vmem:[%s3 + $0x8] sm:$0xf]
      %v574 = vld [vmem:[%s3 + $0xc] sm:$0xf]
      %v575 = vld [vmem:[%s3 + $0x10] sm:$0xf]
      %v576 = vld [vmem:[%s3 + $0x14] sm:$0xf]
      %v577 = vld [vmem:[%s3 + $0x18] sm:$0xf]
      %v578 = vld [vmem:[%s3 + $0x1c] sm:$0xf]
      %v579 = vld [vmem:[%s3 + $0x20] sm:$0xf]
      %v580 = vld [vmem:[%s3 + $0x24] sm:$0xf]
      %v581 = vld [vmem:[%s3 + $0x28] sm:$0xf]
      %v582 = vld [vmem:[%s3 + $0x2c] sm:$0xf]
      %v583 = vld [vmem:[%s3 + $0x30] sm:$0xf]
      %v584 = vld [vmem:[%s3 + $0x34] sm:$0xf]
      %v585 = vld [vmem:[%s3 + $0x38] sm:$0xf]
      %v586 = vld [vmem:[%s3 + $0x3c] sm:$0xf]
      %vm635 = vcmask 1046528
      %v636 = vrot.slane %v501, 1
      %v637 = vrot.slane %v502, 1
      %v638 = vsel %vm635, %v636, %v637
      %v639 = vrot.slane %v503, 1
      %v640 = vsel %vm635, %v637, %v639
      %v641 = vrot.slane %v504, 1
      %v642 = vrot.slane %v505, 1
      %v643 = vsel %vm635, %v641, %v642
      %v644 = vrot.slane %v506, 1
      %v645 = vsel %vm635, %v642, %v644
      %v646 = vrot.slane %v507, 1
      %v647 = vrot.slane %v508, 1
      %v648 = vsel %vm635, %v646, %v647
      %v649 = vrot.slane %v509, 1
      %v650 = vsel %vm635, %v647, %v649
      %v651 = vrot.slane %v510, 1
      %v652 = vrot.slane %v511, 1
      %v653 = vsel %vm635, %v651, %v652
      %v654 = vrot.slane %v512, 1
      %v655 = vsel %vm635, %v652, %v654
      %v656 = vrot.slane %v513, 1
      %v657 = vrot.slane %v514, 1
      %v658 = vsel %vm635, %v656, %v657
      %v659 = vrot.slane %v515, 1
      %v660 = vsel %vm635, %v657, %v659
      %v661 = vrot.slane %v516, 1
      %v662 = vrot.slane %v517, 1
      %v663 = vsel %vm635, %v661, %v662
      %v664 = vrot.slane %v518, 1
      %v665 = vsel %vm635, %v662, %v664
      %v666 = vrot.slane %v519, 1
      %v667 = vrot.slane %v520, 1
      %v668 = vsel %vm635, %v666, %v667
      %v669 = vrot.slane %v521, 1
      %v670 = vsel %vm635, %v667, %v669
      %v671 = vrot.slane %v522, 1
      %v672 = vrot.slane %v523, 1
      %v673 = vsel %vm635, %v671, %v672
      %v674 = vrot.slane %v524, 1
      %v675 = vsel %vm635, %v672, %v674
      %v676 = vrot.slane %v525, 1
      %v677 = vrot.slane %v526, 1
      %v678 = vsel %vm635, %v676, %v677
      %v679 = vrot.slane %v527, 1
      %v680 = vsel %vm635, %v677, %v679
      %v681 = vrot.slane %v528, 1
      %v682 = vrot.slane %v529, 1
      %v683 = vsel %vm635, %v681, %v682
      %v684 = vrot.slane %v530, 1
      %v685 = vsel %vm635, %v682, %v684
      %v686 = vrot.slane %v531, 1
      %v687 = vrot.slane %v532, 1
      %v688 = vsel %vm635, %v686, %v687
      %v689 = vrot.slane %v533, 1
      %v690 = vsel %vm635, %v687, %v689
      %v691 = vrot.slane %v534, 1
      %v692 = vrot.slane %v535, 1
      %v693 = vsel %vm635, %v691, %v692
      %v694 = vrot.slane %v536, 1
      %v695 = vsel %vm635, %v692, %v694
      %v696 = vrot.slane %v537, 1
      %v697 = vrot.slane %v538, 1
      %v698 = vsel %vm635, %v696, %v697
      %v699 = vrot.slane %v539, 1
      %v700 = vsel %vm635, %v697, %v699
      %v701 = vrot.slane %v540, 1
      %v702 = vrot.slane %v541, 1
      %v703 = vsel %vm635, %v701, %v702
      %v704 = vrot.slane %v542, 1
      %v705 = vsel %vm635, %v702, %v704
      %v706 = vrot.slane %v543, 1
      %v707 = vrot.slane %v544, 1
      %v708 = vsel %vm635, %v706, %v707
      %v709 = vrot.slane %v545, 1
      %v710 = vsel %vm635, %v707, %v709
      %v711 = vrot.slane %v546, 1
      %v712 = vrot.slane %v547, 1
      %v713 = vsel %vm635, %v711, %v712
      %v714 = vrot.slane %v548, 1
      %v715 = vsel %vm635, %v712, %v714
      %v748 = vpack.c.bf16 %v640, %v638
      %v749 = vpack.c.bf16 %v645, %v643
      %v750 = vpack.c.bf16 %v650, %v648
      %v751 = vpack.c.bf16 %v655, %v653
      %v752 = vpack.c.bf16 %v660, %v658
      %v753 = vpack.c.bf16 %v665, %v663
      %v754 = vpack.c.bf16 %v670, %v668
      %v755 = vpack.c.bf16 %v675, %v673
      %v756 = vpack.c.bf16 %v680, %v678
      %v757 = vpack.c.bf16 %v685, %v683
      %v758 = vpack.c.bf16 %v690, %v688
      %v759 = vpack.c.bf16 %v695, %v693
      %v760 = vpack.c.bf16 %v700, %v698
      %v761 = vpack.c.bf16 %v705, %v703
      %v762 = vpack.c.bf16 %v710, %v708
      %v763 = vpack.c.bf16 %v715, %v713
      %s764 = scalar_lea.vmem %s3, 64
      %v765 = vld [vmem:[%s764] sm:$0xf]
      %v766 = vld [vmem:[%s764 + $0x4] sm:$0xf]
      %v767 = vld [vmem:[%s764 + $0x8] sm:$0xf]
      %v768 = vld [vmem:[%s764 + $0xc] sm:$0xf]
      %v769 = vld [vmem:[%s764 + $0x10] sm:$0xf]
      %v770 = vld [vmem:[%s764 + $0x14] sm:$0xf]
      %v771 = vld [vmem:[%s764 + $0x18] sm:$0xf]
      %v772 = vld [vmem:[%s764 + $0x1c] sm:$0xf]
      %v773 = vld [vmem:[%s764 + $0x20] sm:$0xf]
      %v774 = vld [vmem:[%s764 + $0x24] sm:$0xf]
      %v775 = vld [vmem:[%s764 + $0x28] sm:$0xf]
      %v776 = vld [vmem:[%s764 + $0x2c] sm:$0xf]
      %v777 = vld [vmem:[%s764 + $0x30] sm:$0xf]
      %v778 = vld [vmem:[%s764 + $0x34] sm:$0xf]
      %v779 = vld [vmem:[%s764 + $0x38] sm:$0xf]
      %v780 = vld [vmem:[%s764 + $0x3c] sm:$0xf]
      %v797 = vunpack.c.l.b16 %v765
      %v798 = vunpack.c.l.b16 %v766
      %v799 = vunpack.c.l.b16 %v767
      %v800 = vunpack.c.l.b16 %v768
      %v801 = vunpack.c.l.b16 %v769
      %v802 = vunpack.c.l.b16 %v770
      %v803 = vunpack.c.l.b16 %v771
      %v804 = vunpack.c.l.b16 %v772
      %v805 = vunpack.c.l.b16 %v773
      %v806 = vunpack.c.l.b16 %v774
      %v807 = vunpack.c.l.b16 %v775
      %v808 = vunpack.c.l.b16 %v776
      %v809 = vunpack.c.l.b16 %v777
      %v810 = vunpack.c.l.b16 %v778
      %v811 = vunpack.c.l.b16 %v779
      %v812 = vunpack.c.l.b16 %v780
      %v813 = vpack.c.b16 %v798, %v797
      %v814 = vpack.c.b16 %v800, %v799
      %v815 = vpack.c.b16 %v802, %v801
      %v816 = vpack.c.b16 %v804, %v803
      %v817 = vpack.c.b16 %v806, %v805
      %v818 = vpack.c.b16 %v808, %v807
      %v819 = vpack.c.b16 %v810, %v809
      %v820 = vpack.c.b16 %v812, %v811
      %829 = vmatprep.subr.bf16.mxu0 0
      %830 = vmatpush1.bf16.msra.mxu0 %v813
      %831 = vmatprep.subr.bf16.mxu0 0
      %832 = vmatpush1.bf16.msra.mxu0 %v814
      %833 = vmatprep.subr.bf16.mxu0 0
      %834 = vmatpush1.bf16.msra.mxu0 %v815
      %835 = vmatprep.subr.bf16.mxu0 0
      %836 = vmatpush1.bf16.msra.mxu0 %v816
      %837 = vmatprep.subr.bf16.mxu0 0
      %838 = vmatpush1.bf16.msra.mxu0 %v817
      %839 = vmatprep.subr.bf16.mxu0 0
      %840 = vmatpush1.bf16.msra.mxu0 %v818
      %841 = vmatprep.subr.bf16.mxu0 0
      %842 = vmatpush1.bf16.msra.mxu0 %v819
      %843 = vmatprep.subr.bf16.mxu0 0
      %844 = vmatpush1.bf16.msra.mxu0 %v820
      %845 = vmatprep.subr.bf16.mxu0 0
      %846 = vmatpush1.bf16.msra.mxu0 0
      %847 = vmatprep.subr.bf16.mxu0 0
      %848 = vmatpush1.bf16.msra.mxu0 0
      %849 = vmatprep.subr.bf16.mxu0 0
      %850 = vmatpush1.bf16.msra.mxu0 0
      %851 = vmatprep.subr.bf16.mxu0 0
      %852 = vmatpush1.bf16.msra.mxu0 0
      %853 = vmatprep.subr.bf16.mxu0 0
      %854 = vmatpush1.bf16.msra.mxu0 0
      %855 = vmatprep.subr.bf16.mxu0 0
      %856 = vmatpush1.bf16.msra.mxu0 0
      %857 = vmatprep.subr.bf16.mxu0 0
      %858 = vmatpush1.bf16.msra.mxu0 0
      %859 = vmatprep.subr.bf16.mxu0 0
      %860 = vmatpush1.bf16.msra.mxu0 0
      %861 = vmatprep.mubr.bf16.mxu0 0
      %862 = vmatmul.mubr.bf16.gmra.mrb[0].mxu0 %v748
      %v863 = vpop.f32.mrb[0].mxu0
      %v864 = vadd.f32 0.0, %v863
      %v865 = vpop.f32.mrb[0].mxu0
      %v866 = vpop.f32.mrb[0].mxu0
      %v867 = vadd.f32 0.0, %v866
      %v868 = vpop.f32.mrb[0].mxu0
      %869 = vmatprep.mubr.bf16.mxu0 0
      %870 = vmatmul.mubr.bf16.gmra.mrb[0].mxu0 %v749
      %v871 = vpop.f32.mrb[0].mxu0
      %v872 = vadd.f32 0.0, %v871
      %v873 = vpop.f32.mrb[0].mxu0
      %v874 = vpop.f32.mrb[0].mxu0
      %v875 = vadd.f32 0.0, %v874
      %v876 = vpop.f32.mrb[0].mxu0
      %877 = vmatprep.mubr.bf16.mxu0 0
      %878 = vmatmul.mubr.bf16.gmra.mrb[0].mxu0 %v750
      %v879 = vpop.f32.mrb[0].mxu0
      %v880 = vadd.f32 0.0, %v879
      %v881 = vpop.f32.mrb[0].mxu0
      %v882 = vpop.f32.mrb[0].mxu0
      %v883 = vadd.f32 0.0, %v882
      %v884 = vpop.f32.mrb[0].mxu0
      %885 = vmatprep.mubr.bf16.mxu0 0
      %886 = vmatmul.mubr.bf16.gmra.mrb[0].mxu0 %v751
      %v887 = vpop.f32.mrb[0].mxu0
      %v888 = vadd.f32 0.0, %v887
      %v889 = vpop.f32.mrb[0].mxu0
      %v890 = vpop.f32.mrb[0].mxu0
      %v891 = vadd.f32 0.0, %v890
      %v892 = vpop.f32.mrb[0].mxu0
      %893 = vmatprep.mubr.bf16.mxu0 0
      %894 = vmatmul.mubr.bf16.gmra.mrb[0].mxu0 %v752
      %v895 = vpop.f32.mrb[0].mxu0
      %v896 = vadd.f32 0.0, %v895
      %v897 = vpop.f32.mrb[0].mxu0
      %v898 = vpop.f32.mrb[0].mxu0
      %v899 = vadd.f32 0.0, %v898
      %v900 = vpop.f32.mrb[0].mxu0
      %901 = vmatprep.mubr.bf16.mxu0 0
      %902 = vmatmul.mubr.bf16.gmra.mrb[0].mxu0 %v753
      %v903 = vpop.f32.mrb[0].mxu0
      %v904 = vadd.f32 0.0, %v903
      %v905 = vpop.f32.mrb[0].mxu0
      %v906 = vpop.f32.mrb[0].mxu0
      %v907 = vadd.f32 0.0, %v906
      %v908 = vpop.f32.mrb[0].mxu0
      %909 = vmatprep.mubr.bf16.mxu0 0
      %910 = vmatmul.mubr.bf16.gmra.mrb[0].mxu0 %v754
      %v911 = vpop.f32.mrb[0].mxu0
      %v912 = vadd.f32 0.0, %v911
      %v913 = vpop.f32.mrb[0].mxu0
      %v914 = vpop.f32.mrb[0].mxu0
      %v915 = vadd.f32 0.0, %v914
      %v916 = vpop.f32.mrb[0].mxu0
      %917 = vmatprep.mubr.bf16.mxu0 0
      %918 = vmatmul.mubr.bf16.gmra.mrb[0].mxu0 %v755
      %v919 = vpop.f32.mrb[0].mxu0
      %v920 = vadd.f32 0.0, %v919
      %v921 = vpop.f32.mrb[0].mxu0
      %v922 = vpop.f32.mrb[0].mxu0
      %v923 = vadd.f32 0.0, %v922
      %v924 = vpop.f32.mrb[0].mxu0
      %925 = vmatprep.mubr.bf16.mxu0 0
      %926 = vmatmul.mubr.bf16.gmra.mrb[0].mxu0 %v756
      %v927 = vpop.f32.mrb[0].mxu0
      %v928 = vadd.f32 0.0, %v927
      %v929 = vpop.f32.mrb[0].mxu0
      %v930 = vpop.f32.mrb[0].mxu0
      %v931 = vadd.f32 0.0, %v930
      %v932 = vpop.f32.mrb[0].mxu0
      %933 = vmatprep.mubr.bf16.mxu0 0
      %934 = vmatmul.mubr.bf16.gmra.mrb[0].mxu0 %v757
      %v935 = vpop.f32.mrb[0].mxu0
      %v936 = vadd.f32 0.0, %v935
      %v937 = vpop.f32.mrb[0].mxu0
      %v938 = vpop.f32.mrb[0].mxu0
      %v939 = vadd.f32 0.0, %v938
      %v940 = vpop.f32.mrb[0].mxu0
      %941 = vmatprep.mubr.bf16.mxu0 0
      %942 = vmatmul.mubr.bf16.gmra.mrb[0].mxu0 %v758
      %v943 = vpop.f32.mrb[0].mxu0
      %v944 = vadd.f32 0.0, %v943
      %v945 = vpop.f32.mrb[0].mxu0
      %v946 = vpop.f32.mrb[0].mxu0
      %v947 = vadd.f32 0.0, %v946
      %v948 = vpop.f32.mrb[0].mxu0
      %949 = vmatprep.mubr.bf16.mxu0 0
      %950 = vmatmul.mubr.bf16.gmra.mrb[0].mxu0 %v759
      %v951 = vpop.f32.mrb[0].mxu0
      %v952 = vadd.f32 0.0, %v951
      %v953 = vpop.f32.mrb[0].mxu0
      %v954 = vpop.f32.mrb[0].mxu0
      %v955 = vadd.f32 0.0, %v954
      %v956 = vpop.f32.mrb[0].mxu0
      %957 = vmatprep.mubr.bf16.mxu0 0
      %958 = vmatmul.mubr.bf16.gmra.mrb[0].mxu0 %v760
      %v959 = vpop.f32.mrb[0].mxu0
      %v960 = vadd.f32 0.0, %v959
      %v961 = vpop.f32.mrb[0].mxu0
      %v962 = vpop.f32.mrb[0].mxu0
      %v963 = vadd.f32 0.0, %v962
      %v964 = vpop.f32.mrb[0].mxu0
      %965 = vmatprep.mubr.bf16.mxu0 0
      %966 = vmatmul.mubr.bf16.gmra.mrb[0].mxu0 %v761
      %v967 = vpop.f32.mrb[0].mxu0
      %v968 = vadd.f32 0.0, %v967
      %v969 = vpop.f32.mrb[0].mxu0
      %v970 = vpop.f32.mrb[0].mxu0
      %v971 = vadd.f32 0.0, %v970
      %v972 = vpop.f32.mrb[0].mxu0
      %973 = vmatprep.mubr.bf16.mxu0 0
      %974 = vmatmul.mubr.bf16.gmra.mrb[0].mxu0 %v762
      %v975 = vpop.f32.mrb[0].mxu0
      %v976 = vadd.f32 0.0, %v975
      %v977 = vpop.f32.mrb[0].mxu0
      %v978 = vpop.f32.mrb[0].mxu0
      %v979 = vadd.f32 0.0, %v978
      %v980 = vpop.f32.mrb[0].mxu0
      %981 = vmatprep.mubr.bf16.mxu0 0
      %982 = vmatmul.mubr.bf16.gmra.mrb[0].mxu0 %v763
      %v983 = vpop.f32.mrb[0].mxu0
      %v984 = vadd.f32 0.0, %v983
      %v985 = vpop.f32.mrb[0].mxu0
      %v986 = vpop.f32.mrb[0].mxu0
      %v987 = vadd.f32 0.0, %v986
      %v988 = vpop.f32.mrb[0].mxu0
      %989 = vdwg.mxu0
      %v1006 = vunpack.c.l.b16 %v571
      %v1007 = vunpack.c.l.b16 %v572
      %v1008 = vunpack.c.l.b16 %v573
      %v1009 = vunpack.c.l.b16 %v574
      %v1010 = vunpack.c.l.b16 %v575
      %v1011 = vunpack.c.l.b16 %v576
      %v1012 = vunpack.c.l.b16 %v577
      %v1013 = vunpack.c.l.b16 %v578
      %v1014 = vunpack.c.l.b16 %v579
      %v1015 = vunpack.c.l.b16 %v580
      %v1016 = vunpack.c.l.b16 %v581
      %v1017 = vunpack.c.l.b16 %v582
      %v1018 = vunpack.c.l.b16 %v583
      %v1019 = vunpack.c.l.b16 %v584
      %v1020 = vunpack.c.l.b16 %v585
      %v1021 = vunpack.c.l.b16 %v586
      %v1022 = vpack.c.b16 %v1007, %v1006
      %v1023 = vpack.c.b16 %v1009, %v1008
      %v1024 = vpack.c.b16 %v1011, %v1010
      %v1025 = vpack.c.b16 %v1013, %v1012
      %v1026 = vpack.c.b16 %v1015, %v1014
      %v1027 = vpack.c.b16 %v1017, %v1016
      %v1028 = vpack.c.b16 %v1019, %v1018
      %v1029 = vpack.c.b16 %v1021, %v1020
      %1038 = vmatprep.subr.bf16.mxu0 0
      %1039 = vmatpush1.bf16.msra.mxu0 %v1022
      %1040 = vmatprep.subr.bf16.mxu0 0
      %1041 = vmatpush1.bf16.msra.mxu0 %v1023
      %1042 = vmatprep.subr.bf16.mxu0 0
      %1043 = vmatpush1.bf16.msra.mxu0 %v1024
      %1044 = vmatprep.subr.bf16.mxu0 0
      %1045 = vmatpush1.bf16.msra.mxu0 %v1025
      %1046 = vmatprep.subr.bf16.mxu0 0
      %1047 = vmatpush1.bf16.msra.mxu0 %v1026
      %1048 = vmatprep.subr.bf16.mxu0 0
      %1049 = vmatpush1.bf16.msra.mxu0 %v1027
      %1050 = vmatprep.subr.bf16.mxu0 0
      %1051 = vmatpush1.bf16.msra.mxu0 %v1028
      %1052 = vmatprep.subr.bf16.mxu0 0
      %1053 = vmatpush1.bf16.msra.mxu0 %v1029
      %1054 = vmatprep.subr.bf16.mxu0 0
      %1055 = vmatpush1.bf16.msra.mxu0 0
      %1056 = vmatprep.subr.bf16.mxu0 0
      %1057 = vmatpush1.bf16.msra.mxu0 0
      %1058 = vmatprep.subr.bf16.mxu0 0
      %1059 = vmatpush1.bf16.msra.mxu0 0
      %1060 = vmatprep.subr.bf16.mxu0 0
      %1061 = vmatpush1.bf16.msra.mxu0 0
      %1062 = vmatprep.subr.bf16.mxu0 0
      %1063 = vmatpush1.bf16.msra.mxu0 0
      %1064 = vmatprep.subr.bf16.mxu0 0
      %1065 = vmatpush1.bf16.msra.mxu0 0
      %1066 = vmatprep.subr.bf16.mxu0 0
      %1067 = vmatpush1.bf16.msra.mxu0 0
      %1068 = vmatprep.subr.bf16.mxu0 0
      %1069 = vmatpush1.bf16.msra.mxu0 0
      %1070 = vmatprep.mubr.bf16.mxu0 0
      %1071 = vmatmul.mubr.bf16.gmra.mrb[0].mxu0 %v555
      %v1072 = vpop.f32.mrb[0].mxu0
      %v1073 = vadd.f32 %v864, %v1072
      %v1074 = vpop.f32.mrb[0].mxu0
      %v1075 = vpop.f32.mrb[0].mxu0
      %v1076 = vadd.f32 %v867, %v1075
      %v1077 = vpop.f32.mrb[0].mxu0
      %1078 = vmatprep.mubr.bf16.mxu0 0
      %1079 = vmatmul.mubr.bf16.gmra.mrb[0].mxu0 %v556
      %v1080 = vpop.f32.mrb[0].mxu0
      %v1081 = vadd.f32 %v872, %v1080
      %v1082 = vpop.f32.mrb[0].mxu0
      %v1083 = vpop.f32.mrb[0].mxu0
      %v1084 = vadd.f32 %v875, %v1083
      %v1085 = vpop.f32.mrb[0].mxu0
      %1086 = vmatprep.mubr.bf16.mxu0 0
      %1087 = vmatmul.mubr.bf16.gmra.mrb[0].mxu0 %v557
      %v1088 = vpop.f32.mrb[0].mxu0
      %v1089 = vadd.f32 %v880, %v1088
      %v1090 = vpop.f32.mrb[0].mxu0
      %v1091 = vpop.f32.mrb[0].mxu0
      %v1092 = vadd.f32 %v883, %v1091
      %v1093 = vpop.f32.mrb[0].mxu0
      %1094 = vmatprep.mubr.bf16.mxu0 0
      %1095 = vmatmul.mubr.bf16.gmra.mrb[0].mxu0 %v558
      %v1096 = vpop.f32.mrb[0].mxu0
      %v1097 = vadd.f32 %v888, %v1096
      %v1098 = vpop.f32.mrb[0].mxu0
      %v1099 = vpop.f32.mrb[0].mxu0
      %v1100 = vadd.f32 %v891, %v1099
      %v1101 = vpop.f32.mrb[0].mxu0
      %1102 = vmatprep.mubr.bf16.mxu0 0
      %1103 = vmatmul.mubr.bf16.gmra.mrb[0].mxu0 %v559
      %v1104 = vpop.f32.mrb[0].mxu0
      %v1105 = vadd.f32 %v896, %v1104
      %v1106 = vpop.f32.mrb[0].mxu0
      %v1107 = vpop.f32.mrb[0].mxu0
      %v1108 = vadd.f32 %v899, %v1107
      %v1109 = vpop.f32.mrb[0].mxu0
      %1110 = vmatprep.mubr.bf16.mxu0 0
      %1111 = vmatmul.mubr.bf16.gmra.mrb[0].mxu0 %v560
      %v1112 = vpop.f32.mrb[0].mxu0
      %v1113 = vadd.f32 %v904, %v1112
      %v1114 = vpop.f32.mrb[0].mxu0
      %v1115 = vpop.f32.mrb[0].mxu0
      %v1116 = vadd.f32 %v907, %v1115
      %v1117 = vpop.f32.mrb[0].mxu0
      %1118 = vmatprep.mubr.bf16.mxu0 0
      %1119 = vmatmul.mubr.bf16.gmra.mrb[0].mxu0 %v561
      %v1120 = vpop.f32.mrb[0].mxu0
      %v1121 = vadd.f32 %v912, %v1120
      %v1122 = vpop.f32.mrb[0].mxu0
      %v1123 = vpop.f32.mrb[0].mxu0
      %v1124 = vadd.f32 %v915, %v1123
      %v1125 = vpop.f32.mrb[0].mxu0
      %1126 = vmatprep.mubr.bf16.mxu0 0
      %1127 = vmatmul.mubr.bf16.gmra.mrb[0].mxu0 %v562
      %v1128 = vpop.f32.mrb[0].mxu0
      %v1129 = vadd.f32 %v920, %v1128
      %v1130 = vpop.f32.mrb[0].mxu0
      %v1131 = vpop.f32.mrb[0].mxu0
      %v1132 = vadd.f32 %v923, %v1131
      %v1133 = vpop.f32.mrb[0].mxu0
      %1134 = vmatprep.mubr.bf16.mxu0 0
      %1135 = vmatmul.mubr.bf16.gmra.mrb[0].mxu0 %v563
      %v1136 = vpop.f32.mrb[0].mxu0
      %v1137 = vadd.f32 %v928, %v1136
      %v1138 = vpop.f32.mrb[0].mxu0
      %v1139 = vpop.f32.mrb[0].mxu0
      %v1140 = vadd.f32 %v931, %v1139
      %v1141 = vpop.f32.mrb[0].mxu0
      %1142 = vmatprep.mubr.bf16.mxu0 0
      %1143 = vmatmul.mubr.bf16.gmra.mrb[0].mxu0 %v564
      %v1144 = vpop.f32.mrb[0].mxu0
      %v1145 = vadd.f32 %v936, %v1144
      %v1146 = vpop.f32.mrb[0].mxu0
      %v1147 = vpop.f32.mrb[0].mxu0
      %v1148 = vadd.f32 %v939, %v1147
      %v1149 = vpop.f32.mrb[0].mxu0
      %1150 = vmatprep.mubr.bf16.mxu0 0
      %1151 = vmatmul.mubr.bf16.gmra.mrb[0].mxu0 %v565
      %v1152 = vpop.f32.mrb[0].mxu0
      %v1153 = vadd.f32 %v944, %v1152
      %v1154 = vpop.f32.mrb[0].mxu0
      %v1155 = vpop.f32.mrb[0].mxu0
      %v1156 = vadd.f32 %v947, %v1155
      %v1157 = vpop.f32.mrb[0].mxu0
      %1158 = vmatprep.mubr.bf16.mxu0 0
      %1159 = vmatmul.mubr.bf16.gmra.mrb[0].mxu0 %v566
      %v1160 = vpop.f32.mrb[0].mxu0
      %v1161 = vadd.f32 %v952, %v1160
      %v1162 = vpop.f32.mrb[0].mxu0
      %v1163 = vpop.f32.mrb[0].mxu0
      %v1164 = vadd.f32 %v955, %v1163
      %v1165 = vpop.f32.mrb[0].mxu0
      %1166 = vmatprep.mubr.bf16.mxu0 0
      %1167 = vmatmul.mubr.bf16.gmra.mrb[0].mxu0 %v567
      %v1168 = vpop.f32.mrb[0].mxu0
      %v1169 = vadd.f32 %v960, %v1168
      %v1170 = vpop.f32.mrb[0].mxu0
      %v1171 = vpop.f32.mrb[0].mxu0
      %v1172 = vadd.f32 %v963, %v1171
      %v1173 = vpop.f32.mrb[0].mxu0
      %1174 = vmatprep.mubr.bf16.mxu0 0
      %1175 = vmatmul.mubr.bf16.gmra.mrb[0].mxu0 %v568
      %v1176 = vpop.f32.mrb[0].mxu0
      %v1177 = vadd.f32 %v968, %v1176
      %v1178 = vpop.f32.mrb[0].mxu0
      %v1179 = vpop.f32.mrb[0].mxu0
      %v1180 = vadd.f32 %v971, %v1179
      %v1181 = vpop.f32.mrb[0].mxu0
      %1182 = vmatprep.mubr.bf16.mxu0 0
      %1183 = vmatmul.mubr.bf16.gmra.mrb[0].mxu0 %v569
      %v1184 = vpop.f32.mrb[0].mxu0
      %v1185 = vadd.f32 %v976, %v1184
      %v1186 = vpop.f32.mrb[0].mxu0
      %v1187 = vpop.f32.mrb[0].mxu0
      %v1188 = vadd.f32 %v979, %v1187
      %v1189 = vpop.f32.mrb[0].mxu0
      %1190 = vmatprep.mubr.bf16.mxu0 0
      %1191 = vmatmul.mubr.bf16.gmra.mrb[0].mxu0 %v570
      %v1192 = vpop.f32.mrb[0].mxu0
      %v1193 = vadd.f32 %v984, %v1192
      %v1194 = vpop.f32.mrb[0].mxu0
      %v1195 = vpop.f32.mrb[0].mxu0
      %v1196 = vadd.f32 %v987, %v1195
      %v1197 = vpop.f32.mrb[0].mxu0
      %1198 = vdwg.mxu0
      %vm1199 = vcmask 1045504
      %v1200 = vrot.slane %v501, 2
      %v1201 = vrot.slane %v502, 2
      %v1202 = vsel %vm1199, %v1200, %v1201
      %v1203 = vrot.slane %v503, 2
      %v1204 = vsel %vm1199, %v1201, %v1203
      %v1205 = vrot.slane %v504, 2
      %v1206 = vrot.slane %v505, 2
      %v1207 = vsel %vm1199, %v1205, %v1206
      %v1208 = vrot.slane %v506, 2
      %v1209 = vsel %vm1199, %v1206, %v1208
      %v1210 = vrot.slane %v507, 2
      %v1211 = vrot.slane %v508, 2
      %v1212 = vsel %vm1199, %v1210, %v1211
      %v1213 = vrot.slane %v509, 2
      %v1214 = vsel %vm1199, %v1211, %v1213
      %v1215 = vrot.slane %v510, 2
      %v1216 = vrot.slane %v511, 2
      %v1217 = vsel %vm1199, %v1215, %v1216
      %v1218 = vrot.slane %v512, 2
      %v1219 = vsel %vm1199, %v1216, %v1218
      %v1220 = vrot.slane %v513, 2
      %v1221 = vrot.slane %v514, 2
      %v1222 = vsel %vm1199, %v1220, %v1221
      %v1223 = vrot.slane %v515, 2
      %v1224 = vsel %vm1199, %v1221, %v1223
      %v1225 = vrot.slane %v516, 2
      %v1226 = vrot.slane %v517, 2
      %v1227 = vsel %vm1199, %v1225, %v1226
      %v1228 = vrot.slane %v518, 2
      %v1229 = vsel %vm1199, %v1226, %v1228
      %v1230 = vrot.slane %v519, 2
      %v1231 = vrot.slane %v520, 2
      %v1232 = vsel %vm1199, %v1230, %v1231
      %v1233 = vrot.slane %v521, 2
      %v1234 = vsel %vm1199, %v1231, %v1233
      %v1235 = vrot.slane %v522, 2
      %v1236 = vrot.slane %v523, 2
      %v1237 = vsel %vm1199, %v1235, %v1236
      %v1238 = vrot.slane %v524, 2
      %v1239 = vsel %vm1199, %v1236, %v1238
      %v1240 = vrot.slane %v525, 2
      %v1241 = vrot.slane %v526, 2
      %v1242 = vsel %vm1199, %v1240, %v1241
      %v1243 = vrot.slane %v527, 2
      %v1244 = vsel %vm1199, %v1241, %v1243
      %v1245 = vrot.slane %v528, 2
      %v1246 = vrot.slane %v529, 2
      %v1247 = vsel %vm1199, %v1245, %v1246
      %v1248 = vrot.slane %v530, 2
      %v1249 = vsel %vm1199, %v1246, %v1248
      %v1250 = vrot.slane %v531, 2
      %v1251 = vrot.slane %v532, 2
      %v1252 = vsel %vm1199, %v1250, %v1251
      %v1253 = vrot.slane %v533, 2
      %v1254 = vsel %vm1199, %v1251, %v1253
      %v1255 = vrot.slane %v534, 2
      %v1256 = vrot.slane %v535, 2
      %v1257 = vsel %vm1199, %v1255, %v1256
      %v1258 = vrot.slane %v536, 2
      %v1259 = vsel %vm1199, %v1256, %v1258
      %v1260 = vrot.slane %v537, 2
      %v1261 = vrot.slane %v538, 2
      %v1262 = vsel %vm1199, %v1260, %v1261
      %v1263 = vrot.slane %v539, 2
      %v1264 = vsel %vm1199, %v1261, %v1263
      %v1265 = vrot.slane %v540, 2
      %v1266 = vrot.slane %v541, 2
      %v1267 = vsel %vm1199, %v1265, %v1266
      %v1268 = vrot.slane %v542, 2
      %v1269 = vsel %vm1199, %v1266, %v1268
      %v1270 = vrot.slane %v543, 2
      %v1271 = vrot.slane %v544, 2
      %v1272 = vsel %vm1199, %v1270, %v1271
      %v1273 = vrot.slane %v545, 2
      %v1274 = vsel %vm1199, %v1271, %v1273
      %v1275 = vrot.slane %v546, 2
      %v1276 = vrot.slane %v547, 2
      %v1277 = vsel %vm1199, %v1275, %v1276
      %v1278 = vrot.slane %v548, 2
      %v1279 = vsel %vm1199, %v1276, %v1278
      %v1312 = vpack.c.bf16 %v1204, %v1202
      %v1313 = vpack.c.bf16 %v1209, %v1207
      %v1314 = vpack.c.bf16 %v1214, %v1212
      %v1315 = vpack.c.bf16 %v1219, %v1217
      %v1316 = vpack.c.bf16 %v1224, %v1222
      %v1317 = vpack.c.bf16 %v1229, %v1227
      %v1318 = vpack.c.bf16 %v1234, %v1232
      %v1319 = vpack.c.bf16 %v1239, %v1237
      %v1320 = vpack.c.bf16 %v1244, %v1242
      %v1321 = vpack.c.bf16 %v1249, %v1247
      %v1322 = vpack.c.bf16 %v1254, %v1252
      %v1323 = vpack.c.bf16 %v1259, %v1257
      %v1324 = vpack.c.bf16 %v1264, %v1262
      %v1325 = vpack.c.bf16 %v1269, %v1267
      %v1326 = vpack.c.bf16 %v1274, %v1272
      %v1327 = vpack.c.bf16 %v1279, %v1277
      %s1328 = scalar_lea.vmem %s3, 128
      %v1329 = vld [vmem:[%s1328] sm:$0xf]
      %v1330 = vld [vmem:[%s1328 + $0x4] sm:$0xf]
      %v1331 = vld [vmem:[%s1328 + $0x8] sm:$0xf]
      %v1332 = vld [vmem:[%s1328 + $0xc] sm:$0xf]
      %v1333 = vld [vmem:[%s1328 + $0x10] sm:$0xf]
      %v1334 = vld [vmem:[%s1328 + $0x14] sm:$0xf]
      %v1335 = vld [vmem:[%s1328 + $0x18] sm:$0xf]
      %v1336 = vld [vmem:[%s1328 + $0x1c] sm:$0xf]
      %v1337 = vld [vmem:[%s1328 + $0x20] sm:$0xf]
      %v1338 = vld [vmem:[%s1328 + $0x24] sm:$0xf]
      %v1339 = vld [vmem:[%s1328 + $0x28] sm:$0xf]
      %v1340 = vld [vmem:[%s1328 + $0x2c] sm:$0xf]
      %v1341 = vld [vmem:[%s1328 + $0x30] sm:$0xf]
      %v1342 = vld [vmem:[%s1328 + $0x34] sm:$0xf]
      %v1343 = vld [vmem:[%s1328 + $0x38] sm:$0xf]
      %v1344 = vld [vmem:[%s1328 + $0x3c] sm:$0xf]
      %v1361 = vunpack.c.l.b16 %v1329
      %v1362 = vunpack.c.l.b16 %v1330
      %v1363 = vunpack.c.l.b16 %v1331
      %v1364 = vunpack.c.l.b16 %v1332
      %v1365 = vunpack.c.l.b16 %v1333
      %v1366 = vunpack.c.l.b16 %v1334
      %v1367 = vunpack.c.l.b16 %v1335
      %v1368 = vunpack.c.l.b16 %v1336
      %v1369 = vunpack.c.l.b16 %v1337
      %v1370 = vunpack.c.l.b16 %v1338
      %v1371 = vunpack.c.l.b16 %v1339
      %v1372 = vunpack.c.l.b16 %v1340
      %v1373 = vunpack.c.l.b16 %v1341
      %v1374 = vunpack.c.l.b16 %v1342
      %v1375 = vunpack.c.l.b16 %v1343
      %v1376 = vunpack.c.l.b16 %v1344
      %v1377 = vpack.c.b16 %v1362, %v1361
      %v1378 = vpack.c.b16 %v1364, %v1363
      %v1379 = vpack.c.b16 %v1366, %v1365
      %v1380 = vpack.c.b16 %v1368, %v1367
      %v1381 = vpack.c.b16 %v1370, %v1369
      %v1382 = vpack.c.b16 %v1372, %v1371
      %v1383 = vpack.c.b16 %v1374, %v1373
      %v1384 = vpack.c.b16 %v1376, %v1375
      %1393 = vmatprep.subr.bf16.mxu0 0
      %1394 = vmatpush1.bf16.msra.mxu0 %v1377
      %1395 = vmatprep.subr.bf16.mxu0 0
      %1396 = vmatpush1.bf16.msra.mxu0 %v1378
      %1397 = vmatprep.subr.bf16.mxu0 0
      %1398 = vmatpush1.bf16.msra.mxu0 %v1379
      %1399 = vmatprep.subr.bf16.mxu0 0
      %1400 = vmatpush1.bf16.msra.mxu0 %v1380
      %1401 = vmatprep.subr.bf16.mxu0 0
      %1402 = vmatpush1.bf16.msra.mxu0 %v1381
      %1403 = vmatprep.subr.bf16.mxu0 0
      %1404 = vmatpush1.bf16.msra.mxu0 %v1382
      %1405 = vmatprep.subr.bf16.mxu0 0
      %1406 = vmatpush1.bf16.msra.mxu0 %v1383
      %1407 = vmatprep.subr.bf16.mxu0 0
      %1408 = vmatpush1.bf16.msra.mxu0 %v1384
      %1409 = vmatprep.subr.bf16.mxu0 0
      %1410 = vmatpush1.bf16.msra.mxu0 0
      %1411 = vmatprep.subr.bf16.mxu0 0
      %1412 = vmatpush1.bf16.msra.mxu0 0
      %1413 = vmatprep.subr.bf16.mxu0 0
      %1414 = vmatpush1.bf16.msra.mxu0 0
      %1415 = vmatprep.subr.bf16.mxu0 0
      %1416 = vmatpush1.bf16.msra.mxu0 0
      %1417 = vmatprep.subr.bf16.mxu0 0
      %1418 = vmatpush1.bf16.msra.mxu0 0
      %1419 = vmatprep.subr.bf16.mxu0 0
      %1420 = vmatpush1.bf16.msra.mxu0 0
      %1421 = vmatprep.subr.bf16.mxu0 0
      %1422 = vmatpush1.bf16.msra.mxu0 0
      %1423 = vmatprep.subr.bf16.mxu0 0
      %1424 = vmatpush1.bf16.msra.mxu0 0
      %1425 = vmatprep.mubr.bf16.mxu0 0
      %1426 = vmatmul.mubr.bf16.gmra.mrb[0].mxu0 %v1312
      %v1427 = vpop.f32.mrb[0].mxu0
      %v1428 = vadd.f32 0.0, %v1427
      %v1429 = vpop.f32.mrb[0].mxu0
      %v1430 = vpop.f32.mrb[0].mxu0
      %v1431 = vadd.f32 0.0, %v1430
      %v1432 = vpop.f32.mrb[0].mxu0
      %1433 = vmatprep.mubr.bf16.mxu0 0
      %1434 = vmatmul.mubr.bf16.gmra.mrb[0].mxu0 %v1313
      %v1435 = vpop.f32.mrb[0].mxu0
      %v1436 = vadd.f32 0.0, %v1435
      %v1437 = vpop.f32.mrb[0].mxu0
      %v1438 = vpop.f32.mrb[0].mxu0
      %v1439 = vadd.f32 0.0, %v1438
      %v1440 = vpop.f32.mrb[0].mxu0
      %1441 = vmatprep.mubr.bf16.mxu0 0
      %1442 = vmatmul.mubr.bf16.gmra.mrb[0].mxu0 %v1314
      %v1443 = vpop.f32.mrb[0].mxu0
      %v1444 = vadd.f32 0.0, %v1443
      %v1445 = vpop.f32.mrb[0].mxu0
      %v1446 = vpop.f32.mrb[0].mxu0
      %v1447 = vadd.f32 0.0, %v1446
      %v1448 = vpop.f32.mrb[0].mxu0
      %1449 = vmatprep.mubr.bf16.mxu0 0
      %1450 = vmatmul.mubr.bf16.gmra.mrb[0].mxu0 %v1315
      %v1451 = vpop.f32.mrb[0].mxu0
      %v1452 = vadd.f32 0.0, %v1451
      %v1453 = vpop.f32.mrb[0].mxu0
      %v1454 = vpop.f32.mrb[0].mxu0
      %v1455 = vadd.f32 0.0, %v1454
      %v1456 = vpop.f32.mrb[0].mxu0
      %1457 = vmatprep.mubr.bf16.mxu0 0
      %1458 = vmatmul.mubr.bf16.gmra.mrb[0].mxu0 %v1316
      %v1459 = vpop.f32.mrb[0].mxu0
      %v1460 = vadd.f32 0.0, %v1459
      %v1461 = vpop.f32.mrb[0].mxu0
      %v1462 = vpop.f32.mrb[0].mxu0
      %v1463 = vadd.f32 0.0, %v1462
      %v1464 = vpop.f32.mrb[0].mxu0
      %1465 = vmatprep.mubr.bf16.mxu0 0
      %1466 = vmatmul.mubr.bf16.gmra.mrb[0].mxu0 %v1317
      %v1467 = vpop.f32.mrb[0].mxu0
      %v1468 = vadd.f32 0.0, %v1467
      %v1469 = vpop.f32.mrb[0].mxu0
      %v1470 = vpop.f32.mrb[0].mxu0
      %v1471 = vadd.f32 0.0, %v1470
      %v1472 = vpop.f32.mrb[0].mxu0
      %1473 = vmatprep.mubr.bf16.mxu0 0
      %1474 = vmatmul.mubr.bf16.gmra.mrb[0].mxu0 %v1318
      %v1475 = vpop.f32.mrb[0].mxu0
      %v1476 = vadd.f32 0.0, %v1475
      %v1477 = vpop.f32.mrb[0].mxu0
      %v1478 = vpop.f32.mrb[0].mxu0
      %v1479 = vadd.f32 0.0, %v1478
      %v1480 = vpop.f32.mrb[0].mxu0
      %1481 = vmatprep.mubr.bf16.mxu0 0
      %1482 = vmatmul.mubr.bf16.gmra.mrb[0].mxu0 %v1319
      %v1483 = vpop.f32.mrb[0].mxu0
      %v1484 = vadd.f32 0.0, %v1483
      %v1485 = vpop.f32.mrb[0].mxu0
      %v1486 = vpop.f32.mrb[0].mxu0
      %v1487 = vadd.f32 0.0, %v1486
      %v1488 = vpop.f32.mrb[0].mxu0
      %1489 = vmatprep.mubr.bf16.mxu0 0
      %1490 = vmatmul.mubr.bf16.gmra.mrb[0].mxu0 %v1320
      %v1491 = vpop.f32.mrb[0].mxu0
      %v1492 = vadd.f32 0.0, %v1491
      %v1493 = vpop.f32.mrb[0].mxu0
      %v1494 = vpop.f32.mrb[0].mxu0
      %v1495 = vadd.f32 0.0, %v1494
      %v1496 = vpop.f32.mrb[0].mxu0
      %1497 = vmatprep.mubr.bf16.mxu0 0
      %1498 = vmatmul.mubr.bf16.gmra.mrb[0].mxu0 %v1321
      %v1499 = vpop.f32.mrb[0].mxu0
      %v1500 = vadd.f32 0.0, %v1499
      %v1501 = vpop.f32.mrb[0].mxu0
      %v1502 = vpop.f32.mrb[0].mxu0
      %v1503 = vadd.f32 0.0, %v1502
      %v1504 = vpop.f32.mrb[0].mxu0
      %1505 = vmatprep.mubr.bf16.mxu0 0
      %1506 = vmatmul.mubr.bf16.gmra.mrb[0].mxu0 %v1322
      %v1507 = vpop.f32.mrb[0].mxu0
      %v1508 = vadd.f32 0.0, %v1507
      %v1509 = vpop.f32.mrb[0].mxu0
      %v1510 = vpop.f32.mrb[0].mxu0
      %v1511 = vadd.f32 0.0, %v1510
      %v1512 = vpop.f32.mrb[0].mxu0
      %1513 = vmatprep.mubr.bf16.mxu0 0
      %1514 = vmatmul.mubr.bf16.gmra.mrb[0].mxu0 %v1323
      %v1515 = vpop.f32.mrb[0].mxu0
      %v1516 = vadd.f32 0.0, %v1515
      %v1517 = vpop.f32.mrb[0].mxu0
      %v1518 = vpop.f32.mrb[0].mxu0
      %v1519 = vadd.f32 0.0, %v1518
      %v1520 = vpop.f32.mrb[0].mxu0
      %1521 = vmatprep.mubr.bf16.mxu0 0
      %1522 = vmatmul.mubr.bf16.gmra.mrb[0].mxu0 %v1324
      %v1523 = vpop.f32.mrb[0].mxu0
      %v1524 = vadd.f32 0.0, %v1523
      %v1525 = vpop.f32.mrb[0].mxu0
      %v1526 = vpop.f32.mrb[0].mxu0
      %v1527 = vadd.f32 0.0, %v1526
      %v1528 = vpop.f32.mrb[0].mxu0
      %1529 = vmatprep.mubr.bf16.mxu0 0
      %1530 = vmatmul.mubr.bf16.gmra.mrb[0].mxu0 %v1325
      %v1531 = vpop.f32.mrb[0].mxu0
      %v1532 = vadd.f32 0.0, %v1531
      %v1533 = vpop.f32.mrb[0].mxu0
      %v1534 = vpop.f32.mrb[0].mxu0
      %v1535 = vadd.f32 0.0, %v1534
      %v1536 = vpop.f32.mrb[0].mxu0
      %1537 = vmatprep.mubr.bf16.mxu0 0
      %1538 = vmatmul.mubr.bf16.gmra.mrb[0].mxu0 %v1326
      %v1539 = vpop.f32.mrb[0].mxu0
      %v1540 = vadd.f32 0.0, %v1539
      %v1541 = vpop.f32.mrb[0].mxu0
      %v1542 = vpop.f32.mrb[0].mxu0
      %v1543 = vadd.f32 0.0, %v1542
      %v1544 = vpop.f32.mrb[0].mxu0
      %1545 = vmatprep.mubr.bf16.mxu0 0
      %1546 = vmatmul.mubr.bf16.gmra.mrb[0].mxu0 %v1327
      %v1547 = vpop.f32.mrb[0].mxu0
      %v1548 = vadd.f32 0.0, %v1547
      %v1549 = vpop.f32.mrb[0].mxu0
      %v1550 = vpop.f32.mrb[0].mxu0
      %v1551 = vadd.f32 0.0, %v1550
      %v1552 = vpop.f32.mrb[0].mxu0
      %1553 = vdwg.mxu0
      %v1554 = vadd.f32 %v1073, %v1428
      %v1555 = vadd.f32 %v1076, %v1431
      %v1556 = vadd.f32 %v1081, %v1436
      %v1557 = vadd.f32 %v1084, %v1439
      %v1558 = vadd.f32 %v1089, %v1444
      %v1559 = vadd.f32 %v1092, %v1447
      %v1560 = vadd.f32 %v1097, %v1452
      %v1561 = vadd.f32 %v1100, %v1455
      %v1562 = vadd.f32 %v1105, %v1460
      %v1563 = vadd.f32 %v1108, %v1463
      %v1564 = vadd.f32 %v1113, %v1468
      %v1565 = vadd.f32 %v1116, %v1471
      %v1566 = vadd.f32 %v1121, %v1476
      %v1567 = vadd.f32 %v1124, %v1479
      %v1568 = vadd.f32 %v1129, %v1484
      %v1569 = vadd.f32 %v1132, %v1487
      %v1570 = vadd.f32 %v1137, %v1492
      %v1571 = vadd.f32 %v1140, %v1495
      %v1572 = vadd.f32 %v1145, %v1500
      %v1573 = vadd.f32 %v1148, %v1503
      %v1574 = vadd.f32 %v1153, %v1508
      %v1575 = vadd.f32 %v1156, %v1511
      %v1576 = vadd.f32 %v1161, %v1516
      %v1577 = vadd.f32 %v1164, %v1519
      %v1578 = vadd.f32 %v1169, %v1524
      %v1579 = vadd.f32 %v1172, %v1527
      %v1580 = vadd.f32 %v1177, %v1532
      %v1581 = vadd.f32 %v1180, %v1535
      %v1582 = vadd.f32 %v1185, %v1540
      %v1583 = vadd.f32 %v1188, %v1543
      %v1584 = vadd.f32 %v1193, %v1548
      %v1585 = vadd.f32 %v1196, %v1551
      %v1586 = vpack.c.bf16 %v550, %v549
      %s1587 = scalar_lea.vmem %s3, 192
      %v1588 = vld [vmem:[%s1587] sm:$0xf]
      %v1589 = vld [vmem:[%s1587 + $0x4] sm:$0xf]
      %v1590 = vld [vmem:[%s1587 + $0x8] sm:$0xf]
      %v1591 = vld [vmem:[%s1587 + $0xc] sm:$0xf]
      %v1592 = vld [vmem:[%s1587 + $0x10] sm:$0xf]
      %v1593 = vld [vmem:[%s1587 + $0x14] sm:$0xf]
      %v1594 = vld [vmem:[%s1587 + $0x18] sm:$0xf]
      %v1595 = vld [vmem:[%s1587 + $0x1c] sm:$0xf]
      %v1596 = vld [vmem:[%s1587 + $0x20] sm:$0xf]
      %v1597 = vld [vmem:[%s1587 + $0x24] sm:$0xf]
      %v1598 = vld [vmem:[%s1587 + $0x28] sm:$0xf]
      %v1599 = vld [vmem:[%s1587 + $0x2c] sm:$0xf]
      %v1600 = vld [vmem:[%s1587 + $0x30] sm:$0xf]
      %v1601 = vld [vmem:[%s1587 + $0x34] sm:$0xf]
      %v1602 = vld [vmem:[%s1587 + $0x38] sm:$0xf]
      %v1603 = vld [vmem:[%s1587 + $0x3c] sm:$0xf]
      %v1620 = vunpack.c.l.b16 %v1588
      %v1621 = vunpack.c.l.b16 %v1589
      %v1622 = vunpack.c.l.b16 %v1590
      %v1623 = vunpack.c.l.b16 %v1591
      %v1624 = vunpack.c.l.b16 %v1592
      %v1625 = vunpack.c.l.b16 %v1593
      %v1626 = vunpack.c.l.b16 %v1594
      %v1627 = vunpack.c.l.b16 %v1595
      %v1628 = vunpack.c.l.b16 %v1596
      %v1629 = vunpack.c.l.b16 %v1597
      %v1630 = vunpack.c.l.b16 %v1598
      %v1631 = vunpack.c.l.b16 %v1599
      %v1632 = vunpack.c.l.b16 %v1600
      %v1633 = vunpack.c.l.b16 %v1601
      %v1634 = vunpack.c.l.b16 %v1602
      %v1635 = vunpack.c.l.b16 %v1603
      %v1636 = vpack.c.b16 %v1621, %v1620
      %v1637 = vpack.c.b16 %v1623, %v1622
      %v1638 = vpack.c.b16 %v1625, %v1624
      %v1639 = vpack.c.b16 %v1627, %v1626
      %v1640 = vpack.c.b16 %v1629, %v1628
      %v1641 = vpack.c.b16 %v1631, %v1630
      %v1642 = vpack.c.b16 %v1633, %v1632
      %v1643 = vpack.c.b16 %v1635, %v1634
      %1652 = vmatprep.subr.bf16.mxu0 0
      %1653 = vmatpush1.bf16.msra.mxu0 %v1636
      %1654 = vmatprep.subr.bf16.mxu0 0
      %1655 = vmatpush1.bf16.msra.mxu0 %v1637
      %1656 = vmatprep.subr.bf16.mxu0 0
      %1657 = vmatpush1.bf16.msra.mxu0 %v1638
      %1658 = vmatprep.subr.bf16.mxu0 0
      %1659 = vmatpush1.bf16.msra.mxu0 %v1639
      %1660 = vmatprep.subr.bf16.mxu0 0
      %1661 = vmatpush1.bf16.msra.mxu0 %v1640
      %1662 = vmatprep.subr.bf16.mxu0 0
      %1663 = vmatpush1.bf16.msra.mxu0 %v1641
      %1664 = vmatprep.subr.bf16.mxu0 0
      %1665 = vmatpush1.bf16.msra.mxu0 %v1642
      %1666 = vmatprep.subr.bf16.mxu0 0
      %1667 = vmatpush1.bf16.msra.mxu0 %v1643
      %1668 = vmatprep.subr.bf16.mxu0 0
      %1669 = vmatpush1.bf16.msra.mxu0 0
      %1670 = vmatprep.subr.bf16.mxu0 0
      %1671 = vmatpush1.bf16.msra.mxu0 0
      %1672 = vmatprep.subr.bf16.mxu0 0
      %1673 = vmatpush1.bf16.msra.mxu0 0
      %1674 = vmatprep.subr.bf16.mxu0 0
      %1675 = vmatpush1.bf16.msra.mxu0 0
      %1676 = vmatprep.subr.bf16.mxu0 0
      %1677 = vmatpush1.bf16.msra.mxu0 0
      %1678 = vmatprep.subr.bf16.mxu0 0
      %1679 = vmatpush1.bf16.msra.mxu0 0
      %1680 = vmatprep.subr.bf16.mxu0 0
      %1681 = vmatpush1.bf16.msra.mxu0 0
      %1682 = vmatprep.subr.bf16.mxu0 0
      %1683 = vmatpush1.bf16.msra.mxu0 0
      %1684 = vmatprep.mubr.bf16.mxu0 0
      %1685 = vmatmul.mubr.bf16.gmra.mrb[0].mxu0 %v556
      %v1686 = vpop.f32.mrb[0].mxu0
      %v1687 = vadd.f32 0.0, %v1686
      %v1688 = vpop.f32.mrb[0].mxu0
      %v1689 = vpop.f32.mrb[0].mxu0
      %v1690 = vadd.f32 0.0, %v1689
      %v1691 = vpop.f32.mrb[0].mxu0
      %1692 = vmatprep.mubr.bf16.mxu0 0
      %1693 = vmatmul.mubr.bf16.gmra.mrb[0].mxu0 %v557
      %v1694 = vpop.f32.mrb[0].mxu0
      %v1695 = vadd.f32 0.0, %v1694
      %v1696 = vpop.f32.mrb[0].mxu0
      %v1697 = vpop.f32.mrb[0].mxu0
      %v1698 = vadd.f32 0.0, %v1697
      %v1699 = vpop.f32.mrb[0].mxu0
      %1700 = vmatprep.mubr.bf16.mxu0 0
      %1701 = vmatmul.mubr.bf16.gmra.mrb[0].mxu0 %v558
      %v1702 = vpop.f32.mrb[0].mxu0
      %v1703 = vadd.f32 0.0, %v1702
      %v1704 = vpop.f32.mrb[0].mxu0
      %v1705 = vpop.f32.mrb[0].mxu0
      %v1706 = vadd.f32 0.0, %v1705
      %v1707 = vpop.f32.mrb[0].mxu0
      %1708 = vmatprep.mubr.bf16.mxu0 0
      %1709 = vmatmul.mubr.bf16.gmra.mrb[0].mxu0 %v559
      %v1710 = vpop.f32.mrb[0].mxu0
      %v1711 = vadd.f32 0.0, %v1710
      %v1712 = vpop.f32.mrb[0].mxu0
      %v1713 = vpop.f32.mrb[0].mxu0
      %v1714 = vadd.f32 0.0, %v1713
      %v1715 = vpop.f32.mrb[0].mxu0
      %1716 = vmatprep.mubr.bf16.mxu0 0
      %1717 = vmatmul.mubr.bf16.gmra.mrb[0].mxu0 %v560
      %v1718 = vpop.f32.mrb[0].mxu0
      %v1719 = vadd.f32 0.0, %v1718
      %v1720 = vpop.f32.mrb[0].mxu0
      %v1721 = vpop.f32.mrb[0].mxu0
      %v1722 = vadd.f32 0.0, %v1721
      %v1723 = vpop.f32.mrb[0].mxu0
      %1724 = vmatprep.mubr.bf16.mxu0 0
      %1725 = vmatmul.mubr.bf16.gmra.mrb[0].mxu0 %v561
      %v1726 = vpop.f32.mrb[0].mxu0
      %v1727 = vadd.f32 0.0, %v1726
      %v1728 = vpop.f32.mrb[0].mxu0
      %v1729 = vpop.f32.mrb[0].mxu0
      %v1730 = vadd.f32 0.0, %v1729
      %v1731 = vpop.f32.mrb[0].mxu0
      %1732 = vmatprep.mubr.bf16.mxu0 0
      %1733 = vmatmul.mubr.bf16.gmra.mrb[0].mxu0 %v562
      %v1734 = vpop.f32.mrb[0].mxu0
      %v1735 = vadd.f32 0.0, %v1734
      %v1736 = vpop.f32.mrb[0].mxu0
      %v1737 = vpop.f32.mrb[0].mxu0
      %v1738 = vadd.f32 0.0, %v1737
      %v1739 = vpop.f32.mrb[0].mxu0
      %1740 = vmatprep.mubr.bf16.mxu0 0
      %1741 = vmatmul.mubr.bf16.gmra.mrb[0].mxu0 %v563
      %v1742 = vpop.f32.mrb[0].mxu0
      %v1743 = vadd.f32 0.0, %v1742
      %v1744 = vpop.f32.mrb[0].mxu0
      %v1745 = vpop.f32.mrb[0].mxu0
      %v1746 = vadd.f32 0.0, %v1745
      %v1747 = vpop.f32.mrb[0].mxu0
      %1748 = vmatprep.mubr.bf16.mxu0 0
      %1749 = vmatmul.mubr.bf16.gmra.mrb[0].mxu0 %v564
      %v1750 = vpop.f32.mrb[0].mxu0
      %v1751 = vadd.f32 0.0, %v1750
      %v1752 = vpop.f32.mrb[0].mxu0
      %v1753 = vpop.f32.mrb[0].mxu0
      %v1754 = vadd.f32 0.0, %v1753
      %v1755 = vpop.f32.mrb[0].mxu0
      %1756 = vmatprep.mubr.bf16.mxu0 0
      %1757 = vmatmul.mubr.bf16.gmra.mrb[0].mxu0 %v565
      %v1758 = vpop.f32.mrb[0].mxu0
      %v1759 = vadd.f32 0.0, %v1758
      %v1760 = vpop.f32.mrb[0].mxu0
      %v1761 = vpop.f32.mrb[0].mxu0
      %v1762 = vadd.f32 0.0, %v1761
      %v1763 = vpop.f32.mrb[0].mxu0
      %1764 = vmatprep.mubr.bf16.mxu0 0
      %1765 = vmatmul.mubr.bf16.gmra.mrb[0].mxu0 %v566
      %v1766 = vpop.f32.mrb[0].mxu0
      %v1767 = vadd.f32 0.0, %v1766
      %v1768 = vpop.f32.mrb[0].mxu0
      %v1769 = vpop.f32.mrb[0].mxu0
      %v1770 = vadd.f32 0.0, %v1769
      %v1771 = vpop.f32.mrb[0].mxu0
      %1772 = vmatprep.mubr.bf16.mxu0 0
      %1773 = vmatmul.mubr.bf16.gmra.mrb[0].mxu0 %v567
      %v1774 = vpop.f32.mrb[0].mxu0
      %v1775 = vadd.f32 0.0, %v1774
      %v1776 = vpop.f32.mrb[0].mxu0
      %v1777 = vpop.f32.mrb[0].mxu0
      %v1778 = vadd.f32 0.0, %v1777
      %v1779 = vpop.f32.mrb[0].mxu0
      %1780 = vmatprep.mubr.bf16.mxu0 0
      %1781 = vmatmul.mubr.bf16.gmra.mrb[0].mxu0 %v568
      %v1782 = vpop.f32.mrb[0].mxu0
      %v1783 = vadd.f32 0.0, %v1782
      %v1784 = vpop.f32.mrb[0].mxu0
      %v1785 = vpop.f32.mrb[0].mxu0
      %v1786 = vadd.f32 0.0, %v1785
      %v1787 = vpop.f32.mrb[0].mxu0
      %1788 = vmatprep.mubr.bf16.mxu0 0
      %1789 = vmatmul.mubr.bf16.gmra.mrb[0].mxu0 %v569
      %v1790 = vpop.f32.mrb[0].mxu0
      %v1791 = vadd.f32 0.0, %v1790
      %v1792 = vpop.f32.mrb[0].mxu0
      %v1793 = vpop.f32.mrb[0].mxu0
      %v1794 = vadd.f32 0.0, %v1793
      %v1795 = vpop.f32.mrb[0].mxu0
      %1796 = vmatprep.mubr.bf16.mxu0 0
      %1797 = vmatmul.mubr.bf16.gmra.mrb[0].mxu0 %v570
      %v1798 = vpop.f32.mrb[0].mxu0
      %v1799 = vadd.f32 0.0, %v1798
      %v1800 = vpop.f32.mrb[0].mxu0
      %v1801 = vpop.f32.mrb[0].mxu0
      %v1802 = vadd.f32 0.0, %v1801
      %v1803 = vpop.f32.mrb[0].mxu0
      %1804 = vmatprep.mubr.bf16.mxu0 0
      %1805 = vmatmul.mubr.bf16.gmra.mrb[0].mxu0 %v1586
      %v1806 = vpop.f32.mrb[0].mxu0
      %v1807 = vadd.f32 0.0, %v1806
      %v1808 = vpop.f32.mrb[0].mxu0
      %v1809 = vpop.f32.mrb[0].mxu0
      %v1810 = vadd.f32 0.0, %v1809
      %v1811 = vpop.f32.mrb[0].mxu0
      %1812 = vdwg.mxu0
      %v1813 = vadd.f32 %v1554, %v1687
      %v1814 = vadd.f32 %v1555, %v1690
      %v1815 = vadd.f32 %v1556, %v1695
      %v1816 = vadd.f32 %v1557, %v1698
      %v1817 = vadd.f32 %v1558, %v1703
      %v1818 = vadd.f32 %v1559, %v1706
      %v1819 = vadd.f32 %v1560, %v1711
      %v1820 = vadd.f32 %v1561, %v1714
      %v1821 = vadd.f32 %v1562, %v1719
      %v1822 = vadd.f32 %v1563, %v1722
      %v1823 = vadd.f32 %v1564, %v1727
      %v1824 = vadd.f32 %v1565, %v1730
      %v1825 = vadd.f32 %v1566, %v1735
      %v1826 = vadd.f32 %v1567, %v1738
      %v1827 = vadd.f32 %v1568, %v1743
      %v1828 = vadd.f32 %v1569, %v1746
      %v1829 = vadd.f32 %v1570, %v1751
      %v1830 = vadd.f32 %v1571, %v1754
      %v1831 = vadd.f32 %v1572, %v1759
      %v1832 = vadd.f32 %v1573, %v1762
      %v1833 = vadd.f32 %v1574, %v1767
      %v1834 = vadd.f32 %v1575, %v1770
      %v1835 = vadd.f32 %v1576, %v1775
      %v1836 = vadd.f32 %v1577, %v1778
      %v1837 = vadd.f32 %v1578, %v1783
      %v1838 = vadd.f32 %v1579, %v1786
      %v1839 = vadd.f32 %v1580, %v1791
      %v1840 = vadd.f32 %v1581, %v1794
      %v1841 = vadd.f32 %v1582, %v1799
      %v1842 = vadd.f32 %v1583, %v1802
      %v1843 = vadd.f32 %v1584, %v1807
      %v1844 = vadd.f32 %v1585, %v1810
      %v1848 = vrot.slane %v549, 1
      %v1849 = vrot.slane %v550, 1
      %v1850 = vsel %vm635, %v1848, %v1849
      %v1851 = vrot.slane %v551, 1
      %v1852 = vsel %vm635, %v1849, %v1851
      %v1855 = vpack.c.bf16 %v1852, %v1850
      %s1856 = scalar_lea.vmem %s3, 256
      %v1857 = vld [vmem:[%s1856] sm:$0xf]
      %v1858 = vld [vmem:[%s1856 + $0x4] sm:$0xf]
      %v1859 = vld [vmem:[%s1856 + $0x8] sm:$0xf]
      %v1860 = vld [vmem:[%s1856 + $0xc] sm:$0xf]
      %v1861 = vld [vmem:[%s1856 + $0x10] sm:$0xf]
      %v1862 = vld [vmem:[%s1856 + $0x14] sm:$0xf]
      %v1863 = vld [vmem:[%s1856 + $0x18] sm:$0xf]
      %v1864 = vld [vmem:[%s1856 + $0x1c] sm:$0xf]
      %v1865 = vld [vmem:[%s1856 + $0x20] sm:$0xf]
      %v1866 = vld [vmem:[%s1856 + $0x24] sm:$0xf]
      %v1867 = vld [vmem:[%s1856 + $0x28] sm:$0xf]
      %v1868 = vld [vmem:[%s1856 + $0x2c] sm:$0xf]
      %v1869 = vld [vmem:[%s1856 + $0x30] sm:$0xf]
      %v1870 = vld [vmem:[%s1856 + $0x34] sm:$0xf]
      %v1871 = vld [vmem:[%s1856 + $0x38] sm:$0xf]
      %v1872 = vld [vmem:[%s1856 + $0x3c] sm:$0xf]
      %v1889 = vunpack.c.l.b16 %v1857
      %v1890 = vunpack.c.l.b16 %v1858
      %v1891 = vunpack.c.l.b16 %v1859
      %v1892 = vunpack.c.l.b16 %v1860
      %v1893 = vunpack.c.l.b16 %v1861
      %v1894 = vunpack.c.l.b16 %v1862
      %v1895 = vunpack.c.l.b16 %v1863
      %v1896 = vunpack.c.l.b16 %v1864
      %v1897 = vunpack.c.l.b16 %v1865
      %v1898 = vunpack.c.l.b16 %v1866
      %v1899 = vunpack.c.l.b16 %v1867
      %v1900 = vunpack.c.l.b16 %v1868
      %v1901 = vunpack.c.l.b16 %v1869
      %v1902 = vunpack.c.l.b16 %v1870
      %v1903 = vunpack.c.l.b16 %v1871
      %v1904 = vunpack.c.l.b16 %v1872
      %v1905 = vpack.c.b16 %v1890, %v1889
      %v1906 = vpack.c.b16 %v1892, %v1891
      %v1907 = vpack.c.b16 %v1894, %v1893
      %v1908 = vpack.c.b16 %v1896, %v1895
      %v1909 = vpack.c.b16 %v1898, %v1897
      %v1910 = vpack.c.b16 %v1900, %v1899
      %v1911 = vpack.c.b16 %v1902, %v1901
      %v1912 = vpack.c.b16 %v1904, %v1903
      %1921 = vmatprep.subr.bf16.mxu0 0
      %1922 = vmatpush1.bf16.msra.mxu0 %v1905
      %1923 = vmatprep.subr.bf16.mxu0 0
      %1924 = vmatpush1.bf16.msra.mxu0 %v1906
      %1925 = vmatprep.subr.bf16.mxu0 0
      %1926 = vmatpush1.bf16.msra.mxu0 %v1907
      %1927 = vmatprep.subr.bf16.mxu0 0
      %1928 = vmatpush1.bf16.msra.mxu0 %v1908
      %1929 = vmatprep.subr.bf16.mxu0 0
      %1930 = vmatpush1.bf16.msra.mxu0 %v1909
      %1931 = vmatprep.subr.bf16.mxu0 0
      %1932 = vmatpush1.bf16.msra.mxu0 %v1910
      %1933 = vmatprep.subr.bf16.mxu0 0
      %1934 = vmatpush1.bf16.msra.mxu0 %v1911
      %1935 = vmatprep.subr.bf16.mxu0 0
      %1936 = vmatpush1.bf16.msra.mxu0 %v1912
      %1937 = vmatprep.subr.bf16.mxu0 0
      %1938 = vmatpush1.bf16.msra.mxu0 0
      %1939 = vmatprep.subr.bf16.mxu0 0
      %1940 = vmatpush1.bf16.msra.mxu0 0
      %1941 = vmatprep.subr.bf16.mxu0 0
      %1942 = vmatpush1.bf16.msra.mxu0 0
      %1943 = vmatprep.subr.bf16.mxu0 0
      %1944 = vmatpush1.bf16.msra.mxu0 0
      %1945 = vmatprep.subr.bf16.mxu0 0
      %1946 = vmatpush1.bf16.msra.mxu0 0
      %1947 = vmatprep.subr.bf16.mxu0 0
      %1948 = vmatpush1.bf16.msra.mxu0 0
      %1949 = vmatprep.subr.bf16.mxu0 0
      %1950 = vmatpush1.bf16.msra.mxu0 0
      %1951 = vmatprep.subr.bf16.mxu0 0
      %1952 = vmatpush1.bf16.msra.mxu0 0
      %1953 = vmatprep.mubr.bf16.mxu0 0
      %1954 = vmatmul.mubr.bf16.gmra.mrb[0].mxu0 %v749
      %v1955 = vpop.f32.mrb[0].mxu0
      %v1956 = vadd.f32 0.0, %v1955
      %v1957 = vpop.f32.mrb[0].mxu0
      %v1958 = vpop.f32.mrb[0].mxu0
      %v1959 = vadd.f32 0.0, %v1958
      %v1960 = vpop.f32.mrb[0].mxu0
      %1961 = vmatprep.mubr.bf16.mxu0 0
      %1962 = vmatmul.mubr.bf16.gmra.mrb[0].mxu0 %v750
      %v1963 = vpop.f32.mrb[0].mxu0
      %v1964 = vadd.f32 0.0, %v1963
      %v1965 = vpop.f32.mrb[0].mxu0
      %v1966 = vpop.f32.mrb[0].mxu0
      %v1967 = vadd.f32 0.0, %v1966
      %v1968 = vpop.f32.mrb[0].mxu0
      %1969 = vmatprep.mubr.bf16.mxu0 0
      %1970 = vmatmul.mubr.bf16.gmra.mrb[0].mxu0 %v751
      %v1971 = vpop.f32.mrb[0].mxu0
      %v1972 = vadd.f32 0.0, %v1971
      %v1973 = vpop.f32.mrb[0].mxu0
      %v1974 = vpop.f32.mrb[0].mxu0
      %v1975 = vadd.f32 0.0, %v1974
      %v1976 = vpop.f32.mrb[0].mxu0
      %1977 = vmatprep.mubr.bf16.mxu0 0
      %1978 = vmatmul.mubr.bf16.gmra.mrb[0].mxu0 %v752
      %v1979 = vpop.f32.mrb[0].mxu0
      %v1980 = vadd.f32 0.0, %v1979
      %v1981 = vpop.f32.mrb[0].mxu0
      %v1982 = vpop.f32.mrb[0].mxu0
      %v1983 = vadd.f32 0.0, %v1982
      %v1984 = vpop.f32.mrb[0].mxu0
      %1985 = vmatprep.mubr.bf16.mxu0 0
      %1986 = vmatmul.mubr.bf16.gmra.mrb[0].mxu0 %v753
      %v1987 = vpop.f32.mrb[0].mxu0
      %v1988 = vadd.f32 0.0, %v1987
      %v1989 = vpop.f32.mrb[0].mxu0
      %v1990 = vpop.f32.mrb[0].mxu0
      %v1991 = vadd.f32 0.0, %v1990
      %v1992 = vpop.f32.mrb[0].mxu0
      %1993 = vmatprep.mubr.bf16.mxu0 0
      %1994 = vmatmul.mubr.bf16.gmra.mrb[0].mxu0 %v754
      %v1995 = vpop.f32.mrb[0].mxu0
      %v1996 = vadd.f32 0.0, %v1995
      %v1997 = vpop.f32.mrb[0].mxu0
      %v1998 = vpop.f32.mrb[0].mxu0
      %v1999 = vadd.f32 0.0, %v1998
      %v2000 = vpop.f32.mrb[0].mxu0
      %2001 = vmatprep.mubr.bf16.mxu0 0
      %2002 = vmatmul.mubr.bf16.gmra.mrb[0].mxu0 %v755
      %v2003 = vpop.f32.mrb[0].mxu0
      %v2004 = vadd.f32 0.0, %v2003
      %v2005 = vpop.f32.mrb[0].mxu0
      %v2006 = vpop.f32.mrb[0].mxu0
      %v2007 = vadd.f32 0.0, %v2006
      %v2008 = vpop.f32.mrb[0].mxu0
      %2009 = vmatprep.mubr.bf16.mxu0 0
      %2010 = vmatmul.mubr.bf16.gmra.mrb[0].mxu0 %v756
      %v2011 = vpop.f32.mrb[0].mxu0
      %v2012 = vadd.f32 0.0, %v2011
      %v2013 = vpop.f32.mrb[0].mxu0
      %v2014 = vpop.f32.mrb[0].mxu0
      %v2015 = vadd.f32 0.0, %v2014
      %v2016 = vpop.f32.mrb[0].mxu0
      %2017 = vmatprep.mubr.bf16.mxu0 0
      %2018 = vmatmul.mubr.bf16.gmra.mrb[0].mxu0 %v757
      %v2019 = vpop.f32.mrb[0].mxu0
      %v2020 = vadd.f32 0.0, %v2019
      %v2021 = vpop.f32.mrb[0].mxu0
      %v2022 = vpop.f32.mrb[0].mxu0
      %v2023 = vadd.f32 0.0, %v2022
      %v2024 = vpop.f32.mrb[0].mxu0
      %2025 = vmatprep.mubr.bf16.mxu0 0
      %2026 = vmatmul.mubr.bf16.gmra.mrb[0].mxu0 %v758
      %v2027 = vpop.f32.mrb[0].mxu0
      %v2028 = vadd.f32 0.0, %v2027
      %v2029 = vpop.f32.mrb[0].mxu0
      %v2030 = vpop.f32.mrb[0].mxu0
      %v2031 = vadd.f32 0.0, %v2030
      %v2032 = vpop.f32.mrb[0].mxu0
      %2033 = vmatprep.mubr.bf16.mxu0 0
      %2034 = vmatmul.mubr.bf16.gmra.mrb[0].mxu0 %v759
      %v2035 = vpop.f32.mrb[0].mxu0
      %v2036 = vadd.f32 0.0, %v2035
      %v2037 = vpop.f32.mrb[0].mxu0
      %v2038 = vpop.f32.mrb[0].mxu0
      %v2039 = vadd.f32 0.0, %v2038
      %v2040 = vpop.f32.mrb[0].mxu0
      %2041 = vmatprep.mubr.bf16.mxu0 0
      %2042 = vmatmul.mubr.bf16.gmra.mrb[0].mxu0 %v760
      %v2043 = vpop.f32.mrb[0].mxu0
      %v2044 = vadd.f32 0.0, %v2043
      %v2045 = vpop.f32.mrb[0].mxu0
      %v2046 = vpop.f32.mrb[0].mxu0
      %v2047 = vadd.f32 0.0, %v2046
      %v2048 = vpop.f32.mrb[0].mxu0
      %2049 = vmatprep.mubr.bf16.mxu0 0
      %2050 = vmatmul.mubr.bf16.gmra.mrb[0].mxu0 %v761
      %v2051 = vpop.f32.mrb[0].mxu0
      %v2052 = vadd.f32 0.0, %v2051
      %v2053 = vpop.f32.mrb[0].mxu0
      %v2054 = vpop.f32.mrb[0].mxu0
      %v2055 = vadd.f32 0.0, %v2054
      %v2056 = vpop.f32.mrb[0].mxu0
      %2057 = vmatprep.mubr.bf16.mxu0 0
      %2058 = vmatmul.mubr.bf16.gmra.mrb[0].mxu0 %v762
      %v2059 = vpop.f32.mrb[0].mxu0
      %v2060 = vadd.f32 0.0, %v2059
      %v2061 = vpop.f32.mrb[0].mxu0
      %v2062 = vpop.f32.mrb[0].mxu0
      %v2063 = vadd.f32 0.0, %v2062
      %v2064 = vpop.f32.mrb[0].mxu0
      %2065 = vmatprep.mubr.bf16.mxu0 0
      %2066 = vmatmul.mubr.bf16.gmra.mrb[0].mxu0 %v763
      %v2067 = vpop.f32.mrb[0].mxu0
      %v2068 = vadd.f32 0.0, %v2067
      %v2069 = vpop.f32.mrb[0].mxu0
      %v2070 = vpop.f32.mrb[0].mxu0
      %v2071 = vadd.f32 0.0, %v2070
      %v2072 = vpop.f32.mrb[0].mxu0
      %2073 = vmatprep.mubr.bf16.mxu0 0
      %2074 = vmatmul.mubr.bf16.gmra.mrb[0].mxu0 %v1855
      %v2075 = vpop.f32.mrb[0].mxu0
      %v2076 = vadd.f32 0.0, %v2075
      %v2077 = vpop.f32.mrb[0].mxu0
      %v2078 = vpop.f32.mrb[0].mxu0
      %v2079 = vadd.f32 0.0, %v2078
      %v2080 = vpop.f32.mrb[0].mxu0
      %2081 = vdwg.mxu0
      %v2082 = vadd.f32 %v1813, %v1956
      %v2083 = vadd.f32 %v1814, %v1959
      %v2084 = vadd.f32 %v1815, %v1964
      %v2085 = vadd.f32 %v1816, %v1967
      %v2086 = vadd.f32 %v1817, %v1972
      %v2087 = vadd.f32 %v1818, %v1975
      %v2088 = vadd.f32 %v1819, %v1980
      %v2089 = vadd.f32 %v1820, %v1983
      %v2090 = vadd.f32 %v1821, %v1988
      %v2091 = vadd.f32 %v1822, %v1991
      %v2092 = vadd.f32 %v1823, %v1996
      %v2093 = vadd.f32 %v1824, %v1999
      %v2094 = vadd.f32 %v1825, %v2004
      %v2095 = vadd.f32 %v1826, %v2007
      %v2096 = vadd.f32 %v1827, %v2012
      %v2097 = vadd.f32 %v1828, %v2015
      %v2098 = vadd.f32 %v1829, %v2020
      %v2099 = vadd.f32 %v1830, %v2023
      %v2100 = vadd.f32 %v1831, %v2028
      %v2101 = vadd.f32 %v1832, %v2031
      %v2102 = vadd.f32 %v1833, %v2036
      %v2103 = vadd.f32 %v1834, %v2039
      %v2104 = vadd.f32 %v1835, %v2044
      %v2105 = vadd.f32 %v1836, %v2047
      %v2106 = vadd.f32 %v1837, %v2052
      %v2107 = vadd.f32 %v1838, %v2055
      %v2108 = vadd.f32 %v1839, %v2060
      %v2109 = vadd.f32 %v1840, %v2063
      %v2110 = vadd.f32 %v1841, %v2068
      %v2111 = vadd.f32 %v1842, %v2071
      %v2112 = vadd.f32 %v1843, %v2076
      %v2113 = vadd.f32 %v1844, %v2079
      %v2114 = vrot.slane %v549, 2
      %v2115 = vrot.slane %v550, 2
      %v2116 = vsel %vm1199, %v2114, %v2115
      %v2117 = vrot.slane %v551, 2
      %v2118 = vsel %vm1199, %v2115, %v2117
      %v2121 = vpack.c.bf16 %v2118, %v2116
      %s2122 = scalar_lea.vmem %s3, 320
      %v2123 = vld [vmem:[%s2122] sm:$0xf]
      %v2124 = vld [vmem:[%s2122 + $0x4] sm:$0xf]
      %v2125 = vld [vmem:[%s2122 + $0x8] sm:$0xf]
      %v2126 = vld [vmem:[%s2122 + $0xc] sm:$0xf]
      %v2127 = vld [vmem:[%s2122 + $0x10] sm:$0xf]
      %v2128 = vld [vmem:[%s2122 + $0x14] sm:$0xf]
      %v2129 = vld [vmem:[%s2122 + $0x18] sm:$0xf]
      %v2130 = vld [vmem:[%s2122 + $0x1c] sm:$0xf]
      %v2131 = vld [vmem:[%s2122 + $0x20] sm:$0xf]
      %v2132 = vld [vmem:[%s2122 + $0x24] sm:$0xf]
      %v2133 = vld [vmem:[%s2122 + $0x28] sm:$0xf]
      %v2134 = vld [vmem:[%s2122 + $0x2c] sm:$0xf]
      %v2135 = vld [vmem:[%s2122 + $0x30] sm:$0xf]
      %v2136 = vld [vmem:[%s2122 + $0x34] sm:$0xf]
      %v2137 = vld [vmem:[%s2122 + $0x38] sm:$0xf]
      %v2138 = vld [vmem:[%s2122 + $0x3c] sm:$0xf]
      %v2155 = vunpack.c.l.b16 %v2123
      %v2156 = vunpack.c.l.b16 %v2124
      %v2157 = vunpack.c.l.b16 %v2125
      %v2158 = vunpack.c.l.b16 %v2126
      %v2159 = vunpack.c.l.b16 %v2127
      %v2160 = vunpack.c.l.b16 %v2128
      %v2161 = vunpack.c.l.b16 %v2129
      %v2162 = vunpack.c.l.b16 %v2130
      %v2163 = vunpack.c.l.b16 %v2131
      %v2164 = vunpack.c.l.b16 %v2132
      %v2165 = vunpack.c.l.b16 %v2133
      %v2166 = vunpack.c.l.b16 %v2134
      %v2167 = vunpack.c.l.b16 %v2135
      %v2168 = vunpack.c.l.b16 %v2136
      %v2169 = vunpack.c.l.b16 %v2137
      %v2170 = vunpack.c.l.b16 %v2138
      %v2171 = vpack.c.b16 %v2156, %v2155
      %v2172 = vpack.c.b16 %v2158, %v2157
      %v2173 = vpack.c.b16 %v2160, %v2159
      %v2174 = vpack.c.b16 %v2162, %v2161
      %v2175 = vpack.c.b16 %v2164, %v2163
      %v2176 = vpack.c.b16 %v2166, %v2165
      %v2177 = vpack.c.b16 %v2168, %v2167
      %v2178 = vpack.c.b16 %v2170, %v2169
      %2187 = vmatprep.subr.bf16.mxu0 0
      %2188 = vmatpush1.bf16.msra.mxu0 %v2171
      %2189 = vmatprep.subr.bf16.mxu0 0
      %2190 = vmatpush1.bf16.msra.mxu0 %v2172
      %2191 = vmatprep.subr.bf16.mxu0 0
      %2192 = vmatpush1.bf16.msra.mxu0 %v2173
      %2193 = vmatprep.subr.bf16.mxu0 0
      %2194 = vmatpush1.bf16.msra.mxu0 %v2174
      %2195 = vmatprep.subr.bf16.mxu0 0
      %2196 = vmatpush1.bf16.msra.mxu0 %v2175
      %2197 = vmatprep.subr.bf16.mxu0 0
      %2198 = vmatpush1.bf16.msra.mxu0 %v2176
      %2199 = vmatprep.subr.bf16.mxu0 0
      %2200 = vmatpush1.bf16.msra.mxu0 %v2177
      %2201 = vmatprep.subr.bf16.mxu0 0
      %2202 = vmatpush1.bf16.msra.mxu0 %v2178
      %2203 = vmatprep.subr.bf16.mxu0 0
      %2204 = vmatpush1.bf16.msra.mxu0 0
      %2205 = vmatprep.subr.bf16.mxu0 0
      %2206 = vmatpush1.bf16.msra.mxu0 0
      %2207 = vmatprep.subr.bf16.mxu0 0
      %2208 = vmatpush1.bf16.msra.mxu0 0
      %2209 = vmatprep.subr.bf16.mxu0 0
      %2210 = vmatpush1.bf16.msra.mxu0 0
      %2211 = vmatprep.subr.bf16.mxu0 0
      %2212 = vmatpush1.bf16.msra.mxu0 0
      %2213 = vmatprep.subr.bf16.mxu0 0
      %2214 = vmatpush1.bf16.msra.mxu0 0
      %2215 = vmatprep.subr.bf16.mxu0 0
      %2216 = vmatpush1.bf16.msra.mxu0 0
      %2217 = vmatprep.subr.bf16.mxu0 0
      %2218 = vmatpush1.bf16.msra.mxu0 0
      %2219 = vmatprep.mubr.bf16.mxu0 0
      %2220 = vmatmul.mubr.bf16.gmra.mrb[0].mxu0 %v1313
      %v2221 = vpop.f32.mrb[0].mxu0
      %v2222 = vadd.f32 0.0, %v2221
      %v2223 = vpop.f32.mrb[0].mxu0
      %v2224 = vpop.f32.mrb[0].mxu0
      %v2225 = vadd.f32 0.0, %v2224
      %v2226 = vpop.f32.mrb[0].mxu0
      %2227 = vmatprep.mubr.bf16.mxu0 0
      %2228 = vmatmul.mubr.bf16.gmra.mrb[0].mxu0 %v1314
      %v2229 = vpop.f32.mrb[0].mxu0
      %v2230 = vadd.f32 0.0, %v2229
      %v2231 = vpop.f32.mrb[0].mxu0
      %v2232 = vpop.f32.mrb[0].mxu0
      %v2233 = vadd.f32 0.0, %v2232
      %v2234 = vpop.f32.mrb[0].mxu0
      %2235 = vmatprep.mubr.bf16.mxu0 0
      %2236 = vmatmul.mubr.bf16.gmra.mrb[0].mxu0 %v1315
      %v2237 = vpop.f32.mrb[0].mxu0
      %v2238 = vadd.f32 0.0, %v2237
      %v2239 = vpop.f32.mrb[0].mxu0
      %v2240 = vpop.f32.mrb[0].mxu0
      %v2241 = vadd.f32 0.0, %v2240
      %v2242 = vpop.f32.mrb[0].mxu0
      %2243 = vmatprep.mubr.bf16.mxu0 0
      %2244 = vmatmul.mubr.bf16.gmra.mrb[0].mxu0 %v1316
      %v2245 = vpop.f32.mrb[0].mxu0
      %v2246 = vadd.f32 0.0, %v2245
      %v2247 = vpop.f32.mrb[0].mxu0
      %v2248 = vpop.f32.mrb[0].mxu0
      %v2249 = vadd.f32 0.0, %v2248
      %v2250 = vpop.f32.mrb[0].mxu0
      %2251 = vmatprep.mubr.bf16.mxu0 0
      %2252 = vmatmul.mubr.bf16.gmra.mrb[0].mxu0 %v1317
      %v2253 = vpop.f32.mrb[0].mxu0
      %v2254 = vadd.f32 0.0, %v2253
      %v2255 = vpop.f32.mrb[0].mxu0
      %v2256 = vpop.f32.mrb[0].mxu0
      %v2257 = vadd.f32 0.0, %v2256
      %v2258 = vpop.f32.mrb[0].mxu0
      %2259 = vmatprep.mubr.bf16.mxu0 0
      %2260 = vmatmul.mubr.bf16.gmra.mrb[0].mxu0 %v1318
      %v2261 = vpop.f32.mrb[0].mxu0
      %v2262 = vadd.f32 0.0, %v2261
      %v2263 = vpop.f32.mrb[0].mxu0
      %v2264 = vpop.f32.mrb[0].mxu0
      %v2265 = vadd.f32 0.0, %v2264
      %v2266 = vpop.f32.mrb[0].mxu0
      %2267 = vmatprep.mubr.bf16.mxu0 0
      %2268 = vmatmul.mubr.bf16.gmra.mrb[0].mxu0 %v1319
      %v2269 = vpop.f32.mrb[0].mxu0
      %v2270 = vadd.f32 0.0, %v2269
      %v2271 = vpop.f32.mrb[0].mxu0
      %v2272 = vpop.f32.mrb[0].mxu0
      %v2273 = vadd.f32 0.0, %v2272
      %v2274 = vpop.f32.mrb[0].mxu0
      %2275 = vmatprep.mubr.bf16.mxu0 0
      %2276 = vmatmul.mubr.bf16.gmra.mrb[0].mxu0 %v1320
      %v2277 = vpop.f32.mrb[0].mxu0
      %v2278 = vadd.f32 0.0, %v2277
      %v2279 = vpop.f32.mrb[0].mxu0
      %v2280 = vpop.f32.mrb[0].mxu0
      %v2281 = vadd.f32 0.0, %v2280
      %v2282 = vpop.f32.mrb[0].mxu0
      %2283 = vmatprep.mubr.bf16.mxu0 0
      %2284 = vmatmul.mubr.bf16.gmra.mrb[0].mxu0 %v1321
      %v2285 = vpop.f32.mrb[0].mxu0
      %v2286 = vadd.f32 0.0, %v2285
      %v2287 = vpop.f32.mrb[0].mxu0
      %v2288 = vpop.f32.mrb[0].mxu0
      %v2289 = vadd.f32 0.0, %v2288
      %v2290 = vpop.f32.mrb[0].mxu0
      %2291 = vmatprep.mubr.bf16.mxu0 0
      %2292 = vmatmul.mubr.bf16.gmra.mrb[0].mxu0 %v1322
      %v2293 = vpop.f32.mrb[0].mxu0
      %v2294 = vadd.f32 0.0, %v2293
      %v2295 = vpop.f32.mrb[0].mxu0
      %v2296 = vpop.f32.mrb[0].mxu0
      %v2297 = vadd.f32 0.0, %v2296
      %v2298 = vpop.f32.mrb[0].mxu0
      %2299 = vmatprep.mubr.bf16.mxu0 0
      %2300 = vmatmul.mubr.bf16.gmra.mrb[0].mxu0 %v1323
      %v2301 = vpop.f32.mrb[0].mxu0
      %v2302 = vadd.f32 0.0, %v2301
      %v2303 = vpop.f32.mrb[0].mxu0
      %v2304 = vpop.f32.mrb[0].mxu0
      %v2305 = vadd.f32 0.0, %v2304
      %v2306 = vpop.f32.mrb[0].mxu0
      %2307 = vmatprep.mubr.bf16.mxu0 0
      %2308 = vmatmul.mubr.bf16.gmra.mrb[0].mxu0 %v1324
      %v2309 = vpop.f32.mrb[0].mxu0
      %v2310 = vadd.f32 0.0, %v2309
      %v2311 = vpop.f32.mrb[0].mxu0
      %v2312 = vpop.f32.mrb[0].mxu0
      %v2313 = vadd.f32 0.0, %v2312
      %v2314 = vpop.f32.mrb[0].mxu0
      %2315 = vmatprep.mubr.bf16.mxu0 0
      %2316 = vmatmul.mubr.bf16.gmra.mrb[0].mxu0 %v1325
      %v2317 = vpop.f32.mrb[0].mxu0
      %v2318 = vadd.f32 0.0, %v2317
      %v2319 = vpop.f32.mrb[0].mxu0
      %v2320 = vpop.f32.mrb[0].mxu0
      %v2321 = vadd.f32 0.0, %v2320
      %v2322 = vpop.f32.mrb[0].mxu0
      %2323 = vmatprep.mubr.bf16.mxu0 0
      %2324 = vmatmul.mubr.bf16.gmra.mrb[0].mxu0 %v1326
      %v2325 = vpop.f32.mrb[0].mxu0
      %v2326 = vadd.f32 0.0, %v2325
      %v2327 = vpop.f32.mrb[0].mxu0
      %v2328 = vpop.f32.mrb[0].mxu0
      %v2329 = vadd.f32 0.0, %v2328
      %v2330 = vpop.f32.mrb[0].mxu0
      %2331 = vmatprep.mubr.bf16.mxu0 0
      %2332 = vmatmul.mubr.bf16.gmra.mrb[0].mxu0 %v1327
      %v2333 = vpop.f32.mrb[0].mxu0
      %v2334 = vadd.f32 0.0, %v2333
      %v2335 = vpop.f32.mrb[0].mxu0
      %v2336 = vpop.f32.mrb[0].mxu0
      %v2337 = vadd.f32 0.0, %v2336
      %v2338 = vpop.f32.mrb[0].mxu0
      %2339 = vmatprep.mubr.bf16.mxu0 0
      %2340 = vmatmul.mubr.bf16.gmra.mrb[0].mxu0 %v2121
      %v2341 = vpop.f32.mrb[0].mxu0
      %v2342 = vadd.f32 0.0, %v2341
      %v2343 = vpop.f32.mrb[0].mxu0
      %v2344 = vpop.f32.mrb[0].mxu0
      %v2345 = vadd.f32 0.0, %v2344
      %v2346 = vpop.f32.mrb[0].mxu0
      %2347 = vdwg.mxu0
      %v2348 = vadd.f32 %v2082, %v2222
      %v2349 = vadd.f32 %v2083, %v2225
      %v2350 = vadd.f32 %v2084, %v2230
      %v2351 = vadd.f32 %v2085, %v2233
      %v2352 = vadd.f32 %v2086, %v2238
      %v2353 = vadd.f32 %v2087, %v2241
      %v2354 = vadd.f32 %v2088, %v2246
      %v2355 = vadd.f32 %v2089, %v2249
      %v2356 = vadd.f32 %v2090, %v2254
      %v2357 = vadd.f32 %v2091, %v2257
      %v2358 = vadd.f32 %v2092, %v2262
      %v2359 = vadd.f32 %v2093, %v2265
      %v2360 = vadd.f32 %v2094, %v2270
      %v2361 = vadd.f32 %v2095, %v2273
      %v2362 = vadd.f32 %v2096, %v2278
      %v2363 = vadd.f32 %v2097, %v2281
      %v2364 = vadd.f32 %v2098, %v2286
      %v2365 = vadd.f32 %v2099, %v2289
      %v2366 = vadd.f32 %v2100, %v2294
      %v2367 = vadd.f32 %v2101, %v2297
      %v2368 = vadd.f32 %v2102, %v2302
      %v2369 = vadd.f32 %v2103, %v2305
      %v2370 = vadd.f32 %v2104, %v2310
      %v2371 = vadd.f32 %v2105, %v2313
      %v2372 = vadd.f32 %v2106, %v2318
      %v2373 = vadd.f32 %v2107, %v2321
      %v2374 = vadd.f32 %v2108, %v2326
      %v2375 = vadd.f32 %v2109, %v2329
      %v2376 = vadd.f32 %v2110, %v2334
      %v2377 = vadd.f32 %v2111, %v2337
      %v2378 = vadd.f32 %v2112, %v2342
      %v2379 = vadd.f32 %v2113, %v2345
      %v2380 = vpack.c.bf16 %v553, %v552
      %s2381 = scalar_lea.vmem %s3, 384
      %v2382 = vld [vmem:[%s2381] sm:$0xf]
      %v2383 = vld [vmem:[%s2381 + $0x4] sm:$0xf]
      %v2384 = vld [vmem:[%s2381 + $0x8] sm:$0xf]
      %v2385 = vld [vmem:[%s2381 + $0xc] sm:$0xf]
      %v2386 = vld [vmem:[%s2381 + $0x10] sm:$0xf]
      %v2387 = vld [vmem:[%s2381 + $0x14] sm:$0xf]
      %v2388 = vld [vmem:[%s2381 + $0x18] sm:$0xf]
      %v2389 = vld [vmem:[%s2381 + $0x1c] sm:$0xf]
      %v2390 = vld [vmem:[%s2381 + $0x20] sm:$0xf]
      %v2391 = vld [vmem:[%s2381 + $0x24] sm:$0xf]
      %v2392 = vld [vmem:[%s2381 + $0x28] sm:$0xf]
      %v2393 = vld [vmem:[%s2381 + $0x2c] sm:$0xf]
      %v2394 = vld [vmem:[%s2381 + $0x30] sm:$0xf]
      %v2395 = vld [vmem:[%s2381 + $0x34] sm:$0xf]
      %v2396 = vld [vmem:[%s2381 + $0x38] sm:$0xf]
      %v2397 = vld [vmem:[%s2381 + $0x3c] sm:$0xf]
      %v2414 = vunpack.c.l.b16 %v2382
      %v2415 = vunpack.c.l.b16 %v2383
      %v2416 = vunpack.c.l.b16 %v2384
      %v2417 = vunpack.c.l.b16 %v2385
      %v2418 = vunpack.c.l.b16 %v2386
      %v2419 = vunpack.c.l.b16 %v2387
      %v2420 = vunpack.c.l.b16 %v2388
      %v2421 = vunpack.c.l.b16 %v2389
      %v2422 = vunpack.c.l.b16 %v2390
      %v2423 = vunpack.c.l.b16 %v2391
      %v2424 = vunpack.c.l.b16 %v2392
      %v2425 = vunpack.c.l.b16 %v2393
      %v2426 = vunpack.c.l.b16 %v2394
      %v2427 = vunpack.c.l.b16 %v2395
      %v2428 = vunpack.c.l.b16 %v2396
      %v2429 = vunpack.c.l.b16 %v2397
      %v2430 = vpack.c.b16 %v2415, %v2414
      %v2431 = vpack.c.b16 %v2417, %v2416
      %v2432 = vpack.c.b16 %v2419, %v2418
      %v2433 = vpack.c.b16 %v2421, %v2420
      %v2434 = vpack.c.b16 %v2423, %v2422
      %v2435 = vpack.c.b16 %v2425, %v2424
      %v2436 = vpack.c.b16 %v2427, %v2426
      %v2437 = vpack.c.b16 %v2429, %v2428
      %2446 = vmatprep.subr.bf16.mxu0 0
      %2447 = vmatpush1.bf16.msra.mxu0 %v2430
      %2448 = vmatprep.subr.bf16.mxu0 0
      %2449 = vmatpush1.bf16.msra.mxu0 %v2431
      %2450 = vmatprep.subr.bf16.mxu0 0
      %2451 = vmatpush1.bf16.msra.mxu0 %v2432
      %2452 = vmatprep.subr.bf16.mxu0 0
      %2453 = vmatpush1.bf16.msra.mxu0 %v2433
      %2454 = vmatprep.subr.bf16.mxu0 0
      %2455 = vmatpush1.bf16.msra.mxu0 %v2434
      %2456 = vmatprep.subr.bf16.mxu0 0
      %2457 = vmatpush1.bf16.msra.mxu0 %v2435
      %2458 = vmatprep.subr.bf16.mxu0 0
      %2459 = vmatpush1.bf16.msra.mxu0 %v2436
      %2460 = vmatprep.subr.bf16.mxu0 0
      %2461 = vmatpush1.bf16.msra.mxu0 %v2437
      %2462 = vmatprep.subr.bf16.mxu0 0
      %2463 = vmatpush1.bf16.msra.mxu0 0
      %2464 = vmatprep.subr.bf16.mxu0 0
      %2465 = vmatpush1.bf16.msra.mxu0 0
      %2466 = vmatprep.subr.bf16.mxu0 0
      %2467 = vmatpush1.bf16.msra.mxu0 0
      %2468 = vmatprep.subr.bf16.mxu0 0
      %2469 = vmatpush1.bf16.msra.mxu0 0
      %2470 = vmatprep.subr.bf16.mxu0 0
      %2471 = vmatpush1.bf16.msra.mxu0 0
      %2472 = vmatprep.subr.bf16.mxu0 0
      %2473 = vmatpush1.bf16.msra.mxu0 0
      %2474 = vmatprep.subr.bf16.mxu0 0
      %2475 = vmatpush1.bf16.msra.mxu0 0
      %2476 = vmatprep.subr.bf16.mxu0 0
      %2477 = vmatpush1.bf16.msra.mxu0 0
      %2478 = vmatprep.mubr.bf16.mxu0 0
      %2479 = vmatmul.mubr.bf16.gmra.mrb[0].mxu0 %v557
      %v2480 = vpop.f32.mrb[0].mxu0
      %v2481 = vadd.f32 0.0, %v2480
      %v2482 = vpop.f32.mrb[0].mxu0
      %v2483 = vpop.f32.mrb[0].mxu0
      %v2484 = vadd.f32 0.0, %v2483
      %v2485 = vpop.f32.mrb[0].mxu0
      %2486 = vmatprep.mubr.bf16.mxu0 0
      %2487 = vmatmul.mubr.bf16.gmra.mrb[0].mxu0 %v558
      %v2488 = vpop.f32.mrb[0].mxu0
      %v2489 = vadd.f32 0.0, %v2488
      %v2490 = vpop.f32.mrb[0].mxu0
      %v2491 = vpop.f32.mrb[0].mxu0
      %v2492 = vadd.f32 0.0, %v2491
      %v2493 = vpop.f32.mrb[0].mxu0
      %2494 = vmatprep.mubr.bf16.mxu0 0
      %2495 = vmatmul.mubr.bf16.gmra.mrb[0].mxu0 %v559
      %v2496 = vpop.f32.mrb[0].mxu0
      %v2497 = vadd.f32 0.0, %v2496
      %v2498 = vpop.f32.mrb[0].mxu0
      %v2499 = vpop.f32.mrb[0].mxu0
      %v2500 = vadd.f32 0.0, %v2499
      %v2501 = vpop.f32.mrb[0].mxu0
      %2502 = vmatprep.mubr.bf16.mxu0 0
      %2503 = vmatmul.mubr.bf16.gmra.mrb[0].mxu0 %v560
      %v2504 = vpop.f32.mrb[0].mxu0
      %v2505 = vadd.f32 0.0, %v2504
      %v2506 = vpop.f32.mrb[0].mxu0
      %v2507 = vpop.f32.mrb[0].mxu0
      %v2508 = vadd.f32 0.0, %v2507
      %v2509 = vpop.f32.mrb[0].mxu0
      %2510 = vmatprep.mubr.bf16.mxu0 0
      %2511 = vmatmul.mubr.bf16.gmra.mrb[0].mxu0 %v561
      %v2512 = vpop.f32.mrb[0].mxu0
      %v2513 = vadd.f32 0.0, %v2512
      %v2514 = vpop.f32.mrb[0].mxu0
      %v2515 = vpop.f32.mrb[0].mxu0
      %v2516 = vadd.f32 0.0, %v2515
      %v2517 = vpop.f32.mrb[0].mxu0
      %2518 = vmatprep.mubr.bf16.mxu0 0
      %2519 = vmatmul.mubr.bf16.gmra.mrb[0].mxu0 %v562
      %v2520 = vpop.f32.mrb[0].mxu0
      %v2521 = vadd.f32 0.0, %v2520
      %v2522 = vpop.f32.mrb[0].mxu0
      %v2523 = vpop.f32.mrb[0].mxu0
      %v2524 = vadd.f32 0.0, %v2523
      %v2525 = vpop.f32.mrb[0].mxu0
      %2526 = vmatprep.mubr.bf16.mxu0 0
      %2527 = vmatmul.mubr.bf16.gmra.mrb[0].mxu0 %v563
      %v2528 = vpop.f32.mrb[0].mxu0
      %v2529 = vadd.f32 0.0, %v2528
      %v2530 = vpop.f32.mrb[0].mxu0
      %v2531 = vpop.f32.mrb[0].mxu0
      %v2532 = vadd.f32 0.0, %v2531
      %v2533 = vpop.f32.mrb[0].mxu0
      %2534 = vmatprep.mubr.bf16.mxu0 0
      %2535 = vmatmul.mubr.bf16.gmra.mrb[0].mxu0 %v564
      %v2536 = vpop.f32.mrb[0].mxu0
      %v2537 = vadd.f32 0.0, %v2536
      %v2538 = vpop.f32.mrb[0].mxu0
      %v2539 = vpop.f32.mrb[0].mxu0
      %v2540 = vadd.f32 0.0, %v2539
      %v2541 = vpop.f32.mrb[0].mxu0
      %2542 = vmatprep.mubr.bf16.mxu0 0
      %2543 = vmatmul.mubr.bf16.gmra.mrb[0].mxu0 %v565
      %v2544 = vpop.f32.mrb[0].mxu0
      %v2545 = vadd.f32 0.0, %v2544
      %v2546 = vpop.f32.mrb[0].mxu0
      %v2547 = vpop.f32.mrb[0].mxu0
      %v2548 = vadd.f32 0.0, %v2547
      %v2549 = vpop.f32.mrb[0].mxu0
      %2550 = vmatprep.mubr.bf16.mxu0 0
      %2551 = vmatmul.mubr.bf16.gmra.mrb[0].mxu0 %v566
      %v2552 = vpop.f32.mrb[0].mxu0
      %v2553 = vadd.f32 0.0, %v2552
      %v2554 = vpop.f32.mrb[0].mxu0
      %v2555 = vpop.f32.mrb[0].mxu0
      %v2556 = vadd.f32 0.0, %v2555
      %v2557 = vpop.f32.mrb[0].mxu0
      %2558 = vmatprep.mubr.bf16.mxu0 0
      %2559 = vmatmul.mubr.bf16.gmra.mrb[0].mxu0 %v567
      %v2560 = vpop.f32.mrb[0].mxu0
      %v2561 = vadd.f32 0.0, %v2560
      %v2562 = vpop.f32.mrb[0].mxu0
      %v2563 = vpop.f32.mrb[0].mxu0
      %v2564 = vadd.f32 0.0, %v2563
      %v2565 = vpop.f32.mrb[0].mxu0
      %2566 = vmatprep.mubr.bf16.mxu0 0
      %2567 = vmatmul.mubr.bf16.gmra.mrb[0].mxu0 %v568
      %v2568 = vpop.f32.mrb[0].mxu0
      %v2569 = vadd.f32 0.0, %v2568
      %v2570 = vpop.f32.mrb[0].mxu0
      %v2571 = vpop.f32.mrb[0].mxu0
      %v2572 = vadd.f32 0.0, %v2571
      %v2573 = vpop.f32.mrb[0].mxu0
      %2574 = vmatprep.mubr.bf16.mxu0 0
      %2575 = vmatmul.mubr.bf16.gmra.mrb[0].mxu0 %v569
      %v2576 = vpop.f32.mrb[0].mxu0
      %v2577 = vadd.f32 0.0, %v2576
      %v2578 = vpop.f32.mrb[0].mxu0
      %v2579 = vpop.f32.mrb[0].mxu0
      %v2580 = vadd.f32 0.0, %v2579
      %v2581 = vpop.f32.mrb[0].mxu0
      %2582 = vmatprep.mubr.bf16.mxu0 0
      %2583 = vmatmul.mubr.bf16.gmra.mrb[0].mxu0 %v570
      %v2584 = vpop.f32.mrb[0].mxu0
      %v2585 = vadd.f32 0.0, %v2584
      %v2586 = vpop.f32.mrb[0].mxu0
      %v2587 = vpop.f32.mrb[0].mxu0
      %v2588 = vadd.f32 0.0, %v2587
      %v2589 = vpop.f32.mrb[0].mxu0
      %2590 = vmatprep.mubr.bf16.mxu0 0
      %2591 = vmatmul.mubr.bf16.gmra.mrb[0].mxu0 %v1586
      %v2592 = vpop.f32.mrb[0].mxu0
      %v2593 = vadd.f32 0.0, %v2592
      %v2594 = vpop.f32.mrb[0].mxu0
      %v2595 = vpop.f32.mrb[0].mxu0
      %v2596 = vadd.f32 0.0, %v2595
      %v2597 = vpop.f32.mrb[0].mxu0
      %2598 = vmatprep.mubr.bf16.mxu0 0
      %2599 = vmatmul.mubr.bf16.gmra.mrb[0].mxu0 %v2380
      %v2600 = vpop.f32.mrb[0].mxu0
      %v2601 = vadd.f32 0.0, %v2600
      %v2602 = vpop.f32.mrb[0].mxu0
      %v2603 = vpop.f32.mrb[0].mxu0
      %v2604 = vadd.f32 0.0, %v2603
      %v2605 = vpop.f32.mrb[0].mxu0
      %2606 = vdwg.mxu0
      %v2607 = vadd.f32 %v2348, %v2481
      %v2608 = vadd.f32 %v2349, %v2484
      %v2609 = vadd.f32 %v2350, %v2489
      %v2610 = vadd.f32 %v2351, %v2492
      %v2611 = vadd.f32 %v2352, %v2497
      %v2612 = vadd.f32 %v2353, %v2500
      %v2613 = vadd.f32 %v2354, %v2505
      %v2614 = vadd.f32 %v2355, %v2508
      %v2615 = vadd.f32 %v2356, %v2513
      %v2616 = vadd.f32 %v2357, %v2516
      %v2617 = vadd.f32 %v2358, %v2521
      %v2618 = vadd.f32 %v2359, %v2524
      %v2619 = vadd.f32 %v2360, %v2529
      %v2620 = vadd.f32 %v2361, %v2532
      %v2621 = vadd.f32 %v2362, %v2537
      %v2622 = vadd.f32 %v2363, %v2540
      %v2623 = vadd.f32 %v2364, %v2545
      %v2624 = vadd.f32 %v2365, %v2548
      %v2625 = vadd.f32 %v2366, %v2553
      %v2626 = vadd.f32 %v2367, %v2556
      %v2627 = vadd.f32 %v2368, %v2561
      %v2628 = vadd.f32 %v2369, %v2564
      %v2629 = vadd.f32 %v2370, %v2569
      %v2630 = vadd.f32 %v2371, %v2572
      %v2631 = vadd.f32 %v2372, %v2577
      %v2632 = vadd.f32 %v2373, %v2580
      %v2633 = vadd.f32 %v2374, %v2585
      %v2634 = vadd.f32 %v2375, %v2588
      %v2635 = vadd.f32 %v2376, %v2593
      %v2636 = vadd.f32 %v2377, %v2596
      %v2637 = vadd.f32 %v2378, %v2601
      %v2638 = vadd.f32 %v2379, %v2604
      %v2642 = vrot.slane %v552, 1
      %v2643 = vrot.slane %v553, 1
      %v2644 = vsel %vm635, %v2642, %v2643
      %v2645 = vrot.slane %v554, 1
      %v2646 = vsel %vm635, %v2643, %v2645
      %v2649 = vpack.c.bf16 %v2646, %v2644
      %s2650 = scalar_lea.vmem %s3, 448
      %v2651 = vld [vmem:[%s2650] sm:$0xf]
      %v2652 = vld [vmem:[%s2650 + $0x4] sm:$0xf]
      %v2653 = vld [vmem:[%s2650 + $0x8] sm:$0xf]
      %v2654 = vld [vmem:[%s2650 + $0xc] sm:$0xf]
      %v2655 = vld [vmem:[%s2650 + $0x10] sm:$0xf]
      %v2656 = vld [vmem:[%s2650 + $0x14] sm:$0xf]
      %v2657 = vld [vmem:[%s2650 + $0x18] sm:$0xf]
      %v2658 = vld [vmem:[%s2650 + $0x1c] sm:$0xf]
      %v2659 = vld [vmem:[%s2650 + $0x20] sm:$0xf]
      %v2660 = vld [vmem:[%s2650 + $0x24] sm:$0xf]
      %v2661 = vld [vmem:[%s2650 + $0x28] sm:$0xf]
      %v2662 = vld [vmem:[%s2650 + $0x2c] sm:$0xf]
      %v2663 = vld [vmem:[%s2650 + $0x30] sm:$0xf]
      %v2664 = vld [vmem:[%s2650 + $0x34] sm:$0xf]
      %v2665 = vld [vmem:[%s2650 + $0x38] sm:$0xf]
      %v2666 = vld [vmem:[%s2650 + $0x3c] sm:$0xf]
      %v2683 = vunpack.c.l.b16 %v2651
      %v2684 = vunpack.c.l.b16 %v2652
      %v2685 = vunpack.c.l.b16 %v2653
      %v2686 = vunpack.c.l.b16 %v2654
      %v2687 = vunpack.c.l.b16 %v2655
      %v2688 = vunpack.c.l.b16 %v2656
      %v2689 = vunpack.c.l.b16 %v2657
      %v2690 = vunpack.c.l.b16 %v2658
      %v2691 = vunpack.c.l.b16 %v2659
      %v2692 = vunpack.c.l.b16 %v2660
      %v2693 = vunpack.c.l.b16 %v2661
      %v2694 = vunpack.c.l.b16 %v2662
      %v2695 = vunpack.c.l.b16 %v2663
      %v2696 = vunpack.c.l.b16 %v2664
      %v2697 = vunpack.c.l.b16 %v2665
      %v2698 = vunpack.c.l.b16 %v2666
      %v2699 = vpack.c.b16 %v2684, %v2683
      %v2700 = vpack.c.b16 %v2686, %v2685
      %v2701 = vpack.c.b16 %v2688, %v2687
      %v2702 = vpack.c.b16 %v2690, %v2689
      %v2703 = vpack.c.b16 %v2692, %v2691
      %v2704 = vpack.c.b16 %v2694, %v2693
      %v2705 = vpack.c.b16 %v2696, %v2695
      %v2706 = vpack.c.b16 %v2698, %v2697
      %2715 = vmatprep.subr.bf16.mxu0 0
      %2716 = vmatpush1.bf16.msra.mxu0 %v2699
      %2717 = vmatprep.subr.bf16.mxu0 0
      %2718 = vmatpush1.bf16.msra.mxu0 %v2700
      %2719 = vmatprep.subr.bf16.mxu0 0
      %2720 = vmatpush1.bf16.msra.mxu0 %v2701
      %2721 = vmatprep.subr.bf16.mxu0 0
      %2722 = vmatpush1.bf16.msra.mxu0 %v2702
      %2723 = vmatprep.subr.bf16.mxu0 0
      %2724 = vmatpush1.bf16.msra.mxu0 %v2703
      %2725 = vmatprep.subr.bf16.mxu0 0
      %2726 = vmatpush1.bf16.msra.mxu0 %v2704
      %2727 = vmatprep.subr.bf16.mxu0 0
      %2728 = vmatpush1.bf16.msra.mxu0 %v2705
      %2729 = vmatprep.subr.bf16.mxu0 0
      %2730 = vmatpush1.bf16.msra.mxu0 %v2706
      %2731 = vmatprep.subr.bf16.mxu0 0
      %2732 = vmatpush1.bf16.msra.mxu0 0
      %2733 = vmatprep.subr.bf16.mxu0 0
      %2734 = vmatpush1.bf16.msra.mxu0 0
      %2735 = vmatprep.subr.bf16.mxu0 0
      %2736 = vmatpush1.bf16.msra.mxu0 0
      %2737 = vmatprep.subr.bf16.mxu0 0
      %2738 = vmatpush1.bf16.msra.mxu0 0
      %2739 = vmatprep.subr.bf16.mxu0 0
      %2740 = vmatpush1.bf16.msra.mxu0 0
      %2741 = vmatprep.subr.bf16.mxu0 0
      %2742 = vmatpush1.bf16.msra.mxu0 0
      %2743 = vmatprep.subr.bf16.mxu0 0
      %2744 = vmatpush1.bf16.msra.mxu0 0
      %2745 = vmatprep.subr.bf16.mxu0 0
      %2746 = vmatpush1.bf16.msra.mxu0 0
      %2747 = vmatprep.mubr.bf16.mxu0 0
      %2748 = vmatmul.mubr.bf16.gmra.mrb[0].mxu0 %v750
      %v2749 = vpop.f32.mrb[0].mxu0
      %v2750 = vadd.f32 0.0, %v2749
      %v2751 = vpop.f32.mrb[0].mxu0
      %v2752 = vpop.f32.mrb[0].mxu0
      %v2753 = vadd.f32 0.0, %v2752
      %v2754 = vpop.f32.mrb[0].mxu0
      %2755 = vmatprep.mubr.bf16.mxu0 0
      %2756 = vmatmul.mubr.bf16.gmra.mrb[0].mxu0 %v751
      %v2757 = vpop.f32.mrb[0].mxu0
      %v2758 = vadd.f32 0.0, %v2757
      %v2759 = vpop.f32.mrb[0].mxu0
      %v2760 = vpop.f32.mrb[0].mxu0
      %v2761 = vadd.f32 0.0, %v2760
      %v2762 = vpop.f32.mrb[0].mxu0
      %2763 = vmatprep.mubr.bf16.mxu0 0
      %2764 = vmatmul.mubr.bf16.gmra.mrb[0].mxu0 %v752
      %v2765 = vpop.f32.mrb[0].mxu0
      %v2766 = vadd.f32 0.0, %v2765
      %v2767 = vpop.f32.mrb[0].mxu0
      %v2768 = vpop.f32.mrb[0].mxu0
      %v2769 = vadd.f32 0.0, %v2768
      %v2770 = vpop.f32.mrb[0].mxu0
      %2771 = vmatprep.mubr.bf16.mxu0 0
      %2772 = vmatmul.mubr.bf16.gmra.mrb[0].mxu0 %v753
      %v2773 = vpop.f32.mrb[0].mxu0
      %v2774 = vadd.f32 0.0, %v2773
      %v2775 = vpop.f32.mrb[0].mxu0
      %v2776 = vpop.f32.mrb[0].mxu0
      %v2777 = vadd.f32 0.0, %v2776
      %v2778 = vpop.f32.mrb[0].mxu0
      %2779 = vmatprep.mubr.bf16.mxu0 0
      %2780 = vmatmul.mubr.bf16.gmra.mrb[0].mxu0 %v754
      %v2781 = vpop.f32.mrb[0].mxu0
      %v2782 = vadd.f32 0.0, %v2781
      %v2783 = vpop.f32.mrb[0].mxu0
      %v2784 = vpop.f32.mrb[0].mxu0
      %v2785 = vadd.f32 0.0, %v2784
      %v2786 = vpop.f32.mrb[0].mxu0
      %2787 = vmatprep.mubr.bf16.mxu0 0
      %2788 = vmatmul.mubr.bf16.gmra.mrb[0].mxu0 %v755
      %v2789 = vpop.f32.mrb[0].mxu0
      %v2790 = vadd.f32 0.0, %v2789
      %v2791 = vpop.f32.mrb[0].mxu0
      %v2792 = vpop.f32.mrb[0].mxu0
      %v2793 = vadd.f32 0.0, %v2792
      %v2794 = vpop.f32.mrb[0].mxu0
      %2795 = vmatprep.mubr.bf16.mxu0 0
      %2796 = vmatmul.mubr.bf16.gmra.mrb[0].mxu0 %v756
      %v2797 = vpop.f32.mrb[0].mxu0
      %v2798 = vadd.f32 0.0, %v2797
      %v2799 = vpop.f32.mrb[0].mxu0
      %v2800 = vpop.f32.mrb[0].mxu0
      %v2801 = vadd.f32 0.0, %v2800
      %v2802 = vpop.f32.mrb[0].mxu0
      %2803 = vmatprep.mubr.bf16.mxu0 0
      %2804 = vmatmul.mubr.bf16.gmra.mrb[0].mxu0 %v757
      %v2805 = vpop.f32.mrb[0].mxu0
      %v2806 = vadd.f32 0.0, %v2805
      %v2807 = vpop.f32.mrb[0].mxu0
      %v2808 = vpop.f32.mrb[0].mxu0
      %v2809 = vadd.f32 0.0, %v2808
      %v2810 = vpop.f32.mrb[0].mxu0
      %2811 = vmatprep.mubr.bf16.mxu0 0
      %2812 = vmatmul.mubr.bf16.gmra.mrb[0].mxu0 %v758
      %v2813 = vpop.f32.mrb[0].mxu0
      %v2814 = vadd.f32 0.0, %v2813
      %v2815 = vpop.f32.mrb[0].mxu0
      %v2816 = vpop.f32.mrb[0].mxu0
      %v2817 = vadd.f32 0.0, %v2816
      %v2818 = vpop.f32.mrb[0].mxu0
      %2819 = vmatprep.mubr.bf16.mxu0 0
      %2820 = vmatmul.mubr.bf16.gmra.mrb[0].mxu0 %v759
      %v2821 = vpop.f32.mrb[0].mxu0
      %v2822 = vadd.f32 0.0, %v2821
      %v2823 = vpop.f32.mrb[0].mxu0
      %v2824 = vpop.f32.mrb[0].mxu0
      %v2825 = vadd.f32 0.0, %v2824
      %v2826 = vpop.f32.mrb[0].mxu0
      %2827 = vmatprep.mubr.bf16.mxu0 0
      %2828 = vmatmul.mubr.bf16.gmra.mrb[0].mxu0 %v760
      %v2829 = vpop.f32.mrb[0].mxu0
      %v2830 = vadd.f32 0.0, %v2829
      %v2831 = vpop.f32.mrb[0].mxu0
      %v2832 = vpop.f32.mrb[0].mxu0
      %v2833 = vadd.f32 0.0, %v2832
      %v2834 = vpop.f32.mrb[0].mxu0
      %2835 = vmatprep.mubr.bf16.mxu0 0
      %2836 = vmatmul.mubr.bf16.gmra.mrb[0].mxu0 %v761
      %v2837 = vpop.f32.mrb[0].mxu0
      %v2838 = vadd.f32 0.0, %v2837
      %v2839 = vpop.f32.mrb[0].mxu0
      %v2840 = vpop.f32.mrb[0].mxu0
      %v2841 = vadd.f32 0.0, %v2840
      %v2842 = vpop.f32.mrb[0].mxu0
      %2843 = vmatprep.mubr.bf16.mxu0 0
      %2844 = vmatmul.mubr.bf16.gmra.mrb[0].mxu0 %v762
      %v2845 = vpop.f32.mrb[0].mxu0
      %v2846 = vadd.f32 0.0, %v2845
      %v2847 = vpop.f32.mrb[0].mxu0
      %v2848 = vpop.f32.mrb[0].mxu0
      %v2849 = vadd.f32 0.0, %v2848
      %v2850 = vpop.f32.mrb[0].mxu0
      %2851 = vmatprep.mubr.bf16.mxu0 0
      %2852 = vmatmul.mubr.bf16.gmra.mrb[0].mxu0 %v763
      %v2853 = vpop.f32.mrb[0].mxu0
      %v2854 = vadd.f32 0.0, %v2853
      %v2855 = vpop.f32.mrb[0].mxu0
      %v2856 = vpop.f32.mrb[0].mxu0
      %v2857 = vadd.f32 0.0, %v2856
      %v2858 = vpop.f32.mrb[0].mxu0
      %2859 = vmatprep.mubr.bf16.mxu0 0
      %2860 = vmatmul.mubr.bf16.gmra.mrb[0].mxu0 %v1855
      %v2861 = vpop.f32.mrb[0].mxu0
      %v2862 = vadd.f32 0.0, %v2861
      %v2863 = vpop.f32.mrb[0].mxu0
      %v2864 = vpop.f32.mrb[0].mxu0
      %v2865 = vadd.f32 0.0, %v2864
      %v2866 = vpop.f32.mrb[0].mxu0
      %2867 = vmatprep.mubr.bf16.mxu0 0
      %2868 = vmatmul.mubr.bf16.gmra.mrb[0].mxu0 %v2649
      %v2869 = vpop.f32.mrb[0].mxu0
      %v2870 = vadd.f32 0.0, %v2869
      %v2871 = vpop.f32.mrb[0].mxu0
      %v2872 = vpop.f32.mrb[0].mxu0
      %v2873 = vadd.f32 0.0, %v2872
      %v2874 = vpop.f32.mrb[0].mxu0
      %2875 = vdwg.mxu0
      %v2876 = vadd.f32 %v2607, %v2750
      %v2877 = vadd.f32 %v2608, %v2753
      %v2878 = vadd.f32 %v2609, %v2758
      %v2879 = vadd.f32 %v2610, %v2761
      %v2880 = vadd.f32 %v2611, %v2766
      %v2881 = vadd.f32 %v2612, %v2769
      %v2882 = vadd.f32 %v2613, %v2774
      %v2883 = vadd.f32 %v2614, %v2777
      %v2884 = vadd.f32 %v2615, %v2782
      %v2885 = vadd.f32 %v2616, %v2785
      %v2886 = vadd.f32 %v2617, %v2790
      %v2887 = vadd.f32 %v2618, %v2793
      %v2888 = vadd.f32 %v2619, %v2798
      %v2889 = vadd.f32 %v2620, %v2801
      %v2890 = vadd.f32 %v2621, %v2806
      %v2891 = vadd.f32 %v2622, %v2809
      %v2892 = vadd.f32 %v2623, %v2814
      %v2893 = vadd.f32 %v2624, %v2817
      %v2894 = vadd.f32 %v2625, %v2822
      %v2895 = vadd.f32 %v2626, %v2825
      %v2896 = vadd.f32 %v2627, %v2830
      %v2897 = vadd.f32 %v2628, %v2833
      %v2898 = vadd.f32 %v2629, %v2838
      %v2899 = vadd.f32 %v2630, %v2841
      %v2900 = vadd.f32 %v2631, %v2846
      %v2901 = vadd.f32 %v2632, %v2849
      %v2902 = vadd.f32 %v2633, %v2854
      %v2903 = vadd.f32 %v2634, %v2857
      %v2904 = vadd.f32 %v2635, %v2862
      %v2905 = vadd.f32 %v2636, %v2865
      %v2906 = vadd.f32 %v2637, %v2870
      %v2907 = vadd.f32 %v2638, %v2873
      %v2908 = vrot.slane %v552, 2
      %v2909 = vrot.slane %v553, 2
      %v2910 = vsel %vm1199, %v2908, %v2909
      %v2911 = vrot.slane %v554, 2
      %v2912 = vsel %vm1199, %v2909, %v2911
      %v2915 = vpack.c.bf16 %v2912, %v2910
      %s2916 = scalar_lea.vmem %s3, 512
      %v2917 = vld [vmem:[%s2916] sm:$0xf]
      %v2918 = vld [vmem:[%s2916 + $0x4] sm:$0xf]
      %v2919 = vld [vmem:[%s2916 + $0x8] sm:$0xf]
      %v2920 = vld [vmem:[%s2916 + $0xc] sm:$0xf]
      %v2921 = vld [vmem:[%s2916 + $0x10] sm:$0xf]
      %v2922 = vld [vmem:[%s2916 + $0x14] sm:$0xf]
      %v2923 = vld [vmem:[%s2916 + $0x18] sm:$0xf]
      %v2924 = vld [vmem:[%s2916 + $0x1c] sm:$0xf]
      %v2925 = vld [vmem:[%s2916 + $0x20] sm:$0xf]
      %v2926 = vld [vmem:[%s2916 + $0x24] sm:$0xf]
      %v2927 = vld [vmem:[%s2916 + $0x28] sm:$0xf]
      %v2928 = vld [vmem:[%s2916 + $0x2c] sm:$0xf]
      %v2929 = vld [vmem:[%s2916 + $0x30] sm:$0xf]
      %v2930 = vld [vmem:[%s2916 + $0x34] sm:$0xf]
      %v2931 = vld [vmem:[%s2916 + $0x38] sm:$0xf]
      %v2932 = vld [vmem:[%s2916 + $0x3c] sm:$0xf]
      %v2949 = vunpack.c.l.b16 %v2917
      %v2950 = vunpack.c.l.b16 %v2918
      %v2951 = vunpack.c.l.b16 %v2919
      %v2952 = vunpack.c.l.b16 %v2920
      %v2953 = vunpack.c.l.b16 %v2921
      %v2954 = vunpack.c.l.b16 %v2922
      %v2955 = vunpack.c.l.b16 %v2923
      %v2956 = vunpack.c.l.b16 %v2924
      %v2957 = vunpack.c.l.b16 %v2925
      %v2958 = vunpack.c.l.b16 %v2926
      %v2959 = vunpack.c.l.b16 %v2927
      %v2960 = vunpack.c.l.b16 %v2928
      %v2961 = vunpack.c.l.b16 %v2929
      %v2962 = vunpack.c.l.b16 %v2930
      %v2963 = vunpack.c.l.b16 %v2931
      %v2964 = vunpack.c.l.b16 %v2932
      %v2965 = vpack.c.b16 %v2950, %v2949
      %v2966 = vpack.c.b16 %v2952, %v2951
      %v2967 = vpack.c.b16 %v2954, %v2953
      %v2968 = vpack.c.b16 %v2956, %v2955
      %v2969 = vpack.c.b16 %v2958, %v2957
      %v2970 = vpack.c.b16 %v2960, %v2959
      %v2971 = vpack.c.b16 %v2962, %v2961
      %v2972 = vpack.c.b16 %v2964, %v2963
      %2981 = vmatprep.subr.bf16.mxu0 0
      %2982 = vmatpush1.bf16.msra.mxu0 %v2965
      %2983 = vmatprep.subr.bf16.mxu0 0
      %2984 = vmatpush1.bf16.msra.mxu0 %v2966
      %2985 = vmatprep.subr.bf16.mxu0 0
      %2986 = vmatpush1.bf16.msra.mxu0 %v2967
      %2987 = vmatprep.subr.bf16.mxu0 0
      %2988 = vmatpush1.bf16.msra.mxu0 %v2968
      %2989 = vmatprep.subr.bf16.mxu0 0
      %2990 = vmatpush1.bf16.msra.mxu0 %v2969
      %2991 = vmatprep.subr.bf16.mxu0 0
      %2992 = vmatpush1.bf16.msra.mxu0 %v2970
      %2993 = vmatprep.subr.bf16.mxu0 0
      %2994 = vmatpush1.bf16.msra.mxu0 %v2971
      %2995 = vmatprep.subr.bf16.mxu0 0
      %2996 = vmatpush1.bf16.msra.mxu0 %v2972
      %2997 = vmatprep.subr.bf16.mxu0 0
      %2998 = vmatpush1.bf16.msra.mxu0 0
      %2999 = vmatprep.subr.bf16.mxu0 0
      %3000 = vmatpush1.bf16.msra.mxu0 0
      %3001 = vmatprep.subr.bf16.mxu0 0
      %3002 = vmatpush1.bf16.msra.mxu0 0
      %3003 = vmatprep.subr.bf16.mxu0 0
      %3004 = vmatpush1.bf16.msra.mxu0 0
      %3005 = vmatprep.subr.bf16.mxu0 0
      %3006 = vmatpush1.bf16.msra.mxu0 0
      %3007 = vmatprep.subr.bf16.mxu0 0
      %3008 = vmatpush1.bf16.msra.mxu0 0
      %3009 = vmatprep.subr.bf16.mxu0 0
      %3010 = vmatpush1.bf16.msra.mxu0 0
      %3011 = vmatprep.subr.bf16.mxu0 0
      %3012 = vmatpush1.bf16.msra.mxu0 0
      %3013 = vmatprep.mubr.bf16.mxu0 0
      %3014 = vmatmul.mubr.bf16.gmra.mrb[0].mxu0 %v1314
      %v3015 = vpop.f32.mrb[0].mxu0
      %v3016 = vadd.f32 0.0, %v3015
      %v3017 = vpop.f32.mrb[0].mxu0
      %v3018 = vpop.f32.mrb[0].mxu0
      %v3019 = vadd.f32 0.0, %v3018
      %v3020 = vpop.f32.mrb[0].mxu0
      %3021 = vmatprep.mubr.bf16.mxu0 0
      %3022 = vmatmul.mubr.bf16.gmra.mrb[0].mxu0 %v1315
      %v3023 = vpop.f32.mrb[0].mxu0
      %v3024 = vadd.f32 0.0, %v3023
      %v3025 = vpop.f32.mrb[0].mxu0
      %v3026 = vpop.f32.mrb[0].mxu0
      %v3027 = vadd.f32 0.0, %v3026
      %v3028 = vpop.f32.mrb[0].mxu0
      %3029 = vmatprep.mubr.bf16.mxu0 0
      %3030 = vmatmul.mubr.bf16.gmra.mrb[0].mxu0 %v1316
      %v3031 = vpop.f32.mrb[0].mxu0
      %v3032 = vadd.f32 0.0, %v3031
      %v3033 = vpop.f32.mrb[0].mxu0
      %v3034 = vpop.f32.mrb[0].mxu0
      %v3035 = vadd.f32 0.0, %v3034
      %v3036 = vpop.f32.mrb[0].mxu0
      %3037 = vmatprep.mubr.bf16.mxu0 0
      %3038 = vmatmul.mubr.bf16.gmra.mrb[0].mxu0 %v1317
      %v3039 = vpop.f32.mrb[0].mxu0
      %v3040 = vadd.f32 0.0, %v3039
      %v3041 = vpop.f32.mrb[0].mxu0
      %v3042 = vpop.f32.mrb[0].mxu0
      %v3043 = vadd.f32 0.0, %v3042
      %v3044 = vpop.f32.mrb[0].mxu0
      %3045 = vmatprep.mubr.bf16.mxu0 0
      %3046 = vmatmul.mubr.bf16.gmra.mrb[0].mxu0 %v1318
      %v3047 = vpop.f32.mrb[0].mxu0
      %v3048 = vadd.f32 0.0, %v3047
      %v3049 = vpop.f32.mrb[0].mxu0
      %v3050 = vpop.f32.mrb[0].mxu0
      %v3051 = vadd.f32 0.0, %v3050
      %v3052 = vpop.f32.mrb[0].mxu0
      %3053 = vmatprep.mubr.bf16.mxu0 0
      %3054 = vmatmul.mubr.bf16.gmra.mrb[0].mxu0 %v1319
      %v3055 = vpop.f32.mrb[0].mxu0
      %v3056 = vadd.f32 0.0, %v3055
      %v3057 = vpop.f32.mrb[0].mxu0
      %v3058 = vpop.f32.mrb[0].mxu0
      %v3059 = vadd.f32 0.0, %v3058
      %v3060 = vpop.f32.mrb[0].mxu0
      %3061 = vmatprep.mubr.bf16.mxu0 0
      %3062 = vmatmul.mubr.bf16.gmra.mrb[0].mxu0 %v1320
      %v3063 = vpop.f32.mrb[0].mxu0
      %v3064 = vadd.f32 0.0, %v3063
      %v3065 = vpop.f32.mrb[0].mxu0
      %v3066 = vpop.f32.mrb[0].mxu0
      %v3067 = vadd.f32 0.0, %v3066
      %v3068 = vpop.f32.mrb[0].mxu0
      %3069 = vmatprep.mubr.bf16.mxu0 0
      %3070 = vmatmul.mubr.bf16.gmra.mrb[0].mxu0 %v1321
      %v3071 = vpop.f32.mrb[0].mxu0
      %v3072 = vadd.f32 0.0, %v3071
      %v3073 = vpop.f32.mrb[0].mxu0
      %v3074 = vpop.f32.mrb[0].mxu0
      %v3075 = vadd.f32 0.0, %v3074
      %v3076 = vpop.f32.mrb[0].mxu0
      %3077 = vmatprep.mubr.bf16.mxu0 0
      %3078 = vmatmul.mubr.bf16.gmra.mrb[0].mxu0 %v1322
      %v3079 = vpop.f32.mrb[0].mxu0
      %v3080 = vadd.f32 0.0, %v3079
      %v3081 = vpop.f32.mrb[0].mxu0
      %v3082 = vpop.f32.mrb[0].mxu0
      %v3083 = vadd.f32 0.0, %v3082
      %v3084 = vpop.f32.mrb[0].mxu0
      %3085 = vmatprep.mubr.bf16.mxu0 0
      %3086 = vmatmul.mubr.bf16.gmra.mrb[0].mxu0 %v1323
      %v3087 = vpop.f32.mrb[0].mxu0
      %v3088 = vadd.f32 0.0, %v3087
      %v3089 = vpop.f32.mrb[0].mxu0
      %v3090 = vpop.f32.mrb[0].mxu0
      %v3091 = vadd.f32 0.0, %v3090
      %v3092 = vpop.f32.mrb[0].mxu0
      %3093 = vmatprep.mubr.bf16.mxu0 0
      %3094 = vmatmul.mubr.bf16.gmra.mrb[0].mxu0 %v1324
      %v3095 = vpop.f32.mrb[0].mxu0
      %v3096 = vadd.f32 0.0, %v3095
      %v3097 = vpop.f32.mrb[0].mxu0
      %v3098 = vpop.f32.mrb[0].mxu0
      %v3099 = vadd.f32 0.0, %v3098
      %v3100 = vpop.f32.mrb[0].mxu0
      %3101 = vmatprep.mubr.bf16.mxu0 0
      %3102 = vmatmul.mubr.bf16.gmra.mrb[0].mxu0 %v1325
      %v3103 = vpop.f32.mrb[0].mxu0
      %v3104 = vadd.f32 0.0, %v3103
      %v3105 = vpop.f32.mrb[0].mxu0
      %v3106 = vpop.f32.mrb[0].mxu0
      %v3107 = vadd.f32 0.0, %v3106
      %v3108 = vpop.f32.mrb[0].mxu0
      %3109 = vmatprep.mubr.bf16.mxu0 0
      %3110 = vmatmul.mubr.bf16.gmra.mrb[0].mxu0 %v1326
      %v3111 = vpop.f32.mrb[0].mxu0
      %v3112 = vadd.f32 0.0, %v3111
      %v3113 = vpop.f32.mrb[0].mxu0
      %v3114 = vpop.f32.mrb[0].mxu0
      %v3115 = vadd.f32 0.0, %v3114
      %v3116 = vpop.f32.mrb[0].mxu0
      %3117 = vmatprep.mubr.bf16.mxu0 0
      %3118 = vmatmul.mubr.bf16.gmra.mrb[0].mxu0 %v1327
      %v3119 = vpop.f32.mrb[0].mxu0
      %v3120 = vadd.f32 0.0, %v3119
      %v3121 = vpop.f32.mrb[0].mxu0
      %v3122 = vpop.f32.mrb[0].mxu0
      %v3123 = vadd.f32 0.0, %v3122
      %v3124 = vpop.f32.mrb[0].mxu0
      %3125 = vmatprep.mubr.bf16.mxu0 0
      %3126 = vmatmul.mubr.bf16.gmra.mrb[0].mxu0 %v2121
      %v3127 = vpop.f32.mrb[0].mxu0
      %v3128 = vadd.f32 0.0, %v3127
      %v3129 = vpop.f32.mrb[0].mxu0
      %v3130 = vpop.f32.mrb[0].mxu0
      %v3131 = vadd.f32 0.0, %v3130
      %v3132 = vpop.f32.mrb[0].mxu0
      %3133 = vmatprep.mubr.bf16.mxu0 0
      %3134 = vmatmul.mubr.bf16.gmra.mrb[0].mxu0 %v2915
      %v3135 = vpop.f32.mrb[0].mxu0
      %v3136 = vadd.f32 0.0, %v3135
      %v3137 = vpop.f32.mrb[0].mxu0
      %v3138 = vpop.f32.mrb[0].mxu0
      %v3139 = vadd.f32 0.0, %v3138
      %v3140 = vpop.f32.mrb[0].mxu0
      %3141 = vdwg.mxu0
      %v3142 = vadd.f32 %v2876, %v3016
      %v3143 = vadd.f32 %v2877, %v3019
      %v3144 = vadd.f32 %v2878, %v3024
      %v3145 = vadd.f32 %v2879, %v3027
      %v3146 = vadd.f32 %v2880, %v3032
      %v3147 = vadd.f32 %v2881, %v3035
      %v3148 = vadd.f32 %v2882, %v3040
      %v3149 = vadd.f32 %v2883, %v3043
      %v3150 = vadd.f32 %v2884, %v3048
      %v3151 = vadd.f32 %v2885, %v3051
      %v3152 = vadd.f32 %v2886, %v3056
      %v3153 = vadd.f32 %v2887, %v3059
      %v3154 = vadd.f32 %v2888, %v3064
      %v3155 = vadd.f32 %v2889, %v3067
      %v3156 = vadd.f32 %v2890, %v3072
      %v3157 = vadd.f32 %v2891, %v3075
      %v3158 = vadd.f32 %v2892, %v3080
      %v3159 = vadd.f32 %v2893, %v3083
      %v3160 = vadd.f32 %v2894, %v3088
      %v3161 = vadd.f32 %v2895, %v3091
      %v3162 = vadd.f32 %v2896, %v3096
      %v3163 = vadd.f32 %v2897, %v3099
      %v3164 = vadd.f32 %v2898, %v3104
      %v3165 = vadd.f32 %v2899, %v3107
      %v3166 = vadd.f32 %v2900, %v3112
      %v3167 = vadd.f32 %v2901, %v3115
      %v3168 = vadd.f32 %v2902, %v3120
      %v3169 = vadd.f32 %v2903, %v3123
      %v3170 = vadd.f32 %v2904, %v3128
      %v3171 = vadd.f32 %v2905, %v3131
      %v3172 = vadd.f32 %v2906, %v3136
      %v3173 = vadd.f32 %v2907, %v3139
      %3174 = vst [vmem:[%s231] sm:$0xff] %v3142
      %3175 = vst [vmem:[%s231 + $0x8] sm:$0xff] %v3143
      %3176 = vst [vmem:[%s231 + $0x10] sm:$0xff] %v3144
      %3177 = vst [vmem:[%s231 + $0x18] sm:$0xff] %v3145
      %3178 = vst [vmem:[%s231 + $0x20] sm:$0xff] %v3146
      %3179 = vst [vmem:[%s231 + $0x28] sm:$0xff] %v3147
      %3180 = vst [vmem:[%s231 + $0x30] sm:$0xff] %v3148
      %3181 = vst [vmem:[%s231 + $0x38] sm:$0xff] %v3149
      %3182 = vst [vmem:[%s231 + $0x40] sm:$0xff] %v3150
      %3183 = vst [vmem:[%s231 + $0x48] sm:$0xff] %v3151
      %3184 = vst [vmem:[%s231 + $0x50] sm:$0xff] %v3152
      %3185 = vst [vmem:[%s231 + $0x58] sm:$0xff] %v3153
      %3186 = vst [vmem:[%s231 + $0x60] sm:$0xff] %v3154
      %3187 = vst [vmem:[%s231 + $0x68] sm:$0xff] %v3155
      %3188 = vst [vmem:[%s231 + $0x70] sm:$0xff] %v3156
      %3189 = vst [vmem:[%s231 + $0x78] sm:$0xff] %v3157
      %3190 = vst [vmem:[%s231 + $0x80] sm:$0xff] %v3158
      %3191 = vst [vmem:[%s231 + $0x88] sm:$0xff] %v3159
      %3192 = vst [vmem:[%s231 + $0x90] sm:$0xff] %v3160
      %3193 = vst [vmem:[%s231 + $0x98] sm:$0xff] %v3161
      %3194 = vst [vmem:[%s231 + $0xa0] sm:$0xff] %v3162
      %3195 = vst [vmem:[%s231 + $0xa8] sm:$0xff] %v3163
      %3196 = vst [vmem:[%s231 + $0xb0] sm:$0xff] %v3164
      %3197 = vst [vmem:[%s231 + $0xb8] sm:$0xff] %v3165
      %3198 = vst [vmem:[%s231 + $0xc0] sm:$0xff] %v3166
      %3199 = vst [vmem:[%s231 + $0xc8] sm:$0xff] %v3167
      %3200 = vst [vmem:[%s231 + $0xd0] sm:$0xff] %v3168
      %3201 = vst [vmem:[%s231 + $0xd8] sm:$0xff] %v3169
      %3202 = vst [vmem:[%s231 + $0xe0] sm:$0xff] %v3170
      %3203 = vst [vmem:[%s231 + $0xe8] sm:$0xff] %v3171
      %3204 = vst [vmem:[%s231 + $0xf0] sm:$0xff] %v3172
      %3205 = vst [vmem:[%s231 + $0xf8] sm:$0xff] %v3173
      %v3206 = vadd.f32 %v3142, %v3143
      %v3207 = vadd.f32 %v3206, %v3144
      %v3208 = vadd.f32 %v3207, %v3145
      %v3209 = vadd.f32 %v3208, %v3146
      %v3210 = vadd.f32 %v3209, %v3147
      %v3211 = vadd.f32 %v3210, %v3148
      %v3212 = vadd.f32 %v3211, %v3149
      %v3213 = vadd.f32 %v3212, %v3150
      %v3214 = vadd.f32 %v3213, %v3151
      %v3215 = vadd.f32 %v3214, %v3152
      %v3216 = vadd.f32 %v3215, %v3153
      %v3217 = vadd.f32 %v3216, %v3154
      %v3218 = vadd.f32 %v3217, %v3155
      %v3219 = vadd.f32 %v3218, %v3156
      %v3220 = vadd.f32 %v3219, %v3157
      %v3221 = vadd.f32 %v3220, %v3158
      %v3222 = vadd.f32 %v3221, %v3159
      %v3223 = vadd.f32 %v3222, %v3160
      %v3224 = vadd.f32 %v3223, %v3161
      %v3225 = vadd.f32 %v3224, %v3162
      %v3226 = vadd.f32 %v3225, %v3163
      %v3227 = vadd.f32 %v3226, %v3164
      %v3228 = vadd.f32 %v3227, %v3165
      %v3229 = vadd.f32 %v3228, %v3166
      %v3230 = vadd.f32 %v3229, %v3167
      %v3231 = vadd.f32 %v3230, %v3168
      %v3232 = vadd.f32 %v3231, %v3169
      %v3233 = vadd.f32 %v3232, %v3170
      %v3234 = vadd.f32 %v3233, %v3171
      %v3235 = vadd.f32 %v3234, %v3172
      %v3236 = vadd.f32 %v3235, %v3173
      %v3237 = vrot.slane %v3236, 4
      %v3238 = vadd.f32 %v3236, %v3237
      %v3239 = vrot.slane %v3238, 2
      %v3240 = vadd.f32 %v3238, %v3239
      %v3241 = vrot.slane %v3240, 1
      %v3242 = vadd.f32 %v3240, %v3241
      %3243 = vst [vmem:[%s235] sm:$0x1] %v3242
      %v3244 = vmul.f32 %v3142, %v3142
      %v3245 = vmul.f32 %v3143, %v3143
      %v3246 = vmul.f32 %v3144, %v3144
      %v3247 = vmul.f32 %v3145, %v3145
      %v3248 = vmul.f32 %v3146, %v3146
      %v3249 = vmul.f32 %v3147, %v3147
      %v3250 = vmul.f32 %v3148, %v3148
      %v3251 = vmul.f32 %v3149, %v3149
      %v3252 = vmul.f32 %v3150, %v3150
      %v3253 = vmul.f32 %v3151, %v3151
      %v3254 = vmul.f32 %v3152, %v3152
      %v3255 = vmul.f32 %v3153, %v3153
      %v3256 = vmul.f32 %v3154, %v3154
      %v3257 = vmul.f32 %v3155, %v3155
      %v3258 = vmul.f32 %v3156, %v3156
      %v3259 = vmul.f32 %v3157, %v3157
      %v3260 = vmul.f32 %v3158, %v3158
      %v3261 = vmul.f32 %v3159, %v3159
      %v3262 = vmul.f32 %v3160, %v3160
      %v3263 = vmul.f32 %v3161, %v3161
      %v3264 = vmul.f32 %v3162, %v3162
      %v3265 = vmul.f32 %v3163, %v3163
      %v3266 = vmul.f32 %v3164, %v3164
      %v3267 = vmul.f32 %v3165, %v3165
      %v3268 = vmul.f32 %v3166, %v3166
      %v3269 = vmul.f32 %v3167, %v3167
      %v3270 = vmul.f32 %v3168, %v3168
      %v3271 = vmul.f32 %v3169, %v3169
      %v3272 = vmul.f32 %v3170, %v3170
      %v3273 = vmul.f32 %v3171, %v3171
      %v3274 = vmul.f32 %v3172, %v3172
      %v3275 = vmul.f32 %v3173, %v3173
      %v3276 = vadd.f32 %v3244, %v3245
      %v3277 = vadd.f32 %v3276, %v3246
      %v3278 = vadd.f32 %v3277, %v3247
      %v3279 = vadd.f32 %v3278, %v3248
      %v3280 = vadd.f32 %v3279, %v3249
      %v3281 = vadd.f32 %v3280, %v3250
      %v3282 = vadd.f32 %v3281, %v3251
      %v3283 = vadd.f32 %v3282, %v3252
      %v3284 = vadd.f32 %v3283, %v3253
      %v3285 = vadd.f32 %v3284, %v3254
      %v3286 = vadd.f32 %v3285, %v3255
      %v3287 = vadd.f32 %v3286, %v3256
      %v3288 = vadd.f32 %v3287, %v3257
      %v3289 = vadd.f32 %v3288, %v3258
      %v3290 = vadd.f32 %v3289, %v3259
      %v3291 = vadd.f32 %v3290, %v3260
      %v3292 = vadd.f32 %v3291, %v3261
      %v3293 = vadd.f32 %v3292, %v3262
      %v3294 = vadd.f32 %v3293, %v3263
      %v3295 = vadd.f32 %v3294, %v3264
      %v3296 = vadd.f32 %v3295, %v3265
      %v3297 = vadd.f32 %v3296, %v3266
      %v3298 = vadd.f32 %v3297, %v3267
      %v3299 = vadd.f32 %v3298, %v3268
      %v3300 = vadd.f32 %v3299, %v3269
      %v3301 = vadd.f32 %v3300, %v3270
      %v3302 = vadd.f32 %v3301, %v3271
      %v3303 = vadd.f32 %v3302, %v3272
      %v3304 = vadd.f32 %v3303, %v3273
      %v3305 = vadd.f32 %v3304, %v3274
      %v3306 = vadd.f32 %v3305, %v3275
      %v3307 = vrot.slane %v3306, 4
      %v3308 = vadd.f32 %v3306, %v3307
      %v3309 = vrot.slane %v3308, 2
      %v3310 = vadd.f32 %v3308, %v3309
      %v3311 = vrot.slane %v3310, 1
      %v3312 = vadd.f32 %v3310, %v3311
      %3313 = vst [vmem:[%s235 + $0x1] sm:$0x1] %v3312
      %p3314 = scmp.lt.s32.totalorder %s17, 1
      %s3315 = scalar_select %p3314, %s17, 1
      %s3316 = smul.addr %s3315, 32
      %s3317 = smul.addr %s3316, 8
      %s3318 = scalar_lea.vmem %s4, %s3317
      %p3319 = scmp.lt.s32.totalorder %s17, 1
      %s3320 = scalar_select %p3319, %s17, 1
      %s3321 = smul.addr %s3320, 2
      %s3322 = scalar_lea.vmem %s5, %s3321
      // Predicated region
      $region37: #{_lambda_.5} parent=35 // pred_check
        %p3323 = pneg %p124
      $region38: #{_lambda_.5} parent=35 // pred_check_branch
        %3325 = sbr.rel (%p3323) target = $region40
      $region39: #{_lambda_.5} parent=35 // pred_region
        _
      $region40: #{_lambda_.5} parent=35 // pred_fallthru
        _
      // Predicated region
      $region41: #{_lambda_.5} parent=35 // pred_check
        %p3326 = pneg %p150
      $region42: #{_lambda_.5} parent=35 // pred_check_branch
        %3328 = sbr.rel (%p3326) target = $region44
      $region43: #{_lambda_.5} parent=35 // pred_region
        _
      $region44: #{_lambda_.5} parent=35 // pred_fallthru
        _
    $region36: #{_lambda_.5} parent=5 // pred_fallthru
      _
    %p3329 = scmp.le.s32.totalorder 2, %s12
    // Predicated region
    $region45: #{_lambda_.5} parent=5 // pred_check
      %p3330 = pneg %p3329
    $region46: #{_lambda_.5} parent=5 // pred_check_branch
      %3332 = sbr.rel (%p3330) target = $region48
    $region47: #{_lambda_.5} parent=5 // pred_region
      %s3333 = ssub.s32 %s12, 2
      // Predicated region
      $region49: #{_lambda_.5} parent=47 // pred_check
        %p3334 = pneg %p130
      $region50: #{_lambda_.5} parent=47 // pred_check_branch
        %3336 = sbr.rel (%p3334) target = $region52
      $region51: #{_lambda_.5} parent=47 // pred_region
        %p3337 = scmp.lt.s32.totalorder %s18, 1
        %s3338 = scalar_select %p3337, %s18, 1
        %s3339 = smul.addr %s3338, 32
        %s3340 = smul.addr %s3339, 8
        %s3341 = scalar_lea.vmem %s4, %s3340
      $region52: #{_lambda_.5} parent=47 // pred_fallthru
        _
      // Predicated region
      $region53: #{_lambda_.5} parent=47 // pred_check
        %p3342 = pneg %p156
      $region54: #{_lambda_.5} parent=47 // pred_check_branch
        %3344 = sbr.rel (%p3342) target = $region56
      $region55: #{_lambda_.5} parent=47 // pred_region
        %p3345 = scmp.lt.s32.totalorder %s18, 1
        %s3346 = scalar_select %p3345, %s18, 1
        %s3347 = smul.addr %s3346, 2
        %s3348 = scalar_lea.vmem %s5, %s3347
      $region56: #{_lambda_.5} parent=47 // pred_fallthru
        _
    $region48: #{_lambda_.5} parent=5 // pred_fallthru
      _
  $region6: #{_lambda_.5} parent=0 // loop_footer
    %s16 = sadd.s32 1, %s12
  $region7: #{_lambda_.5} parent=0 // loop_footer_branch
    %11 = sbr.rel target = $region3
  $region8: #{_lambda_.5} parent=0 // loop_exit
    _

</llo_original>
